<compile_context>
chip_gen: v6e
topology: v6e:2x2x1
jax: 0.10.0
libtpu: 0.0.40
codegen_flags: <defaults>
</compile_context>

<pallas_src>
import functools

import jax
import jax.numpy as jnp
from jax import lax
from jax.experimental import pallas as pl
from jax.experimental.pallas import tpu as pltpu


def _round_up(x, m):
    return (x + m - 1) // m * m


# ----------------------------------------------------------------------------
# Fused Bottleneck kernel (cv1 + cv2 + SELayerV2), Bblk images per grid step.
# ----------------------------------------------------------------------------
def _make_kernel(H, W, C1, C_, C2, Bblk, L1p, L2p):
    Ho2, Wo2 = H - 4, W - 4
    inv_hw = 1.0 / float(Ho2 * Wo2)
    taps = [(i, j) for i in range(3) for j in range(3)]

    def kernel(x_ref, w1_ref, b1_ref, w2_ref, b2_ref, wse_ref, wf_ref, mask_ref,
               o_ref, xk_ref, z1_ref, zk_ref):
        # ---- stage the 9 shifted cv1 slabs: K-stack along sublanes, batch along lanes
        for t, (i, j) in enumerate(taps):
            off = i * W + j
            for b in range(Bblk):
                xk_ref[t * C1:(t + 1) * C1, b * L1p:(b + 1) * L1p] = \
                    x_ref[b, :, off:off + L1p]

        # ---- cv1: ONE (C_, 9*C1) @ (9*C1, Bblk*L1p) bf16 matmul, f32 MXU accumulate
        z1_ref[...] = (jnp.dot(w1_ref[...], xk_ref[...],
                               preferred_element_type=jnp.float32)
                       + b1_ref[...]).astype(jnp.bfloat16)

        # ---- stage cv2 slabs from the VMEM-resident z1 (never touches HBM)
        for t, (i, j) in enumerate(taps):
            off = i * W + j
            for b in range(Bblk):
                zk_ref[t * C_:(t + 1) * C_, b * L2p:(b + 1) * L2p] = \
                    z1_ref[:, b * L1p + off:b * L1p + off + L2p]

        # ---- cv2: ONE (C2, 9*C_) @ (9*C_, Bblk*L2p) bf16 matmul
        z2 = jnp.dot(w2_ref[...], zk_ref[...],
                     preferred_element_type=jnp.float32) + b2_ref[...]   # (C2, Bblk*L2p) f32

        # ---- SELayerV2, kept on the VPU/XLU (no N=1 MXU matmuls)
        m = mask_ref[...]                                                # (1, L2p)
        for b in range(Bblk):
            z2b = z2[:, b * L2p:(b + 1) * L2p]                           # (C2, L2p)
            # masked global average pool over the valid spatial positions only
            y = jnp.sum(z2b * m, axis=1, keepdims=True) * inv_hw         # (C2, 1)
            # fc1..fc4 (bias-free, fused) + ReLU: wse_t is (C2, K4), reduce sublanes
            h = jnp.maximum(jnp.sum(wse_ref[...] * y, axis=0, keepdims=True), 0.0)  # (1, K4)
            # final fc (bias-free) + sigmoid: wf is (C2, K4), reduce lanes
            s = jax.nn.sigmoid(jnp.sum(wf_ref[...] * h, axis=1, keepdims=True))     # (C2, 1)
            o_ref[b] = (z2b * s).astype(o_ref.dtype)

    return kernel


# ----------------------------------------------------------------------------
# VMEM budgeting / batch-block selection
# ----------------------------------------------------------------------------
def _vmem_bytes(Bblk, C1, C_, C2, K4, Lxp, L1p, L2p):
    bf, f4 = 2, 4
    in_blk = 2 * Bblk * C1 * Lxp * bf                       # double-buffered input block
    out_blk = 2 * Bblk * C2 * L2p * f4                      # double-buffered output block
    wts = 2 * ((9 * C1 * C_ + 9 * C_ * C2) * bf
               + (C_ + C2 + 2 * C2 * K4 + L2p) * f4)        # weights/biases/mask
    scr = (9 * C1 * Bblk * L1p + C_ * Bblk * L1p + 9 * C_ * Bblk * L2p) * bf
    mid = 2 * C2 * Bblk * L2p * f4                          # z2 + scaled output value
    return in_blk + out_blk + wts + scr + mid


def _pick_bblk(B, C1, C_, C2, K4, Lxp, L1p, L2p, budget=24 << 20, cap=8):
    best = 1
    for d in range(1, min(B, cap) + 1):
        if B % d:
            continue
        if B >= 2 and B // d < 2:        # keep >= 2 grid steps (v7x has 2 TensorCores)
            continue
        if _vmem_bytes(d, C1, C_, C2, K4, Lxp, L1p, L2p) <= budget:
            best = d
    return best


# ----------------------------------------------------------------------------
# Wrapper
# ----------------------------------------------------------------------------
def bottleneck_forward(x_nchw, prep, shortcut=False):
    B, C1, H, W = x_nchw.shape
    assert H >= 5 and W >= 5, "two valid 3x3 convs need H, W >= 5"
    C_, C2 = prep["w1p"].shape[0], prep["w2p"].shape[0]
    K4 = prep["wf"].shape[1]
    Ho2, Wo2 = H - 4, W - 4

    # Lane-dense slab lengths (multiples of 128); the 2*W+2 halo covers the 9 taps.
    L2 = Ho2 * W                                    # valid full-width conv2 slab
    L2p = _round_up(L2, 128)
    L1p = _round_up(L2p + 2 * W + 2, 128)
    Lxp = L1p + 2 * W + 2

    Bblk = _pick_bblk(B, C1, C_, C2, K4, Lxp, L1p, L2p)
    grid = (B // Bblk,)

    kernel = _make_kernel(H, W, C1, C_, C2, Bblk, L1p, L2p)

    # bf16 cast is fused into the one pad/reshape copy -> halves the input DMA bytes.
    x_flat = jnp.pad(x_nchw.astype(jnp.bfloat16).reshape(B, C1, H * W),
                     ((0, 0), (0, 0), (0, Lxp - H * W)))

    # 1.0 for real conv2 output columns; 0.0 for wrapped / lane-pad garbage columns.
    cols = jnp.arange(L2p, dtype=jnp.int32)
    mask = ((cols < L2) & (cols % W < Wo2)).astype(jnp.float32).reshape(1, L2p)

    nb = lambda a: int(a.size) * a.dtype.itemsize
    flops = B * (2 * C_ * 9 * C1 * L1p + 2 * C2 * 9 * C_ * L2p
                 + 4 * C2 * L2p + 4 * C2 * K4)
    bytes_accessed = (nb(x_flat) + B * C2 * L2p * 4
                      + nb(prep["w1p"]) + nb(prep["w2p"]) + nb(prep["b1"])
                      + nb(prep["b2"]) + nb(prep["wse_t"]) + nb(prep["wf"]) + nb(mask))

    est = _vmem_bytes(Bblk, C1, C_, C2, K4, Lxp, L1p, L2p)
    vmem_limit = int(min(48 << 20, max(32 << 20, 2 * est)))   # cap for v7x's 64 MiB VMEM

    out_flat = pl.pallas_call(
        kernel,
        out_shape=jax.ShapeDtypeStruct((B, C2, L2p), jnp.float32),
        grid_spec=pltpu.PrefetchScalarGridSpec(
            num_scalar_prefetch=0,
            grid=grid,
            in_specs=[
                pl.BlockSpec((Bblk, C1, Lxp), lambda g: (g, 0, 0)),   # Bblk images/step
                pl.BlockSpec((C_, 9 * C1), lambda g: (0, 0)),         # resident weights
                pl.BlockSpec((C_, 1), lambda g: (0, 0)),
                pl.BlockSpec((C2, 9 * C_), lambda g: (0, 0)),
                pl.BlockSpec((C2, 1), lambda g: (0, 0)),
                pl.BlockSpec((C2, K4), lambda g: (0, 0)),
                pl.BlockSpec((C2, K4), lambda g: (0, 0)),
                pl.BlockSpec((1, L2p), lambda g: (0, 0)),
            ],
            out_specs=pl.BlockSpec((Bblk, C2, L2p), lambda g: (g, 0, 0)),
            scratch_shapes=[
                pltpu.VMEM((9 * C1, Bblk * L1p), jnp.bfloat16),   # K-stacked cv1 operand
                pltpu.VMEM((C_, Bblk * L1p), jnp.bfloat16),       # z1 (bf16, VMEM only)
                pltpu.VMEM((9 * C_, Bblk * L2p), jnp.bfloat16),   # K-stacked cv2 operand
            ]),
        compiler_params=pltpu.CompilerParams(
            dimension_semantics=("parallel",),        # megacore over batch on v7x
            vmem_limit_bytes=vmem_limit),
        cost_estimate=pl.CostEstimate(flops=int(flops),
                                      transcendentals=int(B * C2),
                                      bytes_accessed=int(bytes_accessed)),
    )(x_flat, prep["w1p"], prep["b1"], prep["w2p"], prep["b2"],
      prep["wse_t"], prep["wf"], mask)

    # NCHW output: slice off the lane padding + wrapped columns, then a free reshape.
    out = out_flat[:, :, :L2].reshape(B, C2, Ho2, W)[:, :, :, :Wo2]

    if shortcut and C1 == C2 and x_nchw.shape == out.shape:
        # Unreachable with padding=0 convs (spatial dims shrink) -- mirrors the
        # PyTorch module's `self.add` branch for completeness.
        out = out + x_nchw.astype(out.dtype)
    return out


# ----------------------------------------------------------------------------
# Parameter construction / one-time prep (hoisted out of the per-call path)
# ----------------------------------------------------------------------------
def init_params(key, c1, c2, e=0.5, reduction=32):
    c_ = int(c2 * e)
    assert c2 >= reduction and c2 % reduction == 0, "invalid in_channel in SaElayer"
    ks = jax.random.split(key, 9)
    scale = 0.05
    p = {
        "w1": jax.random.normal(ks[0], (c_, c1, 3, 3), jnp.float32) * scale,
        "b1": jax.random.normal(ks[1], (c_,), jnp.float32) * scale,
        "w2": jax.random.normal(ks[2], (c2, c_, 3, 3), jnp.float32) * scale,
        "b2": jax.random.normal(ks[3], (c2,), jnp.float32) * scale,
        # SELayerV2 linear weights in torch (out_features, in_features) layout
        "fc1": jax.random.normal(ks[4], (c2 // reduction, c2), jnp.float32) * scale,
        "fc2": jax.random.normal(ks[5], (c2 // reduction, c2), jnp.float32) * scale,
        "fc3": jax.random.normal(ks[6], (c2 // reduction, c2), jnp.float32) * scale,
        "fc4": jax.random.normal(ks[7], (c2 // reduction, c2), jnp.float32) * scale,
        "fc":  jax.random.normal(ks[8], (c2, 4 * (c2 // reduction)), jnp.float32) * scale,
    }
    return p, c_


def prepare_params(p):
    """One-time repack: K-concatenated conv weights (bf16), column biases, SE weights."""
    c_, c1 = p["w1"].shape[0], p["w1"].shape[1]
    c2 = p["w2"].shape[0]
    # torch conv weight (Cout, Cin, kh, kw) -> (Cout, 9*Cin); column index = (i*3+j)*Cin + cin,
    # matching the tap-then-channel sublane stacking order in the kernel.
    w1p = jnp.transpose(p["w1"], (0, 2, 3, 1)).reshape(c_, 9 * c1).astype(jnp.bfloat16)
    w2p = jnp.transpose(p["w2"], (0, 2, 3, 1)).reshape(c2, 9 * c_).astype(jnp.bfloat16)
    # fc1..fc4 stacked (4*c2//r, c2), transposed to (c2, 4*c2//r) so the kernel's SE
    # matvecs are pure VPU broadcast-multiply + reductions (no transposes in-kernel).
    wse_t = jnp.concatenate([p["fc1"], p["fc2"], p["fc3"], p["fc4"]], axis=0).T
    return {
        "w1p": w1p,
        "b1": p["b1"].reshape(c_, 1).astype(jnp.float32),
        "w2p": w2p,
        "b2": p["b2"].reshape(c2, 1).astype(jnp.float32),
        "wse_t": wse_t.astype(jnp.float32),                  # (c2, 4*c2//r)
        "wf": p["fc"].astype(jnp.float32),                   # (c2, 4*c2//r)
    }


# ----------------------------------------------------------------------------
# Pure-JAX reference (f32) for correctness checking
# ----------------------------------------------------------------------------
def _reference_forward(x, p):
    dn = ("NCHW", "OIHW", "NCHW")
    z1 = lax.conv_general_dilated(x, p["w1"], (1, 1), "VALID",
                                  dimension_numbers=dn) + p["b1"][None, :, None, None]
    z2 = lax.conv_general_dilated(z1, p["w2"], (1, 1), "VALID",
                                  dimension_numbers=dn) + p["b2"][None, :, None, None]
    y = jnp.mean(z2, axis=(2, 3))
    br = lambda w: jnp.maximum(y @ w.T, 0.0)
    ycat = jnp.concatenate([br(p["fc1"]), br(p["fc2"]), br(p["fc3"]), br(p["fc4"])], axis=1)
    s = jax.nn.sigmoid(ycat @ p["fc"].T)
    return z2 * s[:, :, None, None]


# ----------------------------------------------------------------------------
# Main
# ----------------------------------------------------------------------------
if __name__ == "__main__":
    key = jax.random.PRNGKey(0)
    kx, kp = jax.random.split(key)

    # SELayerV2 requires c2 >= 32 and c2 % 32 == 0
    c1, c2, e = 32, 32, 0.5
    B, H, W = 4, 16, 16          # B=4 -> Bblk=2, grid=(2,): exercises batch folding

    params, c_ = init_params(kp, c1, c2, e=e, reduction=32)
    prep = prepare_params(params)
    x = jax.random.normal(kx, (B, c1, H, W), jnp.float32)

    fwd = jax.jit(functools.partial(bottleneck_forward, shortcut=False))
    out = jax.block_until_ready(fwd(x, prep))

    assert out.shape == (B, c2, H - 4, W - 4), out.shape
    assert bool(jnp.all(jnp.isfinite(out)))

    # bf16 conv operands vs f32 reference -> relaxed tolerance (intentional).
    ref = _reference_forward(x, params)
    err = float(jnp.max(jnp.abs(out - ref)))
    assert err < 5e-2, f"max |err| = {err}"
    print("KERNEL_OK")
</pallas_src>

<mosaic_0001>
module attributes {stable_mosaic.version = 11 : i64} {
  func.func @kernel(%arg0: i32, %arg1: memref<2x32x418xbf16, #tpu.memory_space<vmem>>, %arg2: memref<16x288xbf16, #tpu.memory_space<vmem>>, %arg3: memref<16x1xf32, #tpu.memory_space<vmem>>, %arg4: memref<32x144xbf16, #tpu.memory_space<vmem>>, %arg5: memref<32x1xf32, #tpu.memory_space<vmem>>, %arg6: memref<32x4xf32, #tpu.memory_space<vmem>>, %arg7: memref<32x4xf32, #tpu.memory_space<vmem>>, %arg8: memref<1x256xf32, #tpu.memory_space<vmem>>, %arg9: memref<2x32x256xf32, #tpu.memory_space<vmem>>, %arg10: memref<288x768xbf16, #tpu.memory_space<vmem>>, %arg11: memref<16x768xbf16, #tpu.memory_space<vmem>>, %arg12: memref<144x512xbf16, #tpu.memory_space<vmem>>) attributes {dimension_semantics = [#tpu.dimension_semantics<parallel>], iteration_bounds = array<i64: 2>, scalar_prefetch = 0 : i64, scratch_operands = 3 : i64, tpu.core_type = #tpu.core_type<tc>, window_params = [{transform_indices = @transform_0, window_bounds = array<i64: 2, 32, 418>}, {pipeline_mode = #tpu.pipeline_mode<synchronous>, transform_indices = @transform_1, window_bounds = array<i64: 16, 288>}, {pipeline_mode = #tpu.pipeline_mode<synchronous>, transform_indices = @transform_2, window_bounds = array<i64: 16, 1>}, {pipeline_mode = #tpu.pipeline_mode<synchronous>, transform_indices = @transform_3, window_bounds = array<i64: 32, 144>}, {pipeline_mode = #tpu.pipeline_mode<synchronous>, transform_indices = @transform_4, window_bounds = array<i64: 32, 1>}, {pipeline_mode = #tpu.pipeline_mode<synchronous>, transform_indices = @transform_5, window_bounds = array<i64: 32, 4>}, {pipeline_mode = #tpu.pipeline_mode<synchronous>, transform_indices = @transform_6, window_bounds = array<i64: 32, 4>}, {pipeline_mode = #tpu.pipeline_mode<synchronous>, transform_indices = @transform_7, window_bounds = array<i64: 1, 256>}, {transform_indices = @transform_8, window_bounds = array<i64: 2, 32, 256>}]} {
    %c0 = arith.constant 0 : index
    %c0_0 = arith.constant 0 : index
    %c0_1 = arith.constant 0 : index
    %0 = vector.load %arg1[%c0, %c0_0, %c0_1] : memref<2x32x418xbf16, #tpu.memory_space<vmem>>, vector<1x32x384xbf16>
    %1 = vector.shape_cast %0 : vector<1x32x384xbf16> to vector<32x384xbf16>
    %c0_2 = arith.constant 0 : index
    %c0_3 = arith.constant 0 : index
    %2 = vector.load %arg10[%c0_2, %c0_3] : memref<288x768xbf16, #tpu.memory_space<vmem>>, vector<32x384xbf16>
    tpu.vector_store %arg10[%c0_2, %c0_3], %1 {strides = array<i32>} : memref<288x768xbf16, #tpu.memory_space<vmem>>, vector<32x384xbf16>,
    %c1 = arith.constant 1 : index
    %c0_4 = arith.constant 0 : index
    %c0_5 = arith.constant 0 : index
    %3 = vector.load %arg1[%c1, %c0_4, %c0_5] : memref<2x32x418xbf16, #tpu.memory_space<vmem>>, vector<1x32x384xbf16>
    %4 = vector.shape_cast %3 : vector<1x32x384xbf16> to vector<32x384xbf16>
    %c0_6 = arith.constant 0 : index
    %c384 = arith.constant 384 : index
    %5 = vector.load %arg10[%c0_6, %c384] : memref<288x768xbf16, #tpu.memory_space<vmem>>, vector<32x384xbf16>
    tpu.vector_store %arg10[%c0_6, %c384], %4 {strides = array<i32>} : memref<288x768xbf16, #tpu.memory_space<vmem>>, vector<32x384xbf16>,
    %c0_7 = arith.constant 0 : index
    %c0_8 = arith.constant 0 : index
    %c1_9 = arith.constant 1 : index
    %6 = vector.load %arg1[%c0_7, %c0_8, %c1_9] : memref<2x32x418xbf16, #tpu.memory_space<vmem>>, vector<1x32x384xbf16>
    %7 = vector.shape_cast %6 : vector<1x32x384xbf16> to vector<32x384xbf16>
    %c32 = arith.constant 32 : index
    %c0_10 = arith.constant 0 : index
    %8 = vector.load %arg10[%c32, %c0_10] : memref<288x768xbf16, #tpu.memory_space<vmem>>, vector<32x384xbf16>
    tpu.vector_store %arg10[%c32, %c0_10], %7 {strides = array<i32>} : memref<288x768xbf16, #tpu.memory_space<vmem>>, vector<32x384xbf16>,
    %c1_11 = arith.constant 1 : index
    %c0_12 = arith.constant 0 : index
    %c1_13 = arith.constant 1 : index
    %9 = vector.load %arg1[%c1_11, %c0_12, %c1_13] : memref<2x32x418xbf16, #tpu.memory_space<vmem>>, vector<1x32x384xbf16>
    %10 = vector.shape_cast %9 : vector<1x32x384xbf16> to vector<32x384xbf16>
    %c32_14 = arith.constant 32 : index
    %c384_15 = arith.constant 384 : index
    %11 = vector.load %arg10[%c32_14, %c384_15] : memref<288x768xbf16, #tpu.memory_space<vmem>>, vector<32x384xbf16>
    tpu.vector_store %arg10[%c32_14, %c384_15], %10 {strides = array<i32>} : memref<288x768xbf16, #tpu.memory_space<vmem>>, vector<32x384xbf16>,
    %c0_16 = arith.constant 0 : index
    %c0_17 = arith.constant 0 : index
    %c2 = arith.constant 2 : index
    %12 = vector.load %arg1[%c0_16, %c0_17, %c2] : memref<2x32x418xbf16, #tpu.memory_space<vmem>>, vector<1x32x384xbf16>
    %13 = vector.shape_cast %12 : vector<1x32x384xbf16> to vector<32x384xbf16>
    %c64 = arith.constant 64 : index
    %c0_18 = arith.constant 0 : index
    %14 = vector.load %arg10[%c64, %c0_18] : memref<288x768xbf16, #tpu.memory_space<vmem>>, vector<32x384xbf16>
    tpu.vector_store %arg10[%c64, %c0_18], %13 {strides = array<i32>} : memref<288x768xbf16, #tpu.memory_space<vmem>>, vector<32x384xbf16>,
    %c1_19 = arith.constant 1 : index
    %c0_20 = arith.constant 0 : index
    %c2_21 = arith.constant 2 : index
    %15 = vector.load %arg1[%c1_19, %c0_20, %c2_21] : memref<2x32x418xbf16, #tpu.memory_space<vmem>>, vector<1x32x384xbf16>
    %16 = vector.shape_cast %15 : vector<1x32x384xbf16> to vector<32x384xbf16>
    %c64_22 = arith.constant 64 : index
    %c384_23 = arith.constant 384 : index
    %17 = vector.load %arg10[%c64_22, %c384_23] : memref<288x768xbf16, #tpu.memory_space<vmem>>, vector<32x384xbf16>
    tpu.vector_store %arg10[%c64_22, %c384_23], %16 {strides = array<i32>} : memref<288x768xbf16, #tpu.memory_space<vmem>>, vector<32x384xbf16>,
    %c0_24 = arith.constant 0 : index
    %c0_25 = arith.constant 0 : index
    %c16 = arith.constant 16 : index
    %18 = vector.load %arg1[%c0_24, %c0_25, %c16] : memref<2x32x418xbf16, #tpu.memory_space<vmem>>, vector<1x32x384xbf16>
    %19 = vector.shape_cast %18 : vector<1x32x384xbf16> to vector<32x384xbf16>
    %c96 = arith.constant 96 : index
    %c0_26 = arith.constant 0 : index
    %20 = vector.load %arg10[%c96, %c0_26] : memref<288x768xbf16, #tpu.memory_space<vmem>>, vector<32x384xbf16>
    tpu.vector_store %arg10[%c96, %c0_26], %19 {strides = array<i32>} : memref<288x768xbf16, #tpu.memory_space<vmem>>, vector<32x384xbf16>,
    %c1_27 = arith.constant 1 : index
    %c0_28 = arith.constant 0 : index
    %c16_29 = arith.constant 16 : index
    %21 = vector.load %arg1[%c1_27, %c0_28, %c16_29] : memref<2x32x418xbf16, #tpu.memory_space<vmem>>, vector<1x32x384xbf16>
    %22 = vector.shape_cast %21 : vector<1x32x384xbf16> to vector<32x384xbf16>
    %c96_30 = arith.constant 96 : index
    %c384_31 = arith.constant 384 : index
    %23 = vector.load %arg10[%c96_30, %c384_31] : memref<288x768xbf16, #tpu.memory_space<vmem>>, vector<32x384xbf16>
    tpu.vector_store %arg10[%c96_30, %c384_31], %22 {strides = array<i32>} : memref<288x768xbf16, #tpu.memory_space<vmem>>, vector<32x384xbf16>,
    %c0_32 = arith.constant 0 : index
    %c0_33 = arith.constant 0 : index
    %c17 = arith.constant 17 : index
    %24 = vector.load %arg1[%c0_32, %c0_33, %c17] : memref<2x32x418xbf16, #tpu.memory_space<vmem>>, vector<1x32x384xbf16>
    %25 = vector.shape_cast %24 : vector<1x32x384xbf16> to vector<32x384xbf16>
    %c128 = arith.constant 128 : index
    %c0_34 = arith.constant 0 : index
    %26 = vector.load %arg10[%c128, %c0_34] : memref<288x768xbf16, #tpu.memory_space<vmem>>, vector<32x384xbf16>
    tpu.vector_store %arg10[%c128, %c0_34], %25 {strides = array<i32>} : memref<288x768xbf16, #tpu.memory_space<vmem>>, vector<32x384xbf16>,
    %c1_35 = arith.constant 1 : index
    %c0_36 = arith.constant 0 : index
    %c17_37 = arith.constant 17 : index
    %27 = vector.load %arg1[%c1_35, %c0_36, %c17_37] : memref<2x32x418xbf16, #tpu.memory_space<vmem>>, vector<1x32x384xbf16>
    %28 = vector.shape_cast %27 : vector<1x32x384xbf16> to vector<32x384xbf16>
    %c128_38 = arith.constant 128 : index
    %c384_39 = arith.constant 384 : index
    %29 = vector.load %arg10[%c128_38, %c384_39] : memref<288x768xbf16, #tpu.memory_space<vmem>>, vector<32x384xbf16>
    tpu.vector_store %arg10[%c128_38, %c384_39], %28 {strides = array<i32>} : memref<288x768xbf16, #tpu.memory_space<vmem>>, vector<32x384xbf16>,
    %c0_40 = arith.constant 0 : index
    %c0_41 = arith.constant 0 : index
    %c18 = arith.constant 18 : index
    %30 = vector.load %arg1[%c0_40, %c0_41, %c18] : memref<2x32x418xbf16, #tpu.memory_space<vmem>>, vector<1x32x384xbf16>
    %31 = vector.shape_cast %30 : vector<1x32x384xbf16> to vector<32x384xbf16>
    %c160 = arith.constant 160 : index
    %c0_42 = arith.constant 0 : index
    %32 = vector.load %arg10[%c160, %c0_42] : memref<288x768xbf16, #tpu.memory_space<vmem>>, vector<32x384xbf16>
    tpu.vector_store %arg10[%c160, %c0_42], %31 {strides = array<i32>} : memref<288x768xbf16, #tpu.memory_space<vmem>>, vector<32x384xbf16>,
    %c1_43 = arith.constant 1 : index
    %c0_44 = arith.constant 0 : index
    %c18_45 = arith.constant 18 : index
    %33 = vector.load %arg1[%c1_43, %c0_44, %c18_45] : memref<2x32x418xbf16, #tpu.memory_space<vmem>>, vector<1x32x384xbf16>
    %34 = vector.shape_cast %33 : vector<1x32x384xbf16> to vector<32x384xbf16>
    %c160_46 = arith.constant 160 : index
    %c384_47 = arith.constant 384 : index
    %35 = vector.load %arg10[%c160_46, %c384_47] : memref<288x768xbf16, #tpu.memory_space<vmem>>, vector<32x384xbf16>
    tpu.vector_store %arg10[%c160_46, %c384_47], %34 {strides = array<i32>} : memref<288x768xbf16, #tpu.memory_space<vmem>>, vector<32x384xbf16>,
    %c0_48 = arith.constant 0 : index
    %c0_49 = arith.constant 0 : index
    %c32_50 = arith.constant 32 : index
    %36 = vector.load %arg1[%c0_48, %c0_49, %c32_50] : memref<2x32x418xbf16, #tpu.memory_space<vmem>>, vector<1x32x384xbf16>
    %37 = vector.shape_cast %36 : vector<1x32x384xbf16> to vector<32x384xbf16>
    %c192 = arith.constant 192 : index
    %c0_51 = arith.constant 0 : index
    %38 = vector.load %arg10[%c192, %c0_51] : memref<288x768xbf16, #tpu.memory_space<vmem>>, vector<32x384xbf16>
    tpu.vector_store %arg10[%c192, %c0_51], %37 {strides = array<i32>} : memref<288x768xbf16, #tpu.memory_space<vmem>>, vector<32x384xbf16>,
    %c1_52 = arith.constant 1 : index
    %c0_53 = arith.constant 0 : index
    %c32_54 = arith.constant 32 : index
    %39 = vector.load %arg1[%c1_52, %c0_53, %c32_54] : memref<2x32x418xbf16, #tpu.memory_space<vmem>>, vector<1x32x384xbf16>
    %40 = vector.shape_cast %39 : vector<1x32x384xbf16> to vector<32x384xbf16>
    %c192_55 = arith.constant 192 : index
    %c384_56 = arith.constant 384 : index
    %41 = vector.load %arg10[%c192_55, %c384_56] : memref<288x768xbf16, #tpu.memory_space<vmem>>, vector<32x384xbf16>
    tpu.vector_store %arg10[%c192_55, %c384_56], %40 {strides = array<i32>} : memref<288x768xbf16, #tpu.memory_space<vmem>>, vector<32x384xbf16>,
    %c0_57 = arith.constant 0 : index
    %c0_58 = arith.constant 0 : index
    %c33 = arith.constant 33 : index
    %42 = vector.load %arg1[%c0_57, %c0_58, %c33] : memref<2x32x418xbf16, #tpu.memory_space<vmem>>, vector<1x32x384xbf16>
    %43 = vector.shape_cast %42 : vector<1x32x384xbf16> to vector<32x384xbf16>
    %c224 = arith.constant 224 : index
    %c0_59 = arith.constant 0 : index
    %44 = vector.load %arg10[%c224, %c0_59] : memref<288x768xbf16, #tpu.memory_space<vmem>>, vector<32x384xbf16>
    tpu.vector_store %arg10[%c224, %c0_59], %43 {strides = array<i32>} : memref<288x768xbf16, #tpu.memory_space<vmem>>, vector<32x384xbf16>,
    %c1_60 = arith.constant 1 : index
    %c0_61 = arith.constant 0 : index
    %c33_62 = arith.constant 33 : index
    %45 = vector.load %arg1[%c1_60, %c0_61, %c33_62] : memref<2x32x418xbf16, #tpu.memory_space<vmem>>, vector<1x32x384xbf16>
    %46 = vector.shape_cast %45 : vector<1x32x384xbf16> to vector<32x384xbf16>
    %c224_63 = arith.constant 224 : index
    %c384_64 = arith.constant 384 : index
    %47 = vector.load %arg10[%c224_63, %c384_64] : memref<288x768xbf16, #tpu.memory_space<vmem>>, vector<32x384xbf16>
    tpu.vector_store %arg10[%c224_63, %c384_64], %46 {strides = array<i32>} : memref<288x768xbf16, #tpu.memory_space<vmem>>, vector<32x384xbf16>,
    %c0_65 = arith.constant 0 : index
    %c0_66 = arith.constant 0 : index
    %c34 = arith.constant 34 : index
    %48 = vector.load %arg1[%c0_65, %c0_66, %c34] : memref<2x32x418xbf16, #tpu.memory_space<vmem>>, vector<1x32x384xbf16>
    %49 = vector.shape_cast %48 : vector<1x32x384xbf16> to vector<32x384xbf16>
    %c256 = arith.constant 256 : index
    %c0_67 = arith.constant 0 : index
    %50 = vector.load %arg10[%c256, %c0_67] : memref<288x768xbf16, #tpu.memory_space<vmem>>, vector<32x384xbf16>
    tpu.vector_store %arg10[%c256, %c0_67], %49 {strides = array<i32>} : memref<288x768xbf16, #tpu.memory_space<vmem>>, vector<32x384xbf16>,
    %c1_68 = arith.constant 1 : index
    %c0_69 = arith.constant 0 : index
    %c34_70 = arith.constant 34 : index
    %51 = vector.load %arg1[%c1_68, %c0_69, %c34_70] : memref<2x32x418xbf16, #tpu.memory_space<vmem>>, vector<1x32x384xbf16>
    %52 = vector.shape_cast %51 : vector<1x32x384xbf16> to vector<32x384xbf16>
    %c256_71 = arith.constant 256 : index
    %c384_72 = arith.constant 384 : index
    %53 = vector.load %arg10[%c256_71, %c384_72] : memref<288x768xbf16, #tpu.memory_space<vmem>>, vector<32x384xbf16>
    tpu.vector_store %arg10[%c256_71, %c384_72], %52 {strides = array<i32>} : memref<288x768xbf16, #tpu.memory_space<vmem>>, vector<32x384xbf16>,
    %c0_73 = arith.constant 0 : index
    %c0_74 = arith.constant 0 : index
    %54 = vector.load %arg2[%c0_73, %c0_74] : memref<16x288xbf16, #tpu.memory_space<vmem>>, vector<16x288xbf16>
    %c0_75 = arith.constant 0 : index
    %c0_76 = arith.constant 0 : index
    %55 = vector.load %arg10[%c0_75, %c0_76] : memref<288x768xbf16, #tpu.memory_space<vmem>>, vector<288x768xbf16>
    %cst = arith.constant dense<0.000000e+00> : vector<16x768xf32>
    %56 = tpu.matmul %54, %55, %cst {dimension_numbers = #tpu.dot_dimension_numbers<[1], [0], [0], [1], [0, 0, 1, 1], [], []>} : vector<16x288xbf16>, vector<288x768xbf16>, vector<16x768xf32> -> vector<16x768xf32>
    %c0_77 = arith.constant 0 : index
    %c0_78 = arith.constant 0 : index
    %57 = vector.load %arg3[%c0_77, %c0_78] : memref<16x1xf32, #tpu.memory_space<vmem>>, vector<16x1xf32>
    %58 = vector.broadcast %57 : vector<16x1xf32> to vector<16x768xf32>
    %59 = arith.addf %56, %58 : vector<16x768xf32>
    %60 = arith.truncf %59 : vector<16x768xf32> to vector<16x768xbf16>
    %c0_79 = arith.constant 0 : index
    %c0_80 = arith.constant 0 : index
    %61 = vector.load %arg11[%c0_79, %c0_80] : memref<16x768xbf16, #tpu.memory_space<vmem>>, vector<16x768xbf16>
    tpu.vector_store %arg11[%c0_79, %c0_80], %60 {strides = array<i32>} : memref<16x768xbf16, #tpu.memory_space<vmem>>, vector<16x768xbf16>,
    %c0_81 = arith.constant 0 : index
    %c0_82 = arith.constant 0 : index
    %62 = vector.load %arg11[%c0_81, %c0_82] : memref<16x768xbf16, #tpu.memory_space<vmem>>, vector<16x256xbf16>
    %c0_83 = arith.constant 0 : index
    %c0_84 = arith.constant 0 : index
    %63 = vector.load %arg12[%c0_83, %c0_84] : memref<144x512xbf16, #tpu.memory_space<vmem>>, vector<16x256xbf16>
    tpu.vector_store %arg12[%c0_83, %c0_84], %62 {strides = array<i32>} : memref<144x512xbf16, #tpu.memory_space<vmem>>, vector<16x256xbf16>,
    %c0_85 = arith.constant 0 : index
    %c384_86 = arith.constant 384 : index
    %64 = vector.load %arg11[%c0_85, %c384_86] : memref<16x768xbf16, #tpu.memory_space<vmem>>, vector<16x256xbf16>
    %c0_87 = arith.constant 0 : index
    %c256_88 = arith.constant 256 : index
    %65 = vector.load %arg12[%c0_87, %c256_88] : memref<144x512xbf16, #tpu.memory_space<vmem>>, vector<16x256xbf16>
    tpu.vector_store %arg12[%c0_87, %c256_88], %64 {strides = array<i32>} : memref<144x512xbf16, #tpu.memory_space<vmem>>, vector<16x256xbf16>,
    %c0_89 = arith.constant 0 : index
    %c1_90 = arith.constant 1 : index
    %66 = vector.load %arg11[%c0_89, %c1_90] : memref<16x768xbf16, #tpu.memory_space<vmem>>, vector<16x256xbf16>
    %c16_91 = arith.constant 16 : index
    %c0_92 = arith.constant 0 : index
    %67 = vector.load %arg12[%c16_91, %c0_92] : memref<144x512xbf16, #tpu.memory_space<vmem>>, vector<16x256xbf16>
    tpu.vector_store %arg12[%c16_91, %c0_92], %66 {strides = array<i32>} : memref<144x512xbf16, #tpu.memory_space<vmem>>, vector<16x256xbf16>,
    %c0_93 = arith.constant 0 : index
    %c385 = arith.constant 385 : index
    %68 = vector.load %arg11[%c0_93, %c385] : memref<16x768xbf16, #tpu.memory_space<vmem>>, vector<16x256xbf16>
    %c16_94 = arith.constant 16 : index
    %c256_95 = arith.constant 256 : index
    %69 = vector.load %arg12[%c16_94, %c256_95] : memref<144x512xbf16, #tpu.memory_space<vmem>>, vector<16x256xbf16>
    tpu.vector_store %arg12[%c16_94, %c256_95], %68 {strides = array<i32>} : memref<144x512xbf16, #tpu.memory_space<vmem>>, vector<16x256xbf16>,
    %c0_96 = arith.constant 0 : index
    %c2_97 = arith.constant 2 : index
    %70 = vector.load %arg11[%c0_96, %c2_97] : memref<16x768xbf16, #tpu.memory_space<vmem>>, vector<16x256xbf16>
    %c32_98 = arith.constant 32 : index
    %c0_99 = arith.constant 0 : index
    %71 = vector.load %arg12[%c32_98, %c0_99] : memref<144x512xbf16, #tpu.memory_space<vmem>>, vector<16x256xbf16>
    tpu.vector_store %arg12[%c32_98, %c0_99], %70 {strides = array<i32>} : memref<144x512xbf16, #tpu.memory_space<vmem>>, vector<16x256xbf16>,
    %c0_100 = arith.constant 0 : index
    %c386 = arith.constant 386 : index
    %72 = vector.load %arg11[%c0_100, %c386] : memref<16x768xbf16, #tpu.memory_space<vmem>>, vector<16x256xbf16>
    %c32_101 = arith.constant 32 : index
    %c256_102 = arith.constant 256 : index
    %73 = vector.load %arg12[%c32_101, %c256_102] : memref<144x512xbf16, #tpu.memory_space<vmem>>, vector<16x256xbf16>
    tpu.vector_store %arg12[%c32_101, %c256_102], %72 {strides = array<i32>} : memref<144x512xbf16, #tpu.memory_space<vmem>>, vector<16x256xbf16>,
    %c0_103 = arith.constant 0 : index
    %c16_104 = arith.constant 16 : index
    %74 = vector.load %arg11[%c0_103, %c16_104] : memref<16x768xbf16, #tpu.memory_space<vmem>>, vector<16x256xbf16>
    %c48 = arith.constant 48 : index
    %c0_105 = arith.constant 0 : index
    %75 = vector.load %arg12[%c48, %c0_105] : memref<144x512xbf16, #tpu.memory_space<vmem>>, vector<16x256xbf16>
    tpu.vector_store %arg12[%c48, %c0_105], %74 {strides = array<i32>} : memref<144x512xbf16, #tpu.memory_space<vmem>>, vector<16x256xbf16>,
    %c0_106 = arith.constant 0 : index
    %c400 = arith.constant 400 : index
    %76 = vector.load %arg11[%c0_106, %c400] : memref<16x768xbf16, #tpu.memory_space<vmem>>, vector<16x256xbf16>
    %c48_107 = arith.constant 48 : index
    %c256_108 = arith.constant 256 : index
    %77 = vector.load %arg12[%c48_107, %c256_108] : memref<144x512xbf16, #tpu.memory_space<vmem>>, vector<16x256xbf16>
    tpu.vector_store %arg12[%c48_107, %c256_108], %76 {strides = array<i32>} : memref<144x512xbf16, #tpu.memory_space<vmem>>, vector<16x256xbf16>,
    %c0_109 = arith.constant 0 : index
    %c17_110 = arith.constant 17 : index
    %78 = vector.load %arg11[%c0_109, %c17_110] : memref<16x768xbf16, #tpu.memory_space<vmem>>, vector<16x256xbf16>
    %c64_111 = arith.constant 64 : index
    %c0_112 = arith.constant 0 : index
    %79 = vector.load %arg12[%c64_111, %c0_112] : memref<144x512xbf16, #tpu.memory_space<vmem>>, vector<16x256xbf16>
    tpu.vector_store %arg12[%c64_111, %c0_112], %78 {strides = array<i32>} : memref<144x512xbf16, #tpu.memory_space<vmem>>, vector<16x256xbf16>,
    %c0_113 = arith.constant 0 : index
    %c401 = arith.constant 401 : index
    %80 = vector.load %arg11[%c0_113, %c401] : memref<16x768xbf16, #tpu.memory_space<vmem>>, vector<16x256xbf16>
    %c64_114 = arith.constant 64 : index
    %c256_115 = arith.constant 256 : index
    %81 = vector.load %arg12[%c64_114, %c256_115] : memref<144x512xbf16, #tpu.memory_space<vmem>>, vector<16x256xbf16>
    tpu.vector_store %arg12[%c64_114, %c256_115], %80 {strides = array<i32>} : memref<144x512xbf16, #tpu.memory_space<vmem>>, vector<16x256xbf16>,
    %c0_116 = arith.constant 0 : index
    %c18_117 = arith.constant 18 : index
    %82 = vector.load %arg11[%c0_116, %c18_117] : memref<16x768xbf16, #tpu.memory_space<vmem>>, vector<16x256xbf16>
    %c80 = arith.constant 80 : index
    %c0_118 = arith.constant 0 : index
    %83 = vector.load %arg12[%c80, %c0_118] : memref<144x512xbf16, #tpu.memory_space<vmem>>, vector<16x256xbf16>
    tpu.vector_store %arg12[%c80, %c0_118], %82 {strides = array<i32>} : memref<144x512xbf16, #tpu.memory_space<vmem>>, vector<16x256xbf16>,
    %c0_119 = arith.constant 0 : index
    %c402 = arith.constant 402 : index
    %84 = vector.load %arg11[%c0_119, %c402] : memref<16x768xbf16, #tpu.memory_space<vmem>>, vector<16x256xbf16>
    %c80_120 = arith.constant 80 : index
    %c256_121 = arith.constant 256 : index
    %85 = vector.load %arg12[%c80_120, %c256_121] : memref<144x512xbf16, #tpu.memory_space<vmem>>, vector<16x256xbf16>
    tpu.vector_store %arg12[%c80_120, %c256_121], %84 {strides = array<i32>} : memref<144x512xbf16, #tpu.memory_space<vmem>>, vector<16x256xbf16>,
    %c0_122 = arith.constant 0 : index
    %c32_123 = arith.constant 32 : index
    %86 = vector.load %arg11[%c0_122, %c32_123] : memref<16x768xbf16, #tpu.memory_space<vmem>>, vector<16x256xbf16>
    %c96_124 = arith.constant 96 : index
    %c0_125 = arith.constant 0 : index
    %87 = vector.load %arg12[%c96_124, %c0_125] : memref<144x512xbf16, #tpu.memory_space<vmem>>, vector<16x256xbf16>
    tpu.vector_store %arg12[%c96_124, %c0_125], %86 {strides = array<i32>} : memref<144x512xbf16, #tpu.memory_space<vmem>>, vector<16x256xbf16>,
    %c0_126 = arith.constant 0 : index
    %c416 = arith.constant 416 : index
    %88 = vector.load %arg11[%c0_126, %c416] : memref<16x768xbf16, #tpu.memory_space<vmem>>, vector<16x256xbf16>
    %c96_127 = arith.constant 96 : index
    %c256_128 = arith.constant 256 : index
    %89 = vector.load %arg12[%c96_127, %c256_128] : memref<144x512xbf16, #tpu.memory_space<vmem>>, vector<16x256xbf16>
    tpu.vector_store %arg12[%c96_127, %c256_128], %88 {strides = array<i32>} : memref<144x512xbf16, #tpu.memory_space<vmem>>, vector<16x256xbf16>,
    %c0_129 = arith.constant 0 : index
    %c33_130 = arith.constant 33 : index
    %90 = vector.load %arg11[%c0_129, %c33_130] : memref<16x768xbf16, #tpu.memory_space<vmem>>, vector<16x256xbf16>
    %c112 = arith.constant 112 : index
    %c0_131 = arith.constant 0 : index
    %91 = vector.load %arg12[%c112, %c0_131] : memref<144x512xbf16, #tpu.memory_space<vmem>>, vector<16x256xbf16>
    tpu.vector_store %arg12[%c112, %c0_131], %90 {strides = array<i32>} : memref<144x512xbf16, #tpu.memory_space<vmem>>, vector<16x256xbf16>,
    %c0_132 = arith.constant 0 : index
    %c417 = arith.constant 417 : index
    %92 = vector.load %arg11[%c0_132, %c417] : memref<16x768xbf16, #tpu.memory_space<vmem>>, vector<16x256xbf16>
    %c112_133 = arith.constant 112 : index
    %c256_134 = arith.constant 256 : index
    %93 = vector.load %arg12[%c112_133, %c256_134] : memref<144x512xbf16, #tpu.memory_space<vmem>>, vector<16x256xbf16>
    tpu.vector_store %arg12[%c112_133, %c256_134], %92 {strides = array<i32>} : memref<144x512xbf16, #tpu.memory_space<vmem>>, vector<16x256xbf16>,
    %c0_135 = arith.constant 0 : index
    %c34_136 = arith.constant 34 : index
    %94 = vector.load %arg11[%c0_135, %c34_136] : memref<16x768xbf16, #tpu.memory_space<vmem>>, vector<16x256xbf16>
    %c128_137 = arith.constant 128 : index
    %c0_138 = arith.constant 0 : index
    %95 = vector.load %arg12[%c128_137, %c0_138] : memref<144x512xbf16, #tpu.memory_space<vmem>>, vector<16x256xbf16>
    tpu.vector_store %arg12[%c128_137, %c0_138], %94 {strides = array<i32>} : memref<144x512xbf16, #tpu.memory_space<vmem>>, vector<16x256xbf16>,
    %c0_139 = arith.constant 0 : index
    %c418 = arith.constant 418 : index
    %96 = vector.load %arg11[%c0_139, %c418] : memref<16x768xbf16, #tpu.memory_space<vmem>>, vector<16x256xbf16>
    %c128_140 = arith.constant 128 : index
    %c256_141 = arith.constant 256 : index
    %97 = vector.load %arg12[%c128_140, %c256_141] : memref<144x512xbf16, #tpu.memory_space<vmem>>, vector<16x256xbf16>
    tpu.vector_store %arg12[%c128_140, %c256_141], %96 {strides = array<i32>} : memref<144x512xbf16, #tpu.memory_space<vmem>>, vector<16x256xbf16>,
    %c0_142 = arith.constant 0 : index
    %c0_143 = arith.constant 0 : index
    %98 = vector.load %arg4[%c0_142, %c0_143] : memref<32x144xbf16, #tpu.memory_space<vmem>>, vector<32x144xbf16>
    %c0_144 = arith.constant 0 : index
    %c0_145 = arith.constant 0 : index
    %99 = vector.load %arg12[%c0_144, %c0_145] : memref<144x512xbf16, #tpu.memory_space<vmem>>, vector<144x512xbf16>
    %cst_146 = arith.constant dense<0.000000e+00> : vector<32x512xf32>
    %100 = tpu.matmul %98, %99, %cst_146 {dimension_numbers = #tpu.dot_dimension_numbers<[1], [0], [0], [1], [0, 0, 1, 1], [], []>} : vector<32x144xbf16>, vector<144x512xbf16>, vector<32x512xf32> -> vector<32x512xf32>
    %c0_147 = arith.constant 0 : index
    %c0_148 = arith.constant 0 : index
    %101 = vector.load %arg5[%c0_147, %c0_148] : memref<32x1xf32, #tpu.memory_space<vmem>>, vector<32x1xf32>
    %102 = vector.broadcast %101 : vector<32x1xf32> to vector<32x512xf32>
    %103 = arith.addf %100, %102 : vector<32x512xf32>
    %c0_149 = arith.constant 0 : index
    %c0_150 = arith.constant 0 : index
    %104 = vector.load %arg8[%c0_149, %c0_150] : memref<1x256xf32, #tpu.memory_space<vmem>>, vector<1x256xf32>
    %105 = vector.extract_strided_slice %103 {offsets = [0, 0], sizes = [32, 256], strides = [1, 1]} : vector<32x512xf32> to vector<32x256xf32>
    %106 = vector.broadcast %104 : vector<1x256xf32> to vector<32x256xf32>
    %107 = arith.mulf %105, %106 : vector<32x256xf32>
    %cst_151 = arith.constant dense<0.000000e+00> : vector<32xf32>
    %108 = vector.multi_reduction <add>, %107, %cst_151 [1] : vector<32x256xf32> to vector<32xf32>
    %109 = vector.shape_cast %108 : vector<32xf32> to vector<32x1xf32>
    %cst_152 = arith.constant 0.0069444445 : f32
    %110 = vector.broadcast %cst_152 : f32 to vector<32x1xf32>
    %111 = arith.mulf %109, %110 : vector<32x1xf32>
    %c0_153 = arith.constant 0 : index
    %c0_154 = arith.constant 0 : index
    %112 = vector.load %arg6[%c0_153, %c0_154] : memref<32x4xf32, #tpu.memory_space<vmem>>, vector<32x4xf32>
    %113 = vector.broadcast %111 : vector<32x1xf32> to vector<32x4xf32>
    %114 = arith.mulf %112, %113 : vector<32x4xf32>
    %cst_155 = arith.constant dense<0.000000e+00> : vector<4xf32>
    %115 = vector.multi_reduction <add>, %114, %cst_155 [0] : vector<32x4xf32> to vector<4xf32>
    %116 = vector.shape_cast %115 : vector<4xf32> to vector<1x4xf32>
    %cst_156 = arith.constant 0.000000e+00 : f32
    %117 = vector.broadcast %cst_156 : f32 to vector<1x4xf32>
    %118 = arith.maximumf %116, %117 : vector<1x4xf32>
    %c0_157 = arith.constant 0 : index
    %c0_158 = arith.constant 0 : index
    %119 = vector.load %arg7[%c0_157, %c0_158] : memref<32x4xf32, #tpu.memory_space<vmem>>, vector<32x4xf32>
    %120 = vector.broadcast %118 : vector<1x4xf32> to vector<32x4xf32>
    %121 = arith.mulf %119, %120 : vector<32x4xf32>
    %cst_159 = arith.constant dense<0.000000e+00> : vector<32xf32>
    %122 = vector.multi_reduction <add>, %121, %cst_159 [1] : vector<32x4xf32> to vector<32xf32>
    %123 = vector.shape_cast %122 : vector<32xf32> to vector<32x1xf32>
    %124 = arith.negf %123 : vector<32x1xf32>
    %125 = math.exp %124 : vector<32x1xf32>
    %cst_160 = arith.constant 1.000000e+00 : f32
    %126 = vector.broadcast %cst_160 : f32 to vector<32x1xf32>
    %127 = arith.addf %126, %125 : vector<32x1xf32>
    %128 = arith.divf %126, %127 : vector<32x1xf32>
    %129 = vector.broadcast %128 : vector<32x1xf32> to vector<32x256xf32>
    %130 = arith.mulf %105, %129 : vector<32x256xf32>
    %c0_161 = arith.constant 0 : index
    %c0_162 = arith.constant 0 : index
    %c0_163 = arith.constant 0 : index
    %131 = vector.load %arg9[%c0_161, %c0_162, %c0_163] : memref<2x32x256xf32, #tpu.memory_space<vmem>>, vector<1x32x256xf32>
    %132 = vector.shape_cast %131 : vector<1x32x256xf32> to vector<32x256xf32>
    %133 = vector.shape_cast %130 : vector<32x256xf32> to vector<1x32x256xf32>
    tpu.vector_store %arg9[%c0_161, %c0_162, %c0_163], %133 {strides = array<i32>} : memref<2x32x256xf32, #tpu.memory_space<vmem>>, vector<1x32x256xf32>,
    %134 = vector.extract_strided_slice %103 {offsets = [0, 256], sizes = [32, 256], strides = [1, 1]} : vector<32x512xf32> to vector<32x256xf32>
    %135 = vector.broadcast %104 : vector<1x256xf32> to vector<32x256xf32>
    %136 = arith.mulf %134, %135 : vector<32x256xf32>
    %cst_164 = arith.constant dense<0.000000e+00> : vector<32xf32>
    %137 = vector.multi_reduction <add>, %136, %cst_164 [1] : vector<32x256xf32> to vector<32xf32>
    %138 = vector.shape_cast %137 : vector<32xf32> to vector<32x1xf32>
    %cst_165 = arith.constant 0.0069444445 : f32
    %139 = vector.broadcast %cst_165 : f32 to vector<32x1xf32>
    %140 = arith.mulf %138, %139 : vector<32x1xf32>
    %c0_166 = arith.constant 0 : index
    %c0_167 = arith.constant 0 : index
    %141 = vector.load %arg6[%c0_166, %c0_167] : memref<32x4xf32, #tpu.memory_space<vmem>>, vector<32x4xf32>
    %142 = vector.broadcast %140 : vector<32x1xf32> to vector<32x4xf32>
    %143 = arith.mulf %141, %142 : vector<32x4xf32>
    %cst_168 = arith.constant dense<0.000000e+00> : vector<4xf32>
    %144 = vector.multi_reduction <add>, %143, %cst_168 [0] : vector<32x4xf32> to vector<4xf32>
    %145 = vector.shape_cast %144 : vector<4xf32> to vector<1x4xf32>
    %cst_169 = arith.constant 0.000000e+00 : f32
    %146 = vector.broadcast %cst_169 : f32 to vector<1x4xf32>
    %147 = arith.maximumf %145, %146 : vector<1x4xf32>
    %c0_170 = arith.constant 0 : index
    %c0_171 = arith.constant 0 : index
    %148 = vector.load %arg7[%c0_170, %c0_171] : memref<32x4xf32, #tpu.memory_space<vmem>>, vector<32x4xf32>
    %149 = vector.broadcast %147 : vector<1x4xf32> to vector<32x4xf32>
    %150 = arith.mulf %148, %149 : vector<32x4xf32>
    %cst_172 = arith.constant dense<0.000000e+00> : vector<32xf32>
    %151 = vector.multi_reduction <add>, %150, %cst_172 [1] : vector<32x4xf32> to vector<32xf32>
    %152 = vector.shape_cast %151 : vector<32xf32> to vector<32x1xf32>
    %153 = arith.negf %152 : vector<32x1xf32>
    %154 = math.exp %153 : vector<32x1xf32>
    %cst_173 = arith.constant 1.000000e+00 : f32
    %155 = vector.broadcast %cst_173 : f32 to vector<32x1xf32>
    %156 = arith.addf %155, %154 : vector<32x1xf32>
    %157 = arith.divf %155, %156 : vector<32x1xf32>
    %158 = vector.broadcast %157 : vector<32x1xf32> to vector<32x256xf32>
    %159 = arith.mulf %134, %158 : vector<32x256xf32>
    %c1_174 = arith.constant 1 : index
    %c0_175 = arith.constant 0 : index
    %c0_176 = arith.constant 0 : index
    %160 = vector.load %arg9[%c1_174, %c0_175, %c0_176] : memref<2x32x256xf32, #tpu.memory_space<vmem>>, vector<1x32x256xf32>
    %161 = vector.shape_cast %160 : vector<1x32x256xf32> to vector<32x256xf32>
    %162 = vector.shape_cast %159 : vector<32x256xf32> to vector<1x32x256xf32>
    tpu.vector_store %arg9[%c1_174, %c0_175, %c0_176], %162 {strides = array<i32>} : memref<2x32x256xf32, #tpu.memory_space<vmem>>, vector<1x32x256xf32>,
    return
  }
  func.func @transform_0(%arg0: i32) -> (i32, i32, i32) {
    %c0_i32 = arith.constant 0 : i32
    %c0_i32_0 = arith.constant 0 : i32
    %c0_i32_1 = arith.constant 0 : i32
    return %arg0, %c0_i32, %c0_i32_0 : i32, i32, i32
  }
  func.func @transform_1(%arg0: i32) -> (i32, i32) {
    %c0_i32 = arith.constant 0 : i32
    %c0_i32_0 = arith.constant 0 : i32
    %c0_i32_1 = arith.constant 0 : i32
    return %c0_i32, %c0_i32_0 : i32, i32
  }
  func.func @transform_2(%arg0: i32) -> (i32, i32) {
    %c0_i32 = arith.constant 0 : i32
    %c0_i32_0 = arith.constant 0 : i32
    %c0_i32_1 = arith.constant 0 : i32
    return %c0_i32, %c0_i32_0 : i32, i32
  }
  func.func @transform_3(%arg0: i32) -> (i32, i32) {
    %c0_i32 = arith.constant 0 : i32
    %c0_i32_0 = arith.constant 0 : i32
    %c0_i32_1 = arith.constant 0 : i32
    return %c0_i32, %c0_i32_0 : i32, i32
  }
  func.func @transform_4(%arg0: i32) -> (i32, i32) {
    %c0_i32 = arith.constant 0 : i32
    %c0_i32_0 = arith.constant 0 : i32
    %c0_i32_1 = arith.constant 0 : i32
    return %c0_i32, %c0_i32_0 : i32, i32
  }
  func.func @transform_5(%arg0: i32) -> (i32, i32) {
    %c0_i32 = arith.constant 0 : i32
    %c0_i32_0 = arith.constant 0 : i32
    %c0_i32_1 = arith.constant 0 : i32
    return %c0_i32, %c0_i32_0 : i32, i32
  }
  func.func @transform_6(%arg0: i32) -> (i32, i32) {
    %c0_i32 = arith.constant 0 : i32
    %c0_i32_0 = arith.constant 0 : i32
    %c0_i32_1 = arith.constant 0 : i32
    return %c0_i32, %c0_i32_0 : i32, i32
  }
  func.func @transform_7(%arg0: i32) -> (i32, i32) {
    %c0_i32 = arith.constant 0 : i32
    %c0_i32_0 = arith.constant 0 : i32
    %c0_i32_1 = arith.constant 0 : i32
    return %c0_i32, %c0_i32_0 : i32, i32
  }
  func.func @transform_8(%arg0: i32) -> (i32, i32, i32) {
    %c0_i32 = arith.constant 0 : i32
    %c0_i32_0 = arith.constant 0 : i32
    %c0_i32_1 = arith.constant 0 : i32
    return %arg0, %c0_i32, %c0_i32_0 : i32, i32, i32
  }
}

</mosaic_0001>

<llo_original>
// kernel: bottleneck_forward.1
$region0: #{bottleneck_forward.1}
  #allocation0 [shape = 'u32[]', space=smem, size = 0x4, offset = 0x4, fixed_abs, tag = 'smem constant byte address 0x4 - core index']
  #allocation1 [shape = 'u32[144,128]{1,0:T(1,128)}', space=vmem, size = 0x12000, scoped, tag = 'internal scratch']
  #allocation2 [shape = 'bf16[288,768]{1,0:T(8,128)(2,1)}', space=vmem, size = 0x6c000, scoped, tag = 'scratch operand']
  #allocation3 [shape = 'bf16[16,768]{1,0:T(8,128)(2,1)}', space=vmem, size = 0x6000, scoped, tag = 'scratch operand']
  #allocation4 [shape = 'bf16[144,512]{1,0:T(8,128)(2,1)}', space=vmem, size = 0x24000, scoped, tag = 'scratch operand']
  %s0 = inlined_call_operand.vmem [shape: bf16[4,32,418], index: 0, kind: input, shape index: {}]
  %s1 = inlined_call_operand.vmem [shape: bf16[16,288], index: 1, kind: input, shape index: {}]
  %s2 = inlined_call_operand.vmem [shape: f32[16,1], index: 2, kind: input, shape index: {}]
  %s3 = inlined_call_operand.vmem [shape: bf16[32,144], index: 3, kind: input, shape index: {}]
  %s4 = inlined_call_operand.vmem [shape: f32[32,1], index: 4, kind: input, shape index: {}]
  %s5 = inlined_call_operand.vmem [shape: f32[32,4], index: 5, kind: input, shape index: {}]
  %s6 = inlined_call_operand.vmem [shape: f32[32,4], index: 6, kind: input, shape index: {}]
  %s7 = inlined_call_operand.vmem [shape: f32[1,256], index: 7, kind: input, shape index: {}]
  %s8 = inlined_call_operand.vmem [shape: f32[4,32,256], index: 8, kind: output, shape index: {}]
  %s9 = sld [smem:[#allocation0]]
  $region65: #{bottleneck_forward.1} parent=0
    _
  %s11 = ssub.s32 1, %s9
  %s12 = scalar_select 0, %s11, %s9
  loop: start=0, step=1, limit=4
  $region2: #{bottleneck_forward.1} parent=0 // loop_pre_header
    _
  $region3: #{bottleneck_forward.1} parent=0 // loop_header
    %s14 = sphi 0, %s18
    %p15 = scmp.ge.s32.totalorder %s14, 4
    %s24 = sphi 0, %s26
    %s27 = sphi 0, %s24
    %s28 = sphi 0, %s27
    %s44 = sphi 0, %s28
    %s48 = sphi 0, %s48
    %s50 = sphi 0, %s48
    %s51 = sphi 0, %s50
    %s65 = sphi 0, %s51
    %s69 = sphi 0, %s69
    %s71 = sphi 0, %s69
    %s72 = sphi 0, %s71
    %s86 = sphi 0, %s72
    %s90 = sphi 0, %s90
    %s92 = sphi 0, %s90
    %s93 = sphi 0, %s92
    %s107 = sphi 0, %s93
    %s111 = sphi 0, %s111
    %s113 = sphi 0, %s111
    %s114 = sphi 0, %s113
    %s128 = sphi 0, %s114
    %s132 = sphi 0, %s132
    %s134 = sphi 0, %s132
    %s135 = sphi 0, %s134
    %s149 = sphi 0, %s135
    %s153 = sphi 0, %s153
    %s155 = sphi 0, %s153
    %s156 = sphi 0, %s155
    %s170 = sphi 0, %s156
    %s174 = sphi 0, %s174
    %s176 = sphi 0, %s174
    %s177 = sphi 0, %s176
    %s191 = sphi 0, %s177
    %s197 = sphi 0, %s199
    %s200 = sphi 0, %s197
    %s201 = sphi 0, %s200
    %s217 = sphi 0, %s201
  $region4: #{bottleneck_forward.1} parent=0 // loop_header_branch
    %17 = sbr.rel (%p15) target = $region8
  $region5: #{bottleneck_forward.1} parent=0 // loop_body
    %s19 = ssub.s32 %s14, 1
    %s20 = ssub.s32 %s14, 2
    %s21 = sadd.s32 %s14, 1
    %s22 = ssub.s32 %s14, %s21
    %p23 = scmp.eq.s32.totalorder %s22, 0
    %s25 = sadd.s32 %s24, 1
    %s26 = scalar_select %p23, %s24, %s25
    %p29 = pneg %p23
    %p30 = scmp.eq.s32.totalorder %s14, 1
    %p31 = por %p29, %p30
    %p32 = scmp.ne.s32.totalorder %s24, %s27
    %p33 = scmp.eq.s32.totalorder %s14, 0
    %p34 = por %p32, %p33
    %p35 = scmp.ne.s32.totalorder %s24, %s27
    %p36 = scmp.eq.s32.totalorder %s19, 1
    %p37 = por %p35, %p36
    %p38 = scmp.ne.s32.totalorder %s27, %s28
    %p39 = scmp.eq.s32.totalorder %s19, 0
    %p40 = por %p38, %p39
    %p41 = scmp.ne.s32.totalorder %s27, %s28
    %p42 = scmp.eq.s32.totalorder %s20, 1
    %p43 = por %p41, %p42
    %p45 = scmp.ne.s32.totalorder %s28, %s44
    %p46 = scmp.eq.s32.totalorder %s20, 0
    %p47 = por %p45, %p46
    %s49 = sadd.s32 %s48, 1
    %p52 = scmp.eq.s32.totalorder %s14, 1
    %p53 = scmp.ne.s32.totalorder %s48, %s50
    %p54 = scmp.eq.s32.totalorder %s14, 0
    %p55 = por %p53, %p54
    %p56 = scmp.ne.s32.totalorder %s48, %s50
    %p57 = scmp.eq.s32.totalorder %s19, 1
    %p58 = por %p56, %p57
    %p59 = scmp.ne.s32.totalorder %s50, %s51
    %p60 = scmp.eq.s32.totalorder %s19, 0
    %p61 = por %p59, %p60
    %p62 = scmp.ne.s32.totalorder %s50, %s51
    %p63 = scmp.eq.s32.totalorder %s20, 1
    %p64 = por %p62, %p63
    %p66 = scmp.ne.s32.totalorder %s51, %s65
    %p67 = scmp.eq.s32.totalorder %s20, 0
    %p68 = por %p66, %p67
    %s70 = sadd.s32 %s69, 1
    %p73 = scmp.eq.s32.totalorder %s14, 1
    %p74 = scmp.ne.s32.totalorder %s69, %s71
    %p75 = scmp.eq.s32.totalorder %s14, 0
    %p76 = por %p74, %p75
    %p77 = scmp.ne.s32.totalorder %s69, %s71
    %p78 = scmp.eq.s32.totalorder %s19, 1
    %p79 = por %p77, %p78
    %p80 = scmp.ne.s32.totalorder %s71, %s72
    %p81 = scmp.eq.s32.totalorder %s19, 0
    %p82 = por %p80, %p81
    %p83 = scmp.ne.s32.totalorder %s71, %s72
    %p84 = scmp.eq.s32.totalorder %s20, 1
    %p85 = por %p83, %p84
    %p87 = scmp.ne.s32.totalorder %s72, %s86
    %p88 = scmp.eq.s32.totalorder %s20, 0
    %p89 = por %p87, %p88
    %s91 = sadd.s32 %s90, 1
    %p94 = scmp.eq.s32.totalorder %s14, 1
    %p95 = scmp.ne.s32.totalorder %s90, %s92
    %p96 = scmp.eq.s32.totalorder %s14, 0
    %p97 = por %p95, %p96
    %p98 = scmp.ne.s32.totalorder %s90, %s92
    %p99 = scmp.eq.s32.totalorder %s19, 1
    %p100 = por %p98, %p99
    %p101 = scmp.ne.s32.totalorder %s92, %s93
    %p102 = scmp.eq.s32.totalorder %s19, 0
    %p103 = por %p101, %p102
    %p104 = scmp.ne.s32.totalorder %s92, %s93
    %p105 = scmp.eq.s32.totalorder %s20, 1
    %p106 = por %p104, %p105
    %p108 = scmp.ne.s32.totalorder %s93, %s107
    %p109 = scmp.eq.s32.totalorder %s20, 0
    %p110 = por %p108, %p109
    %s112 = sadd.s32 %s111, 1
    %p115 = scmp.eq.s32.totalorder %s14, 1
    %p116 = scmp.ne.s32.totalorder %s111, %s113
    %p117 = scmp.eq.s32.totalorder %s14, 0
    %p118 = por %p116, %p117
    %p119 = scmp.ne.s32.totalorder %s111, %s113
    %p120 = scmp.eq.s32.totalorder %s19, 1
    %p121 = por %p119, %p120
    %p122 = scmp.ne.s32.totalorder %s113, %s114
    %p123 = scmp.eq.s32.totalorder %s19, 0
    %p124 = por %p122, %p123
    %p125 = scmp.ne.s32.totalorder %s113, %s114
    %p126 = scmp.eq.s32.totalorder %s20, 1
    %p127 = por %p125, %p126
    %p129 = scmp.ne.s32.totalorder %s114, %s128
    %p130 = scmp.eq.s32.totalorder %s20, 0
    %p131 = por %p129, %p130
    %s133 = sadd.s32 %s132, 1
    %p136 = scmp.eq.s32.totalorder %s14, 1
    %p137 = scmp.ne.s32.totalorder %s132, %s134
    %p138 = scmp.eq.s32.totalorder %s14, 0
    %p139 = por %p137, %p138
    %p140 = scmp.ne.s32.totalorder %s132, %s134
    %p141 = scmp.eq.s32.totalorder %s19, 1
    %p142 = por %p140, %p141
    %p143 = scmp.ne.s32.totalorder %s134, %s135
    %p144 = scmp.eq.s32.totalorder %s19, 0
    %p145 = por %p143, %p144
    %p146 = scmp.ne.s32.totalorder %s134, %s135
    %p147 = scmp.eq.s32.totalorder %s20, 1
    %p148 = por %p146, %p147
    %p150 = scmp.ne.s32.totalorder %s135, %s149
    %p151 = scmp.eq.s32.totalorder %s20, 0
    %p152 = por %p150, %p151
    %s154 = sadd.s32 %s153, 1
    %p157 = scmp.eq.s32.totalorder %s14, 1
    %p158 = scmp.ne.s32.totalorder %s153, %s155
    %p159 = scmp.eq.s32.totalorder %s14, 0
    %p160 = por %p158, %p159
    %p161 = scmp.ne.s32.totalorder %s153, %s155
    %p162 = scmp.eq.s32.totalorder %s19, 1
    %p163 = por %p161, %p162
    %p164 = scmp.ne.s32.totalorder %s155, %s156
    %p165 = scmp.eq.s32.totalorder %s19, 0
    %p166 = por %p164, %p165
    %p167 = scmp.ne.s32.totalorder %s155, %s156
    %p168 = scmp.eq.s32.totalorder %s20, 1
    %p169 = por %p167, %p168
    %p171 = scmp.ne.s32.totalorder %s156, %s170
    %p172 = scmp.eq.s32.totalorder %s20, 0
    %p173 = por %p171, %p172
    %s175 = sadd.s32 %s174, 1
    %p178 = scmp.eq.s32.totalorder %s14, 1
    %p179 = scmp.ne.s32.totalorder %s174, %s176
    %p180 = scmp.eq.s32.totalorder %s14, 0
    %p181 = por %p179, %p180
    %p182 = scmp.ne.s32.totalorder %s174, %s176
    %p183 = scmp.eq.s32.totalorder %s19, 1
    %p184 = por %p182, %p183
    %p185 = scmp.ne.s32.totalorder %s176, %s177
    %p186 = scmp.eq.s32.totalorder %s19, 0
    %p187 = por %p185, %p186
    %p188 = scmp.ne.s32.totalorder %s176, %s177
    %p189 = scmp.eq.s32.totalorder %s20, 1
    %p190 = por %p188, %p189
    %p192 = scmp.ne.s32.totalorder %s177, %s191
    %p193 = scmp.eq.s32.totalorder %s20, 0
    %p194 = por %p192, %p193
    %s195 = ssub.s32 %s14, %s21
    %p196 = scmp.eq.s32.totalorder %s195, 0
    %s198 = sadd.s32 %s197, 1
    %s199 = scalar_select %p196, %s197, %s198
    %p202 = pneg %p196
    %p203 = scmp.eq.s32.totalorder %s14, 1
    %p204 = por %p202, %p203
    %p205 = scmp.ne.s32.totalorder %s197, %s200
    %p206 = scmp.eq.s32.totalorder %s14, 0
    %p207 = por %p205, %p206
    %p208 = scmp.ne.s32.totalorder %s197, %s200
    %p209 = scmp.eq.s32.totalorder %s19, 1
    %p210 = por %p208, %p209
    %p211 = scmp.ne.s32.totalorder %s200, %s201
    %p212 = scmp.eq.s32.totalorder %s19, 0
    %p213 = por %p211, %p212
    %p214 = scmp.ne.s32.totalorder %s200, %s201
    %p215 = scmp.eq.s32.totalorder %s20, 1
    %p216 = por %p214, %p215
    %p218 = scmp.ne.s32.totalorder %s201, %s217
    %p219 = scmp.eq.s32.totalorder %s20, 0
    %p220 = por %p218, %p219
    %p221 = scmp.le.s32.totalorder 1, %s14
    %p222 = scmp.lt.s32.totalorder %s14, 3
    %p223 = pnand %p221, %p222
    %p224 = pneg %p223
    // Predicated region
    $region9: #{bottleneck_forward.1} parent=5 // pred_check
      _
    $region10: #{bottleneck_forward.1} parent=5 // pred_check_branch
      %226 = sbr.rel (%p223) target = $region12
    $region11: #{bottleneck_forward.1} parent=5 // pred_region
      %s227 = ssub.s32 %s14, 1
      // Predicated region
      $region13: #{bottleneck_forward.1} parent=11 // pred_check
        %p228 = pneg %p61
      $region14: #{bottleneck_forward.1} parent=11 // pred_check_branch
        %230 = sbr.rel (%p228) target = $region16
      $region15: #{bottleneck_forward.1} parent=11 // pred_region
        _
      $region16: #{bottleneck_forward.1} parent=11 // pred_fallthru
        _
      // Predicated region
      $region17: #{bottleneck_forward.1} parent=11 // pred_check
        %p231 = pneg %p82
      $region18: #{bottleneck_forward.1} parent=11 // pred_check_branch
        %233 = sbr.rel (%p231) target = $region20
      $region19: #{bottleneck_forward.1} parent=11 // pred_region
        _
      $region20: #{bottleneck_forward.1} parent=11 // pred_fallthru
        _
      // Predicated region
      $region21: #{bottleneck_forward.1} parent=11 // pred_check
        %p234 = pneg %p103
      $region22: #{bottleneck_forward.1} parent=11 // pred_check_branch
        %236 = sbr.rel (%p234) target = $region24
      $region23: #{bottleneck_forward.1} parent=11 // pred_region
        _
      $region24: #{bottleneck_forward.1} parent=11 // pred_fallthru
        _
      // Predicated region
      $region25: #{bottleneck_forward.1} parent=11 // pred_check
        %p237 = pneg %p124
      $region26: #{bottleneck_forward.1} parent=11 // pred_check_branch
        %239 = sbr.rel (%p237) target = $region28
      $region27: #{bottleneck_forward.1} parent=11 // pred_region
        _
      $region28: #{bottleneck_forward.1} parent=11 // pred_fallthru
        _
      // Predicated region
      $region29: #{bottleneck_forward.1} parent=11 // pred_check
        %p240 = pneg %p145
      $region30: #{bottleneck_forward.1} parent=11 // pred_check_branch
        %242 = sbr.rel (%p240) target = $region32
      $region31: #{bottleneck_forward.1} parent=11 // pred_region
        _
      $region32: #{bottleneck_forward.1} parent=11 // pred_fallthru
        _
      // Predicated region
      $region33: #{bottleneck_forward.1} parent=11 // pred_check
        %p243 = pneg %p166
      $region34: #{bottleneck_forward.1} parent=11 // pred_check_branch
        %245 = sbr.rel (%p243) target = $region36
      $region35: #{bottleneck_forward.1} parent=11 // pred_region
        _
      $region36: #{bottleneck_forward.1} parent=11 // pred_fallthru
        _
      // Predicated region
      $region37: #{bottleneck_forward.1} parent=11 // pred_check
        %p246 = pneg %p187
      $region38: #{bottleneck_forward.1} parent=11 // pred_check_branch
        %248 = sbr.rel (%p246) target = $region40
      $region39: #{bottleneck_forward.1} parent=11 // pred_region
        _
      $region40: #{bottleneck_forward.1} parent=11 // pred_fallthru
        _
    $region12: #{bottleneck_forward.1} parent=5 // pred_fallthru
      _
    %p249 = scmp.lt.s32.totalorder %s14, 2
    // Predicated region
    $region41: #{bottleneck_forward.1} parent=5 // pred_check
      %p250 = pneg %p249
    $region42: #{bottleneck_forward.1} parent=5 // pred_check_branch
      %252 = sbr.rel (%p250) target = $region44
    $region43: #{bottleneck_forward.1} parent=5 // pred_region
      // Predicated region
      $region45: #{bottleneck_forward.1} parent=43 // pred_check
        %p253 = pneg %p34
      $region46: #{bottleneck_forward.1} parent=43 // pred_check_branch
        %255 = sbr.rel (%p253) target = $region48
      $region47: #{bottleneck_forward.1} parent=43 // pred_region
        %s256 = smul.u32 2, %s14
        %p257 = scmp.lt.s32.totalorder %s256, 3
        %s258 = scalar_select %p257, %s256, 3
        %s259 = smul.addr %s258, 16
        %s260 = smul.addr %s259, 4
        %s261 = scalar_lea.vmem %s0, %s260
        %s262 = smul.u32 2, %s14
      $region48: #{bottleneck_forward.1} parent=43 // pred_fallthru
        _
    $region44: #{bottleneck_forward.1} parent=5 // pred_fallthru
      _
    %p263 = scmp.le.s32.totalorder 1, %s14
    %p264 = scmp.lt.s32.totalorder %s14, 3
    %p265 = pnand %p263, %p264
    %p266 = pneg %p265
    // Predicated region
    $region49: #{bottleneck_forward.1} parent=5 // pred_check
      _
    $region50: #{bottleneck_forward.1} parent=5 // pred_check_branch
      %268 = sbr.rel (%p265) target = $region52
    $region51: #{bottleneck_forward.1} parent=5 // pred_region
      %s269 = ssub.s32 %s14, 1
      %s270 = smul.u32 2, %s19
      %p271 = scmp.lt.s32.totalorder %s270, 3
      %s272 = scalar_select %p271, %s270, 3
      %s273 = smul.addr %s272, 16
      %s274 = smul.addr %s273, 4
      %s275 = scalar_lea.vmem %s0, %s274
      %p276 = pneg %p40
      %p277 = pneg %p37
      %p278 = pneg %p61
      %p279 = pneg %p58
      %p280 = pneg %p82
      %p281 = pneg %p79
      %p282 = pneg %p103
      %p283 = pneg %p100
      %p284 = pneg %p124
      %p285 = pneg %p121
      %p286 = pneg %p145
      %p287 = pneg %p142
      %p288 = pneg %p166
      %p289 = pneg %p163
      %p290 = pneg %p187
      %p291 = pneg %p184
      %p292 = pneg %p213
      %p293 = pneg %p210
      %s294 = smul.u32 2, %s19
      %p295 = scmp.lt.s32.totalorder %s294, 3
      %s296 = scalar_select %p295, %s294, 3
      %s297 = smul.addr %s296, 8
      %s298 = smul.addr %s297, 8
      %s299 = scalar_lea.vmem %s8, %s298
      %s300 = smul.u32 2, %s19
      %p301 = scmp.lt.s32.totalorder %s300, 3
      %s302 = scalar_select %p301, %s300, 3
      %s303 = smul.addr %s302, 16
      %s304 = smul.addr %s303, 4
      %s305 = scalar_lea.vmem %s0, %s304
      %s306 = smul.u32 2, %s19
      %s307 = smul.u32 2, %s19
      %p308 = scmp.lt.s32.totalorder %s307, 3
      %s309 = scalar_select %p308, %s307, 3
      %s310 = smul.addr %s309, 8
      %s311 = smul.addr %s310, 8
      %s312 = scalar_lea.vmem %s8, %s311
      %s313 = smul.u32 2, %s19
      %v315 = vld [vmem:[%s305] sm:$0xff]
      %v316 = vld [vmem:[%s305 + $0x8] sm:$0xf]
      %v317 = vld [vmem:[%s305 + $0x10] sm:$0xff]
      %v318 = vld [vmem:[%s305 + $0x18] sm:$0xf]
      %v319 = vld [vmem:[%s305 + $0x20] sm:$0xff]
      %v320 = vld [vmem:[%s305 + $0x28] sm:$0xf]
      %v321 = vld [vmem:[%s305 + $0x30] sm:$0xff]
      %v322 = vld [vmem:[%s305 + $0x38] sm:$0xf]
      %323 = vst [vmem:[#allocation2] sm:$0xff] %v315
      %324 = vst [vmem:[#allocation2 + $0x8] sm:$0xf] %v316
      %325 = vst [vmem:[#allocation2 + $0x18] sm:$0xff] %v317
      %326 = vst [vmem:[#allocation2 + $0x20] sm:$0xf] %v318
      %327 = vst [vmem:[#allocation2 + $0x30] sm:$0xff] %v319
      %328 = vst [vmem:[#allocation2 + $0x38] sm:$0xf] %v320
      %329 = vst [vmem:[#allocation2 + $0x48] sm:$0xff] %v321
      %330 = vst [vmem:[#allocation2 + $0x50] sm:$0xf] %v322
      %s331 = scalar_lea.vmem %s305, 64
      %v332 = vld [vmem:[%s331] sm:$0xff]
      %v333 = vld [vmem:[%s331 + $0x8] sm:$0xf]
      %v334 = vld [vmem:[%s331 + $0x10] sm:$0xff]
      %v335 = vld [vmem:[%s331 + $0x18] sm:$0xf]
      %v336 = vld [vmem:[%s331 + $0x20] sm:$0xff]
      %v337 = vld [vmem:[%s331 + $0x28] sm:$0xf]
      %v338 = vld [vmem:[%s331 + $0x30] sm:$0xff]
      %v339 = vld [vmem:[%s331 + $0x38] sm:$0xf]
      %340 = vst [vmem:[#allocation2 + $0xc] sm:$0xff] %v332
      %341 = vst [vmem:[#allocation2 + $0x14] sm:$0xf] %v333
      %342 = vst [vmem:[#allocation2 + $0x24] sm:$0xff] %v334
      %343 = vst [vmem:[#allocation2 + $0x2c] sm:$0xf] %v335
      %344 = vst [vmem:[#allocation2 + $0x3c] sm:$0xff] %v336
      %345 = vst [vmem:[#allocation2 + $0x44] sm:$0xf] %v337
      %346 = vst [vmem:[#allocation2 + $0x54] sm:$0xff] %v338
      %347 = vst [vmem:[#allocation2 + $0x5c] sm:$0xf] %v339
      %v348 = vld [vmem:[%s305] sm:$0xff]
      %v349 = vld [vmem:[%s305 + $0x8] sm:$0xff]
      %v350 = vld [vmem:[%s305 + $0x10] sm:$0xff]
      %v351 = vld [vmem:[%s305 + $0x18] sm:$0xff]
      %v352 = vld [vmem:[%s305 + $0x20] sm:$0xff]
      %v353 = vld [vmem:[%s305 + $0x28] sm:$0xff]
      %v354 = vld [vmem:[%s305 + $0x30] sm:$0xff]
      %v355 = vld [vmem:[%s305 + $0x38] sm:$0xff]
      %364 = vrot.lane.b32.xlu0 %v348, 127
      %v365 = vpop.permute.xlu0 %364
      %366 = vrot.lane.b32.xlu0 %v349, 127
      %v367 = vpop.permute.xlu0 %366
      %368 = vrot.lane.b32.xlu0 %v350, 127
      %v369 = vpop.permute.xlu0 %368
      %370 = vrot.lane.b32.xlu0 %v351, 127
      %v371 = vpop.permute.xlu0 %370
      %372 = vrot.lane.b32.xlu0 %v352, 127
      %v373 = vpop.permute.xlu0 %372
      %374 = vrot.lane.b32.xlu0 %v353, 127
      %v375 = vpop.permute.xlu0 %374
      %376 = vrot.lane.b32.xlu0 %v354, 127
      %v377 = vpop.permute.xlu0 %376
      %378 = vrot.lane.b32.xlu0 %v355, 127
      %v379 = vpop.permute.xlu0 %378
      %v380 = vrot.slane %v365, 4
      %v381 = vrot.slane %v367, 4
      %v382 = vrot.slane %v369, 4
      %v383 = vrot.slane %v371, 4
      %v384 = vrot.slane %v373, 4
      %v385 = vrot.slane %v375, 4
      %v386 = vrot.slane %v377, 4
      %v387 = vrot.slane %v379, 4
      %vm388 = vcmask 1043456
      %v389 = vsel %vm388, %v380, %v381
      %vm390 = vcmask 1039360
      %v391 = vsel %vm390, %v365, %v389
      %v392 = vsel %vm390, %v367, %v381
      %v393 = vsel %vm388, %v382, %v383
      %v394 = vsel %vm390, %v369, %v393
      %v395 = vsel %vm390, %v371, %v383
      %v396 = vsel %vm388, %v384, %v385
      %v397 = vsel %vm390, %v373, %v396
      %v398 = vsel %vm390, %v375, %v385
      %v399 = vsel %vm388, %v386, %v387
      %v400 = vsel %vm390, %v377, %v399
      %v401 = vsel %vm390, %v379, %v387
      %410 = vst [vmem:[#allocation2 + $0x60] sm:$0xff] %v391
      %411 = vst [vmem:[#allocation2 + $0x68] sm:$0xf] %v392
      %412 = vst [vmem:[#allocation2 + $0x78] sm:$0xff] %v394
      %413 = vst [vmem:[#allocation2 + $0x80] sm:$0xf] %v395
      %414 = vst [vmem:[#allocation2 + $0x90] sm:$0xff] %v397
      %415 = vst [vmem:[#allocation2 + $0x98] sm:$0xf] %v398
      %416 = vst [vmem:[#allocation2 + $0xa8] sm:$0xff] %v400
      %417 = vst [vmem:[#allocation2 + $0xb0] sm:$0xf] %v401
      %v418 = vld [vmem:[%s331] sm:$0xff]
      %v419 = vld [vmem:[%s331 + $0x8] sm:$0xff]
      %v420 = vld [vmem:[%s331 + $0x10] sm:$0xff]
      %v421 = vld [vmem:[%s331 + $0x18] sm:$0xff]
      %v422 = vld [vmem:[%s331 + $0x20] sm:$0xff]
      %v423 = vld [vmem:[%s331 + $0x28] sm:$0xff]
      %v424 = vld [vmem:[%s331 + $0x30] sm:$0xff]
      %v425 = vld [vmem:[%s331 + $0x38] sm:$0xff]
      %434 = vrot.lane.b32.xlu0 %v418, 127
      %v435 = vpop.permute.xlu0 %434
      %436 = vrot.lane.b32.xlu0 %v419, 127
      %v437 = vpop.permute.xlu0 %436
      %438 = vrot.lane.b32.xlu0 %v420, 127
      %v439 = vpop.permute.xlu0 %438
      %440 = vrot.lane.b32.xlu0 %v421, 127
      %v441 = vpop.permute.xlu0 %440
      %442 = vrot.lane.b32.xlu0 %v422, 127
      %v443 = vpop.permute.xlu0 %442
      %444 = vrot.lane.b32.xlu0 %v423, 127
      %v445 = vpop.permute.xlu0 %444
      %446 = vrot.lane.b32.xlu0 %v424, 127
      %v447 = vpop.permute.xlu0 %446
      %448 = vrot.lane.b32.xlu0 %v425, 127
      %v449 = vpop.permute.xlu0 %448
      %v450 = vrot.slane %v435, 4
      %v451 = vrot.slane %v437, 4
      %v452 = vrot.slane %v439, 4
      %v453 = vrot.slane %v441, 4
      %v454 = vrot.slane %v443, 4
      %v455 = vrot.slane %v445, 4
      %v456 = vrot.slane %v447, 4
      %v457 = vrot.slane %v449, 4
      %v458 = vsel %vm388, %v450, %v451
      %v459 = vsel %vm390, %v435, %v458
      %v460 = vsel %vm390, %v437, %v451
      %v461 = vsel %vm388, %v452, %v453
      %v462 = vsel %vm390, %v439, %v461
      %v463 = vsel %vm390, %v441, %v453
      %v464 = vsel %vm388, %v454, %v455
      %v465 = vsel %vm390, %v443, %v464
      %v466 = vsel %vm390, %v445, %v455
      %v467 = vsel %vm388, %v456, %v457
      %v468 = vsel %vm390, %v447, %v467
      %v469 = vsel %vm390, %v449, %v457
      %478 = vst [vmem:[#allocation2 + $0x6c] sm:$0xff] %v459
      %479 = vst [vmem:[#allocation2 + $0x74] sm:$0xf] %v460
      %480 = vst [vmem:[#allocation2 + $0x84] sm:$0xff] %v462
      %481 = vst [vmem:[#allocation2 + $0x8c] sm:$0xf] %v463
      %482 = vst [vmem:[#allocation2 + $0x9c] sm:$0xff] %v465
      %483 = vst [vmem:[#allocation2 + $0xa4] sm:$0xf] %v466
      %484 = vst [vmem:[#allocation2 + $0xb4] sm:$0xff] %v468
      %485 = vst [vmem:[#allocation2 + $0xbc] sm:$0xf] %v469
      %v486 = vld [vmem:[%s305] sm:$0xff]
      %v487 = vld [vmem:[%s305 + $0x8] sm:$0xff]
      %v488 = vld [vmem:[%s305 + $0x10] sm:$0xff]
      %v489 = vld [vmem:[%s305 + $0x18] sm:$0xff]
      %v490 = vld [vmem:[%s305 + $0x20] sm:$0xff]
      %v491 = vld [vmem:[%s305 + $0x28] sm:$0xff]
      %v492 = vld [vmem:[%s305 + $0x30] sm:$0xff]
      %v493 = vld [vmem:[%s305 + $0x38] sm:$0xff]
      %502 = vrot.lane.b32.xlu0 %v486, 126
      %v503 = vpop.permute.xlu0 %502
      %504 = vrot.lane.b32.xlu0 %v487, 126
      %v505 = vpop.permute.xlu0 %504
      %506 = vrot.lane.b32.xlu0 %v488, 126
      %v507 = vpop.permute.xlu0 %506
      %508 = vrot.lane.b32.xlu0 %v489, 126
      %v509 = vpop.permute.xlu0 %508
      %510 = vrot.lane.b32.xlu0 %v490, 126
      %v511 = vpop.permute.xlu0 %510
      %512 = vrot.lane.b32.xlu0 %v491, 126
      %v513 = vpop.permute.xlu0 %512
      %514 = vrot.lane.b32.xlu0 %v492, 126
      %v515 = vpop.permute.xlu0 %514
      %516 = vrot.lane.b32.xlu0 %v493, 126
      %v517 = vpop.permute.xlu0 %516
      %v518 = vrot.slane %v503, 4
      %v519 = vrot.slane %v505, 4
      %v520 = vrot.slane %v507, 4
      %v521 = vrot.slane %v509, 4
      %v522 = vrot.slane %v511, 4
      %v523 = vrot.slane %v513, 4
      %v524 = vrot.slane %v515, 4
      %v525 = vrot.slane %v517, 4
      %v526 = vsel %vm388, %v518, %v519
      %vm527 = vcmask 1031168
      %v528 = vsel %vm527, %v503, %v526
      %v529 = vsel %vm527, %v505, %v519
      %v530 = vsel %vm388, %v520, %v521
      %v531 = vsel %vm527, %v507, %v530
      %v532 = vsel %vm527, %v509, %v521
      %v533 = vsel %vm388, %v522, %v523
      %v534 = vsel %vm527, %v511, %v533
      %v535 = vsel %vm527, %v513, %v523
      %v536 = vsel %vm388, %v524, %v525
      %v537 = vsel %vm527, %v515, %v536
      %v538 = vsel %vm527, %v517, %v525
      %547 = vst [vmem:[#allocation2 + $0xc0] sm:$0xff] %v528
      %548 = vst [vmem:[#allocation2 + $0xc8] sm:$0xf] %v529
      %549 = vst [vmem:[#allocation2 + $0xd8] sm:$0xff] %v531
      %550 = vst [vmem:[#allocation2 + $0xe0] sm:$0xf] %v532
      %551 = vst [vmem:[#allocation2 + $0xf0] sm:$0xff] %v534
      %552 = vst [vmem:[#allocation2 + $0xf8] sm:$0xf] %v535
      %553 = vst [vmem:[#allocation2 + $0x108] sm:$0xff] %v537
      %554 = vst [vmem:[#allocation2 + $0x110] sm:$0xf] %v538
      %v555 = vld [vmem:[%s331] sm:$0xff]
      %v556 = vld [vmem:[%s331 + $0x8] sm:$0xff]
      %v557 = vld [vmem:[%s331 + $0x10] sm:$0xff]
      %v558 = vld [vmem:[%s331 + $0x18] sm:$0xff]
      %v559 = vld [vmem:[%s331 + $0x20] sm:$0xff]
      %v560 = vld [vmem:[%s331 + $0x28] sm:$0xff]
      %v561 = vld [vmem:[%s331 + $0x30] sm:$0xff]
      %v562 = vld [vmem:[%s331 + $0x38] sm:$0xff]
      %571 = vrot.lane.b32.xlu0 %v555, 126
      %v572 = vpop.permute.xlu0 %571
      %573 = vrot.lane.b32.xlu0 %v556, 126
      %v574 = vpop.permute.xlu0 %573
      %575 = vrot.lane.b32.xlu0 %v557, 126
      %v576 = vpop.permute.xlu0 %575
      %577 = vrot.lane.b32.xlu0 %v558, 126
      %v578 = vpop.permute.xlu0 %577
      %579 = vrot.lane.b32.xlu0 %v559, 126
      %v580 = vpop.permute.xlu0 %579
      %581 = vrot.lane.b32.xlu0 %v560, 126
      %v582 = vpop.permute.xlu0 %581
      %583 = vrot.lane.b32.xlu0 %v561, 126
      %v584 = vpop.permute.xlu0 %583
      %585 = vrot.lane.b32.xlu0 %v562, 126
      %v586 = vpop.permute.xlu0 %585
      %v587 = vrot.slane %v572, 4
      %v588 = vrot.slane %v574, 4
      %v589 = vrot.slane %v576, 4
      %v590 = vrot.slane %v578, 4
      %v591 = vrot.slane %v580, 4
      %v592 = vrot.slane %v582, 4
      %v593 = vrot.slane %v584, 4
      %v594 = vrot.slane %v586, 4
      %v595 = vsel %vm388, %v587, %v588
      %v596 = vsel %vm527, %v572, %v595
      %v597 = vsel %vm527, %v574, %v588
      %v598 = vsel %vm388, %v589, %v590
      %v599 = vsel %vm527, %v576, %v598
      %v600 = vsel %vm527, %v578, %v590
      %v601 = vsel %vm388, %v591, %v592
      %v602 = vsel %vm527, %v580, %v601
      %v603 = vsel %vm527, %v582, %v592
      %v604 = vsel %vm388, %v593, %v594
      %v605 = vsel %vm527, %v584, %v604
      %v606 = vsel %vm527, %v586, %v594
      %615 = vst [vmem:[#allocation2 + $0xcc] sm:$0xff] %v596
      %616 = vst [vmem:[#allocation2 + $0xd4] sm:$0xf] %v597
      %617 = vst [vmem:[#allocation2 + $0xe4] sm:$0xff] %v599
      %618 = vst [vmem:[#allocation2 + $0xec] sm:$0xf] %v600
      %619 = vst [vmem:[#allocation2 + $0xfc] sm:$0xff] %v602
      %620 = vst [vmem:[#allocation2 + $0x104] sm:$0xf] %v603
      %621 = vst [vmem:[#allocation2 + $0x114] sm:$0xff] %v605
      %622 = vst [vmem:[#allocation2 + $0x11c] sm:$0xf] %v606
      %v623 = vld [vmem:[%s305] sm:$0xff]
      %v624 = vld [vmem:[%s305 + $0x8] sm:$0xff]
      %v625 = vld [vmem:[%s305 + $0x10] sm:$0xff]
      %v626 = vld [vmem:[%s305 + $0x18] sm:$0xff]
      %v627 = vld [vmem:[%s305 + $0x20] sm:$0xff]
      %v628 = vld [vmem:[%s305 + $0x28] sm:$0xff]
      %v629 = vld [vmem:[%s305 + $0x30] sm:$0xff]
      %v630 = vld [vmem:[%s305 + $0x38] sm:$0xff]
      %639 = vrot.lane.b32.xlu0 %v623, 112
      %v640 = vpop.permute.xlu0 %639
      %641 = vrot.lane.b32.xlu0 %v624, 112
      %v642 = vpop.permute.xlu0 %641
      %643 = vrot.lane.b32.xlu0 %v625, 112
      %v644 = vpop.permute.xlu0 %643
      %645 = vrot.lane.b32.xlu0 %v626, 112
      %v646 = vpop.permute.xlu0 %645
      %647 = vrot.lane.b32.xlu0 %v627, 112
      %v648 = vpop.permute.xlu0 %647
      %649 = vrot.lane.b32.xlu0 %v628, 112
      %v650 = vpop.permute.xlu0 %649
      %651 = vrot.lane.b32.xlu0 %v629, 112
      %v652 = vpop.permute.xlu0 %651
      %653 = vrot.lane.b32.xlu0 %v630, 112
      %v654 = vpop.permute.xlu0 %653
      %v655 = vrot.slane %v640, 4
      %v656 = vrot.slane %v642, 4
      %v657 = vrot.slane %v644, 4
      %v658 = vrot.slane %v646, 4
      %v659 = vrot.slane %v648, 4
      %v660 = vrot.slane %v650, 4
      %v661 = vrot.slane %v652, 4
      %v662 = vrot.slane %v654, 4
      %v663 = vsel %vm388, %v655, %v656
      %vm664 = vcmask 916480
      %v665 = vsel %vm664, %v640, %v663
      %v666 = vsel %vm664, %v642, %v656
      %v667 = vsel %vm388, %v657, %v658
      %v668 = vsel %vm664, %v644, %v667
      %v669 = vsel %vm664, %v646, %v658
      %v670 = vsel %vm388, %v659, %v660
      %v671 = vsel %vm664, %v648, %v670
      %v672 = vsel %vm664, %v650, %v660
      %v673 = vsel %vm388, %v661, %v662
      %v674 = vsel %vm664, %v652, %v673
      %v675 = vsel %vm664, %v654, %v662
      %684 = vst [vmem:[#allocation2 + $0x120] sm:$0xff] %v665
      %685 = vst [vmem:[#allocation2 + $0x128] sm:$0xf] %v666
      %686 = vst [vmem:[#allocation2 + $0x138] sm:$0xff] %v668
      %687 = vst [vmem:[#allocation2 + $0x140] sm:$0xf] %v669
      %688 = vst [vmem:[#allocation2 + $0x150] sm:$0xff] %v671
      %689 = vst [vmem:[#allocation2 + $0x158] sm:$0xf] %v672
      %690 = vst [vmem:[#allocation2 + $0x168] sm:$0xff] %v674
      %691 = vst [vmem:[#allocation2 + $0x170] sm:$0xf] %v675
      %v692 = vld [vmem:[%s331] sm:$0xff]
      %v693 = vld [vmem:[%s331 + $0x8] sm:$0xff]
      %v694 = vld [vmem:[%s331 + $0x10] sm:$0xff]
      %v695 = vld [vmem:[%s331 + $0x18] sm:$0xff]
      %v696 = vld [vmem:[%s331 + $0x20] sm:$0xff]
      %v697 = vld [vmem:[%s331 + $0x28] sm:$0xff]
      %v698 = vld [vmem:[%s331 + $0x30] sm:$0xff]
      %v699 = vld [vmem:[%s331 + $0x38] sm:$0xff]
      %708 = vrot.lane.b32.xlu0 %v692, 112
      %v709 = vpop.permute.xlu0 %708
      %710 = vrot.lane.b32.xlu0 %v693, 112
      %v711 = vpop.permute.xlu0 %710
      %712 = vrot.lane.b32.xlu0 %v694, 112
      %v713 = vpop.permute.xlu0 %712
      %714 = vrot.lane.b32.xlu0 %v695, 112
      %v715 = vpop.permute.xlu0 %714
      %716 = vrot.lane.b32.xlu0 %v696, 112
      %v717 = vpop.permute.xlu0 %716
      %718 = vrot.lane.b32.xlu0 %v697, 112
      %v719 = vpop.permute.xlu0 %718
      %720 = vrot.lane.b32.xlu0 %v698, 112
      %v721 = vpop.permute.xlu0 %720
      %722 = vrot.lane.b32.xlu0 %v699, 112
      %v723 = vpop.permute.xlu0 %722
      %v724 = vrot.slane %v709, 4
      %v725 = vrot.slane %v711, 4
      %v726 = vrot.slane %v713, 4
      %v727 = vrot.slane %v715, 4
      %v728 = vrot.slane %v717, 4
      %v729 = vrot.slane %v719, 4
      %v730 = vrot.slane %v721, 4
      %v731 = vrot.slane %v723, 4
      %v732 = vsel %vm388, %v724, %v725
      %v733 = vsel %vm664, %v709, %v732
      %v734 = vsel %vm664, %v711, %v725
      %v735 = vsel %vm388, %v726, %v727
      %v736 = vsel %vm664, %v713, %v735
      %v737 = vsel %vm664, %v715, %v727
      %v738 = vsel %vm388, %v728, %v729
      %v739 = vsel %vm664, %v717, %v738
      %v740 = vsel %vm664, %v719, %v729
      %v741 = vsel %vm388, %v730, %v731
      %v742 = vsel %vm664, %v721, %v741
      %v743 = vsel %vm664, %v723, %v731
      %752 = vst [vmem:[#allocation2 + $0x12c] sm:$0xff] %v733
      %753 = vst [vmem:[#allocation2 + $0x134] sm:$0xf] %v734
      %754 = vst [vmem:[#allocation2 + $0x144] sm:$0xff] %v736
      %755 = vst [vmem:[#allocation2 + $0x14c] sm:$0xf] %v737
      %756 = vst [vmem:[#allocation2 + $0x15c] sm:$0xff] %v739
      %757 = vst [vmem:[#allocation2 + $0x164] sm:$0xf] %v740
      %758 = vst [vmem:[#allocation2 + $0x174] sm:$0xff] %v742
      %759 = vst [vmem:[#allocation2 + $0x17c] sm:$0xf] %v743
      %v760 = vld [vmem:[%s305] sm:$0xff]
      %v761 = vld [vmem:[%s305 + $0x8] sm:$0xff]
      %v762 = vld [vmem:[%s305 + $0x10] sm:$0xff]
      %v763 = vld [vmem:[%s305 + $0x18] sm:$0xff]
      %v764 = vld [vmem:[%s305 + $0x20] sm:$0xff]
      %v765 = vld [vmem:[%s305 + $0x28] sm:$0xff]
      %v766 = vld [vmem:[%s305 + $0x30] sm:$0xff]
      %v767 = vld [vmem:[%s305 + $0x38] sm:$0xff]
      %776 = vrot.lane.b32.xlu0 %v760, 111
      %v777 = vpop.permute.xlu0 %776
      %778 = vrot.lane.b32.xlu0 %v761, 111
      %v779 = vpop.permute.xlu0 %778
      %780 = vrot.lane.b32.xlu0 %v762, 111
      %v781 = vpop.permute.xlu0 %780
      %782 = vrot.lane.b32.xlu0 %v763, 111
      %v783 = vpop.permute.xlu0 %782
      %784 = vrot.lane.b32.xlu0 %v764, 111
      %v785 = vpop.permute.xlu0 %784
      %786 = vrot.lane.b32.xlu0 %v765, 111
      %v787 = vpop.permute.xlu0 %786
      %788 = vrot.lane.b32.xlu0 %v766, 111
      %v789 = vpop.permute.xlu0 %788
      %790 = vrot.lane.b32.xlu0 %v767, 111
      %v791 = vpop.permute.xlu0 %790
      %v792 = vrot.slane %v777, 4
      %v793 = vrot.slane %v779, 4
      %v794 = vrot.slane %v781, 4
      %v795 = vrot.slane %v783, 4
      %v796 = vrot.slane %v785, 4
      %v797 = vrot.slane %v787, 4
      %v798 = vrot.slane %v789, 4
      %v799 = vrot.slane %v791, 4
      %v800 = vsel %vm388, %v792, %v793
      %vm801 = vcmask 908288
      %v802 = vsel %vm801, %v777, %v800
      %v803 = vsel %vm801, %v779, %v793
      %v804 = vsel %vm388, %v794, %v795
      %v805 = vsel %vm801, %v781, %v804
      %v806 = vsel %vm801, %v783, %v795
      %v807 = vsel %vm388, %v796, %v797
      %v808 = vsel %vm801, %v785, %v807
      %v809 = vsel %vm801, %v787, %v797
      %v810 = vsel %vm388, %v798, %v799
      %v811 = vsel %vm801, %v789, %v810
      %v812 = vsel %vm801, %v791, %v799
      %821 = vst [vmem:[#allocation2 + $0x180] sm:$0xff] %v802
      %822 = vst [vmem:[#allocation2 + $0x188] sm:$0xf] %v803
      %823 = vst [vmem:[#allocation2 + $0x198] sm:$0xff] %v805
      %824 = vst [vmem:[#allocation2 + $0x1a0] sm:$0xf] %v806
      %825 = vst [vmem:[#allocation2 + $0x1b0] sm:$0xff] %v808
      %826 = vst [vmem:[#allocation2 + $0x1b8] sm:$0xf] %v809
      %827 = vst [vmem:[#allocation2 + $0x1c8] sm:$0xff] %v811
      %828 = vst [vmem:[#allocation2 + $0x1d0] sm:$0xf] %v812
      %v829 = vld [vmem:[%s331] sm:$0xff]
      %v830 = vld [vmem:[%s331 + $0x8] sm:$0xff]
      %v831 = vld [vmem:[%s331 + $0x10] sm:$0xff]
      %v832 = vld [vmem:[%s331 + $0x18] sm:$0xff]
      %v833 = vld [vmem:[%s331 + $0x20] sm:$0xff]
      %v834 = vld [vmem:[%s331 + $0x28] sm:$0xff]
      %v835 = vld [vmem:[%s331 + $0x30] sm:$0xff]
      %v836 = vld [vmem:[%s331 + $0x38] sm:$0xff]
      %845 = vrot.lane.b32.xlu0 %v829, 111
      %v846 = vpop.permute.xlu0 %845
      %847 = vrot.lane.b32.xlu0 %v830, 111
      %v848 = vpop.permute.xlu0 %847
      %849 = vrot.lane.b32.xlu0 %v831, 111
      %v850 = vpop.permute.xlu0 %849
      %851 = vrot.lane.b32.xlu0 %v832, 111
      %v852 = vpop.permute.xlu0 %851
      %853 = vrot.lane.b32.xlu0 %v833, 111
      %v854 = vpop.permute.xlu0 %853
      %855 = vrot.lane.b32.xlu0 %v834, 111
      %v856 = vpop.permute.xlu0 %855
      %857 = vrot.lane.b32.xlu0 %v835, 111
      %v858 = vpop.permute.xlu0 %857
      %859 = vrot.lane.b32.xlu0 %v836, 111
      %v860 = vpop.permute.xlu0 %859
      %v861 = vrot.slane %v846, 4
      %v862 = vrot.slane %v848, 4
      %v863 = vrot.slane %v850, 4
      %v864 = vrot.slane %v852, 4
      %v865 = vrot.slane %v854, 4
      %v866 = vrot.slane %v856, 4
      %v867 = vrot.slane %v858, 4
      %v868 = vrot.slane %v860, 4
      %v869 = vsel %vm388, %v861, %v862
      %v870 = vsel %vm801, %v846, %v869
      %v871 = vsel %vm801, %v848, %v862
      %v872 = vsel %vm388, %v863, %v864
      %v873 = vsel %vm801, %v850, %v872
      %v874 = vsel %vm801, %v852, %v864
      %v875 = vsel %vm388, %v865, %v866
      %v876 = vsel %vm801, %v854, %v875
      %v877 = vsel %vm801, %v856, %v866
      %v878 = vsel %vm388, %v867, %v868
      %v879 = vsel %vm801, %v858, %v878
      %v880 = vsel %vm801, %v860, %v868
      %889 = vst [vmem:[#allocation2 + $0x18c] sm:$0xff] %v870
      %890 = vst [vmem:[#allocation2 + $0x194] sm:$0xf] %v871
      %891 = vst [vmem:[#allocation2 + $0x1a4] sm:$0xff] %v873
      %892 = vst [vmem:[#allocation2 + $0x1ac] sm:$0xf] %v874
      %893 = vst [vmem:[#allocation2 + $0x1bc] sm:$0xff] %v876
      %894 = vst [vmem:[#allocation2 + $0x1c4] sm:$0xf] %v877
      %895 = vst [vmem:[#allocation2 + $0x1d4] sm:$0xff] %v879
      %896 = vst [vmem:[#allocation2 + $0x1dc] sm:$0xf] %v880
      %v897 = vld [vmem:[%s305] sm:$0xff]
      %v898 = vld [vmem:[%s305 + $0x8] sm:$0xff]
      %v899 = vld [vmem:[%s305 + $0x10] sm:$0xff]
      %v900 = vld [vmem:[%s305 + $0x18] sm:$0xff]
      %v901 = vld [vmem:[%s305 + $0x20] sm:$0xff]
      %v902 = vld [vmem:[%s305 + $0x28] sm:$0xff]
      %v903 = vld [vmem:[%s305 + $0x30] sm:$0xff]
      %v904 = vld [vmem:[%s305 + $0x38] sm:$0xff]
      %913 = vrot.lane.b32.xlu0 %v897, 110
      %v914 = vpop.permute.xlu0 %913
      %915 = vrot.lane.b32.xlu0 %v898, 110
      %v916 = vpop.permute.xlu0 %915
      %917 = vrot.lane.b32.xlu0 %v899, 110
      %v918 = vpop.permute.xlu0 %917
      %919 = vrot.lane.b32.xlu0 %v900, 110
      %v920 = vpop.permute.xlu0 %919
      %921 = vrot.lane.b32.xlu0 %v901, 110
      %v922 = vpop.permute.xlu0 %921
      %923 = vrot.lane.b32.xlu0 %v902, 110
      %v924 = vpop.permute.xlu0 %923
      %925 = vrot.lane.b32.xlu0 %v903, 110
      %v926 = vpop.permute.xlu0 %925
      %927 = vrot.lane.b32.xlu0 %v904, 110
      %v928 = vpop.permute.xlu0 %927
      %v929 = vrot.slane %v914, 4
      %v930 = vrot.slane %v916, 4
      %v931 = vrot.slane %v918, 4
      %v932 = vrot.slane %v920, 4
      %v933 = vrot.slane %v922, 4
      %v934 = vrot.slane %v924, 4
      %v935 = vrot.slane %v926, 4
      %v936 = vrot.slane %v928, 4
      %v937 = vsel %vm388, %v929, %v930
      %vm938 = vcmask 900096
      %v939 = vsel %vm938, %v914, %v937
      %v940 = vsel %vm938, %v916, %v930
      %v941 = vsel %vm388, %v931, %v932
      %v942 = vsel %vm938, %v918, %v941
      %v943 = vsel %vm938, %v920, %v932
      %v944 = vsel %vm388, %v933, %v934
      %v945 = vsel %vm938, %v922, %v944
      %v946 = vsel %vm938, %v924, %v934
      %v947 = vsel %vm388, %v935, %v936
      %v948 = vsel %vm938, %v926, %v947
      %v949 = vsel %vm938, %v928, %v936
      %958 = vst [vmem:[#allocation2 + $0x1e0] sm:$0xff] %v939
      %959 = vst [vmem:[#allocation2 + $0x1e8] sm:$0xf] %v940
      %960 = vst [vmem:[#allocation2 + $0x1f8] sm:$0xff] %v942
      %961 = vst [vmem:[#allocation2 + $0x200] sm:$0xf] %v943
      %962 = vst [vmem:[#allocation2 + $0x210] sm:$0xff] %v945
      %963 = vst [vmem:[#allocation2 + $0x218] sm:$0xf] %v946
      %964 = vst [vmem:[#allocation2 + $0x228] sm:$0xff] %v948
      %965 = vst [vmem:[#allocation2 + $0x230] sm:$0xf] %v949
      %v966 = vld [vmem:[%s331] sm:$0xff]
      %v967 = vld [vmem:[%s331 + $0x8] sm:$0xff]
      %v968 = vld [vmem:[%s331 + $0x10] sm:$0xff]
      %v969 = vld [vmem:[%s331 + $0x18] sm:$0xff]
      %v970 = vld [vmem:[%s331 + $0x20] sm:$0xff]
      %v971 = vld [vmem:[%s331 + $0x28] sm:$0xff]
      %v972 = vld [vmem:[%s331 + $0x30] sm:$0xff]
      %v973 = vld [vmem:[%s331 + $0x38] sm:$0xff]
      %982 = vrot.lane.b32.xlu0 %v966, 110
      %v983 = vpop.permute.xlu0 %982
      %984 = vrot.lane.b32.xlu0 %v967, 110
      %v985 = vpop.permute.xlu0 %984
      %986 = vrot.lane.b32.xlu0 %v968, 110
      %v987 = vpop.permute.xlu0 %986
      %988 = vrot.lane.b32.xlu0 %v969, 110
      %v989 = vpop.permute.xlu0 %988
      %990 = vrot.lane.b32.xlu0 %v970, 110
      %v991 = vpop.permute.xlu0 %990
      %992 = vrot.lane.b32.xlu0 %v971, 110
      %v993 = vpop.permute.xlu0 %992
      %994 = vrot.lane.b32.xlu0 %v972, 110
      %v995 = vpop.permute.xlu0 %994
      %996 = vrot.lane.b32.xlu0 %v973, 110
      %v997 = vpop.permute.xlu0 %996
      %v998 = vrot.slane %v983, 4
      %v999 = vrot.slane %v985, 4
      %v1000 = vrot.slane %v987, 4
      %v1001 = vrot.slane %v989, 4
      %v1002 = vrot.slane %v991, 4
      %v1003 = vrot.slane %v993, 4
      %v1004 = vrot.slane %v995, 4
      %v1005 = vrot.slane %v997, 4
      %v1006 = vsel %vm388, %v998, %v999
      %v1007 = vsel %vm938, %v983, %v1006
      %v1008 = vsel %vm938, %v985, %v999
      %v1009 = vsel %vm388, %v1000, %v1001
      %v1010 = vsel %vm938, %v987, %v1009
      %v1011 = vsel %vm938, %v989, %v1001
      %v1012 = vsel %vm388, %v1002, %v1003
      %v1013 = vsel %vm938, %v991, %v1012
      %v1014 = vsel %vm938, %v993, %v1003
      %v1015 = vsel %vm388, %v1004, %v1005
      %v1016 = vsel %vm938, %v995, %v1015
      %v1017 = vsel %vm938, %v997, %v1005
      %1026 = vst [vmem:[#allocation2 + $0x1ec] sm:$0xff] %v1007
      %1027 = vst [vmem:[#allocation2 + $0x1f4] sm:$0xf] %v1008
      %1028 = vst [vmem:[#allocation2 + $0x204] sm:$0xff] %v1010
      %1029 = vst [vmem:[#allocation2 + $0x20c] sm:$0xf] %v1011
      %1030 = vst [vmem:[#allocation2 + $0x21c] sm:$0xff] %v1013
      %1031 = vst [vmem:[#allocation2 + $0x224] sm:$0xf] %v1014
      %1032 = vst [vmem:[#allocation2 + $0x234] sm:$0xff] %v1016
      %1033 = vst [vmem:[#allocation2 + $0x23c] sm:$0xf] %v1017
      %v1034 = vld [vmem:[%s305] sm:$0xff]
      %v1035 = vld [vmem:[%s305 + $0x8] sm:$0xff]
      %v1036 = vld [vmem:[%s305 + $0x10] sm:$0xff]
      %v1037 = vld [vmem:[%s305 + $0x18] sm:$0xff]
      %v1038 = vld [vmem:[%s305 + $0x20] sm:$0xff]
      %v1039 = vld [vmem:[%s305 + $0x28] sm:$0xff]
      %v1040 = vld [vmem:[%s305 + $0x30] sm:$0xff]
      %v1041 = vld [vmem:[%s305 + $0x38] sm:$0xff]
      %1050 = vrot.lane.b32.xlu0 %v1034, 96
      %v1051 = vpop.permute.xlu0 %1050
      %1052 = vrot.lane.b32.xlu0 %v1035, 96
      %v1053 = vpop.permute.xlu0 %1052
      %1054 = vrot.lane.b32.xlu0 %v1036, 96
      %v1055 = vpop.permute.xlu0 %1054
      %1056 = vrot.lane.b32.xlu0 %v1037, 96
      %v1057 = vpop.permute.xlu0 %1056
      %1058 = vrot.lane.b32.xlu0 %v1038, 96
      %v1059 = vpop.permute.xlu0 %1058
      %1060 = vrot.lane.b32.xlu0 %v1039, 96
      %v1061 = vpop.permute.xlu0 %1060
      %1062 = vrot.lane.b32.xlu0 %v1040, 96
      %v1063 = vpop.permute.xlu0 %1062
      %1064 = vrot.lane.b32.xlu0 %v1041, 96
      %v1065 = vpop.permute.xlu0 %1064
      %v1066 = vrot.slane %v1051, 4
      %v1067 = vrot.slane %v1053, 4
      %v1068 = vrot.slane %v1055, 4
      %v1069 = vrot.slane %v1057, 4
      %v1070 = vrot.slane %v1059, 4
      %v1071 = vrot.slane %v1061, 4
      %v1072 = vrot.slane %v1063, 4
      %v1073 = vrot.slane %v1065, 4
      %v1074 = vsel %vm388, %v1066, %v1067
      %vm1075 = vcmask 785408
      %v1076 = vsel %vm1075, %v1051, %v1074
      %v1077 = vsel %vm1075, %v1053, %v1067
      %v1078 = vsel %vm388, %v1068, %v1069
      %v1079 = vsel %vm1075, %v1055, %v1078
      %v1080 = vsel %vm1075, %v1057, %v1069
      %v1081 = vsel %vm388, %v1070, %v1071
      %v1082 = vsel %vm1075, %v1059, %v1081
      %v1083 = vsel %vm1075, %v1061, %v1071
      %v1084 = vsel %vm388, %v1072, %v1073
      %v1085 = vsel %vm1075, %v1063, %v1084
      %v1086 = vsel %vm1075, %v1065, %v1073
      %1095 = vst [vmem:[#allocation2 + $0x240] sm:$0xff] %v1076
      %1096 = vst [vmem:[#allocation2 + $0x248] sm:$0xf] %v1077
      %1097 = vst [vmem:[#allocation2 + $0x258] sm:$0xff] %v1079
      %1098 = vst [vmem:[#allocation2 + $0x260] sm:$0xf] %v1080
      %1099 = vst [vmem:[#allocation2 + $0x270] sm:$0xff] %v1082
      %1100 = vst [vmem:[#allocation2 + $0x278] sm:$0xf] %v1083
      %1101 = vst [vmem:[#allocation2 + $0x288] sm:$0xff] %v1085
      %1102 = vst [vmem:[#allocation2 + $0x290] sm:$0xf] %v1086
      %v1103 = vld [vmem:[%s331] sm:$0xff]
      %v1104 = vld [vmem:[%s331 + $0x8] sm:$0xff]
      %v1105 = vld [vmem:[%s331 + $0x10] sm:$0xff]
      %v1106 = vld [vmem:[%s331 + $0x18] sm:$0xff]
      %v1107 = vld [vmem:[%s331 + $0x20] sm:$0xff]
      %v1108 = vld [vmem:[%s331 + $0x28] sm:$0xff]
      %v1109 = vld [vmem:[%s331 + $0x30] sm:$0xff]
      %v1110 = vld [vmem:[%s331 + $0x38] sm:$0xff]
      %1119 = vrot.lane.b32.xlu0 %v1103, 96
      %v1120 = vpop.permute.xlu0 %1119
      %1121 = vrot.lane.b32.xlu0 %v1104, 96
      %v1122 = vpop.permute.xlu0 %1121
      %1123 = vrot.lane.b32.xlu0 %v1105, 96
      %v1124 = vpop.permute.xlu0 %1123
      %1125 = vrot.lane.b32.xlu0 %v1106, 96
      %v1126 = vpop.permute.xlu0 %1125
      %1127 = vrot.lane.b32.xlu0 %v1107, 96
      %v1128 = vpop.permute.xlu0 %1127
      %1129 = vrot.lane.b32.xlu0 %v1108, 96
      %v1130 = vpop.permute.xlu0 %1129
      %1131 = vrot.lane.b32.xlu0 %v1109, 96
      %v1132 = vpop.permute.xlu0 %1131
      %1133 = vrot.lane.b32.xlu0 %v1110, 96
      %v1134 = vpop.permute.xlu0 %1133
      %v1135 = vrot.slane %v1120, 4
      %v1136 = vrot.slane %v1122, 4
      %v1137 = vrot.slane %v1124, 4
      %v1138 = vrot.slane %v1126, 4
      %v1139 = vrot.slane %v1128, 4
      %v1140 = vrot.slane %v1130, 4
      %v1141 = vrot.slane %v1132, 4
      %v1142 = vrot.slane %v1134, 4
      %v1143 = vsel %vm388, %v1135, %v1136
      %v1144 = vsel %vm1075, %v1120, %v1143
      %v1145 = vsel %vm1075, %v1122, %v1136
      %v1146 = vsel %vm388, %v1137, %v1138
      %v1147 = vsel %vm1075, %v1124, %v1146
      %v1148 = vsel %vm1075, %v1126, %v1138
      %v1149 = vsel %vm388, %v1139, %v1140
      %v1150 = vsel %vm1075, %v1128, %v1149
      %v1151 = vsel %vm1075, %v1130, %v1140
      %v1152 = vsel %vm388, %v1141, %v1142
      %v1153 = vsel %vm1075, %v1132, %v1152
      %v1154 = vsel %vm1075, %v1134, %v1142
      %1163 = vst [vmem:[#allocation2 + $0x24c] sm:$0xff] %v1144
      %1164 = vst [vmem:[#allocation2 + $0x254] sm:$0xf] %v1145
      %1165 = vst [vmem:[#allocation2 + $0x264] sm:$0xff] %v1147
      %1166 = vst [vmem:[#allocation2 + $0x26c] sm:$0xf] %v1148
      %1167 = vst [vmem:[#allocation2 + $0x27c] sm:$0xff] %v1150
      %1168 = vst [vmem:[#allocation2 + $0x284] sm:$0xf] %v1151
      %1169 = vst [vmem:[#allocation2 + $0x294] sm:$0xff] %v1153
      %1170 = vst [vmem:[#allocation2 + $0x29c] sm:$0xf] %v1154
      %v1171 = vld [vmem:[%s305] sm:$0xff]
      %v1172 = vld [vmem:[%s305 + $0x8] sm:$0xff]
      %v1173 = vld [vmem:[%s305 + $0x10] sm:$0xff]
      %v1174 = vld [vmem:[%s305 + $0x18] sm:$0xff]
      %v1175 = vld [vmem:[%s305 + $0x20] sm:$0xff]
      %v1176 = vld [vmem:[%s305 + $0x28] sm:$0xff]
      %v1177 = vld [vmem:[%s305 + $0x30] sm:$0xff]
      %v1178 = vld [vmem:[%s305 + $0x38] sm:$0xff]
      %1187 = vrot.lane.b32.xlu0 %v1171, 95
      %v1188 = vpop.permute.xlu0 %1187
      %1189 = vrot.lane.b32.xlu0 %v1172, 95
      %v1190 = vpop.permute.xlu0 %1189
      %1191 = vrot.lane.b32.xlu0 %v1173, 95
      %v1192 = vpop.permute.xlu0 %1191
      %1193 = vrot.lane.b32.xlu0 %v1174, 95
      %v1194 = vpop.permute.xlu0 %1193
      %1195 = vrot.lane.b32.xlu0 %v1175, 95
      %v1196 = vpop.permute.xlu0 %1195
      %1197 = vrot.lane.b32.xlu0 %v1176, 95
      %v1198 = vpop.permute.xlu0 %1197
      %1199 = vrot.lane.b32.xlu0 %v1177, 95
      %v1200 = vpop.permute.xlu0 %1199
      %1201 = vrot.lane.b32.xlu0 %v1178, 95
      %v1202 = vpop.permute.xlu0 %1201
      %v1203 = vrot.slane %v1188, 4
      %v1204 = vrot.slane %v1190, 4
      %v1205 = vrot.slane %v1192, 4
      %v1206 = vrot.slane %v1194, 4
      %v1207 = vrot.slane %v1196, 4
      %v1208 = vrot.slane %v1198, 4
      %v1209 = vrot.slane %v1200, 4
      %v1210 = vrot.slane %v1202, 4
      %v1211 = vsel %vm388, %v1203, %v1204
      %vm1212 = vcmask 777216
      %v1213 = vsel %vm1212, %v1188, %v1211
      %v1214 = vsel %vm1212, %v1190, %v1204
      %v1215 = vsel %vm388, %v1205, %v1206
      %v1216 = vsel %vm1212, %v1192, %v1215
      %v1217 = vsel %vm1212, %v1194, %v1206
      %v1218 = vsel %vm388, %v1207, %v1208
      %v1219 = vsel %vm1212, %v1196, %v1218
      %v1220 = vsel %vm1212, %v1198, %v1208
      %v1221 = vsel %vm388, %v1209, %v1210
      %v1222 = vsel %vm1212, %v1200, %v1221
      %v1223 = vsel %vm1212, %v1202, %v1210
      %1232 = vst [vmem:[#allocation2 + $0x2a0] sm:$0xff] %v1213
      %1233 = vst [vmem:[#allocation2 + $0x2a8] sm:$0xf] %v1214
      %1234 = vst [vmem:[#allocation2 + $0x2b8] sm:$0xff] %v1216
      %1235 = vst [vmem:[#allocation2 + $0x2c0] sm:$0xf] %v1217
      %1236 = vst [vmem:[#allocation2 + $0x2d0] sm:$0xff] %v1219
      %1237 = vst [vmem:[#allocation2 + $0x2d8] sm:$0xf] %v1220
      %1238 = vst [vmem:[#allocation2 + $0x2e8] sm:$0xff] %v1222
      %1239 = vst [vmem:[#allocation2 + $0x2f0] sm:$0xf] %v1223
      %v1240 = vld [vmem:[%s331] sm:$0xff]
      %v1241 = vld [vmem:[%s331 + $0x8] sm:$0xff]
      %v1242 = vld [vmem:[%s331 + $0x10] sm:$0xff]
      %v1243 = vld [vmem:[%s331 + $0x18] sm:$0xff]
      %v1244 = vld [vmem:[%s331 + $0x20] sm:$0xff]
      %v1245 = vld [vmem:[%s331 + $0x28] sm:$0xff]
      %v1246 = vld [vmem:[%s331 + $0x30] sm:$0xff]
      %v1247 = vld [vmem:[%s331 + $0x38] sm:$0xff]
      %1256 = vrot.lane.b32.xlu0 %v1240, 95
      %v1257 = vpop.permute.xlu0 %1256
      %1258 = vrot.lane.b32.xlu0 %v1241, 95
      %v1259 = vpop.permute.xlu0 %1258
      %1260 = vrot.lane.b32.xlu0 %v1242, 95
      %v1261 = vpop.permute.xlu0 %1260
      %1262 = vrot.lane.b32.xlu0 %v1243, 95
      %v1263 = vpop.permute.xlu0 %1262
      %1264 = vrot.lane.b32.xlu0 %v1244, 95
      %v1265 = vpop.permute.xlu0 %1264
      %1266 = vrot.lane.b32.xlu0 %v1245, 95
      %v1267 = vpop.permute.xlu0 %1266
      %1268 = vrot.lane.b32.xlu0 %v1246, 95
      %v1269 = vpop.permute.xlu0 %1268
      %1270 = vrot.lane.b32.xlu0 %v1247, 95
      %v1271 = vpop.permute.xlu0 %1270
      %v1272 = vrot.slane %v1257, 4
      %v1273 = vrot.slane %v1259, 4
      %v1274 = vrot.slane %v1261, 4
      %v1275 = vrot.slane %v1263, 4
      %v1276 = vrot.slane %v1265, 4
      %v1277 = vrot.slane %v1267, 4
      %v1278 = vrot.slane %v1269, 4
      %v1279 = vrot.slane %v1271, 4
      %v1280 = vsel %vm388, %v1272, %v1273
      %v1281 = vsel %vm1212, %v1257, %v1280
      %v1282 = vsel %vm1212, %v1259, %v1273
      %v1283 = vsel %vm388, %v1274, %v1275
      %v1284 = vsel %vm1212, %v1261, %v1283
      %v1285 = vsel %vm1212, %v1263, %v1275
      %v1286 = vsel %vm388, %v1276, %v1277
      %v1287 = vsel %vm1212, %v1265, %v1286
      %v1288 = vsel %vm1212, %v1267, %v1277
      %v1289 = vsel %vm388, %v1278, %v1279
      %v1290 = vsel %vm1212, %v1269, %v1289
      %v1291 = vsel %vm1212, %v1271, %v1279
      %1300 = vst [vmem:[#allocation2 + $0x2ac] sm:$0xff] %v1281
      %1301 = vst [vmem:[#allocation2 + $0x2b4] sm:$0xf] %v1282
      %1302 = vst [vmem:[#allocation2 + $0x2c4] sm:$0xff] %v1284
      %1303 = vst [vmem:[#allocation2 + $0x2cc] sm:$0xf] %v1285
      %1304 = vst [vmem:[#allocation2 + $0x2dc] sm:$0xff] %v1287
      %1305 = vst [vmem:[#allocation2 + $0x2e4] sm:$0xf] %v1288
      %1306 = vst [vmem:[#allocation2 + $0x2f4] sm:$0xff] %v1290
      %1307 = vst [vmem:[#allocation2 + $0x2fc] sm:$0xf] %v1291
      %v1308 = vld [vmem:[%s305] sm:$0xff]
      %v1309 = vld [vmem:[%s305 + $0x8] sm:$0xff]
      %v1310 = vld [vmem:[%s305 + $0x10] sm:$0xff]
      %v1311 = vld [vmem:[%s305 + $0x18] sm:$0xff]
      %v1312 = vld [vmem:[%s305 + $0x20] sm:$0xff]
      %v1313 = vld [vmem:[%s305 + $0x28] sm:$0xff]
      %v1314 = vld [vmem:[%s305 + $0x30] sm:$0xff]
      %v1315 = vld [vmem:[%s305 + $0x38] sm:$0xff]
      %1324 = vrot.lane.b32.xlu0 %v1308, 94
      %v1325 = vpop.permute.xlu0 %1324
      %1326 = vrot.lane.b32.xlu0 %v1309, 94
      %v1327 = vpop.permute.xlu0 %1326
      %1328 = vrot.lane.b32.xlu0 %v1310, 94
      %v1329 = vpop.permute.xlu0 %1328
      %1330 = vrot.lane.b32.xlu0 %v1311, 94
      %v1331 = vpop.permute.xlu0 %1330
      %1332 = vrot.lane.b32.xlu0 %v1312, 94
      %v1333 = vpop.permute.xlu0 %1332
      %1334 = vrot.lane.b32.xlu0 %v1313, 94
      %v1335 = vpop.permute.xlu0 %1334
      %1336 = vrot.lane.b32.xlu0 %v1314, 94
      %v1337 = vpop.permute.xlu0 %1336
      %1338 = vrot.lane.b32.xlu0 %v1315, 94
      %v1339 = vpop.permute.xlu0 %1338
      %v1340 = vrot.slane %v1325, 4
      %v1341 = vrot.slane %v1327, 4
      %v1342 = vrot.slane %v1329, 4
      %v1343 = vrot.slane %v1331, 4
      %v1344 = vrot.slane %v1333, 4
      %v1345 = vrot.slane %v1335, 4
      %v1346 = vrot.slane %v1337, 4
      %v1347 = vrot.slane %v1339, 4
      %v1348 = vsel %vm388, %v1340, %v1341
      %vm1349 = vcmask 769024
      %v1350 = vsel %vm1349, %v1325, %v1348
      %v1351 = vsel %vm1349, %v1327, %v1341
      %v1352 = vsel %vm388, %v1342, %v1343
      %v1353 = vsel %vm1349, %v1329, %v1352
      %v1354 = vsel %vm1349, %v1331, %v1343
      %v1355 = vsel %vm388, %v1344, %v1345
      %v1356 = vsel %vm1349, %v1333, %v1355
      %v1357 = vsel %vm1349, %v1335, %v1345
      %v1358 = vsel %vm388, %v1346, %v1347
      %v1359 = vsel %vm1349, %v1337, %v1358
      %v1360 = vsel %vm1349, %v1339, %v1347
      %1369 = vst [vmem:[#allocation2 + $0x300] sm:$0xff] %v1350
      %1370 = vst [vmem:[#allocation2 + $0x308] sm:$0xf] %v1351
      %1371 = vst [vmem:[#allocation2 + $0x318] sm:$0xff] %v1353
      %1372 = vst [vmem:[#allocation2 + $0x320] sm:$0xf] %v1354
      %1373 = vst [vmem:[#allocation2 + $0x330] sm:$0xff] %v1356
      %1374 = vst [vmem:[#allocation2 + $0x338] sm:$0xf] %v1357
      %1375 = vst [vmem:[#allocation2 + $0x348] sm:$0xff] %v1359
      %1376 = vst [vmem:[#allocation2 + $0x350] sm:$0xf] %v1360
      %v1377 = vld [vmem:[%s331] sm:$0xff]
      %v1378 = vld [vmem:[%s331 + $0x8] sm:$0xff]
      %v1379 = vld [vmem:[%s331 + $0x10] sm:$0xff]
      %v1380 = vld [vmem:[%s331 + $0x18] sm:$0xff]
      %v1381 = vld [vmem:[%s331 + $0x20] sm:$0xff]
      %v1382 = vld [vmem:[%s331 + $0x28] sm:$0xff]
      %v1383 = vld [vmem:[%s331 + $0x30] sm:$0xff]
      %v1384 = vld [vmem:[%s331 + $0x38] sm:$0xff]
      %1393 = vrot.lane.b32.xlu0 %v1377, 94
      %v1394 = vpop.permute.xlu0 %1393
      %1395 = vrot.lane.b32.xlu0 %v1378, 94
      %v1396 = vpop.permute.xlu0 %1395
      %1397 = vrot.lane.b32.xlu0 %v1379, 94
      %v1398 = vpop.permute.xlu0 %1397
      %1399 = vrot.lane.b32.xlu0 %v1380, 94
      %v1400 = vpop.permute.xlu0 %1399
      %1401 = vrot.lane.b32.xlu0 %v1381, 94
      %v1402 = vpop.permute.xlu0 %1401
      %1403 = vrot.lane.b32.xlu0 %v1382, 94
      %v1404 = vpop.permute.xlu0 %1403
      %1405 = vrot.lane.b32.xlu0 %v1383, 94
      %v1406 = vpop.permute.xlu0 %1405
      %1407 = vrot.lane.b32.xlu0 %v1384, 94
      %v1408 = vpop.permute.xlu0 %1407
      %v1409 = vrot.slane %v1394, 4
      %v1410 = vrot.slane %v1396, 4
      %v1411 = vrot.slane %v1398, 4
      %v1412 = vrot.slane %v1400, 4
      %v1413 = vrot.slane %v1402, 4
      %v1414 = vrot.slane %v1404, 4
      %v1415 = vrot.slane %v1406, 4
      %v1416 = vrot.slane %v1408, 4
      %v1417 = vsel %vm388, %v1409, %v1410
      %v1418 = vsel %vm1349, %v1394, %v1417
      %v1419 = vsel %vm1349, %v1396, %v1410
      %v1420 = vsel %vm388, %v1411, %v1412
      %v1421 = vsel %vm1349, %v1398, %v1420
      %v1422 = vsel %vm1349, %v1400, %v1412
      %v1423 = vsel %vm388, %v1413, %v1414
      %v1424 = vsel %vm1349, %v1402, %v1423
      %v1425 = vsel %vm1349, %v1404, %v1414
      %v1426 = vsel %vm388, %v1415, %v1416
      %v1427 = vsel %vm1349, %v1406, %v1426
      %v1428 = vsel %vm1349, %v1408, %v1416
      %1437 = vst [vmem:[#allocation2 + $0x30c] sm:$0xff] %v1418
      %1438 = vst [vmem:[#allocation2 + $0x314] sm:$0xf] %v1419
      %1439 = vst [vmem:[#allocation2 + $0x324] sm:$0xff] %v1421
      %1440 = vst [vmem:[#allocation2 + $0x32c] sm:$0xf] %v1422
      %1441 = vst [vmem:[#allocation2 + $0x33c] sm:$0xff] %v1424
      %1442 = vst [vmem:[#allocation2 + $0x344] sm:$0xf] %v1425
      %1443 = vst [vmem:[#allocation2 + $0x354] sm:$0xff] %v1427
      %1444 = vst [vmem:[#allocation2 + $0x35c] sm:$0xf] %v1428
      %v1445 = vld [vmem:[%s1] sm:$0xff]
      %v1446 = vld [vmem:[%s1 + $0x8] sm:$0xf]
      %v1447 = vld [vmem:[%s1 + $0xc] sm:$0xff]
      %v1448 = vld [vmem:[%s1 + $0x14] sm:$0xf]
      %v1449 = vld [vmem:[#allocation2] sm:$0xff]
      %v1450 = vld [vmem:[#allocation2 + $0x8] sm:$0xff]
      %v1451 = vld [vmem:[#allocation2 + $0x10] sm:$0xff]
      %v1452 = vld [vmem:[#allocation2 + $0x18] sm:$0xff]
      %v1453 = vld [vmem:[#allocation2 + $0x20] sm:$0xff]
      %v1454 = vld [vmem:[#allocation2 + $0x28] sm:$0xff]
      %v1455 = vld [vmem:[#allocation2 + $0x30] sm:$0xff]
      %v1456 = vld [vmem:[#allocation2 + $0x38] sm:$0xff]
      %v1457 = vld [vmem:[#allocation2 + $0x40] sm:$0xff]
      %v1458 = vld [vmem:[#allocation2 + $0x48] sm:$0xff]
      %v1459 = vld [vmem:[#allocation2 + $0x50] sm:$0xff]
      %v1460 = vld [vmem:[#allocation2 + $0x58] sm:$0xff]
      %v1461 = vld [vmem:[#allocation2 + $0x60] sm:$0xff]
      %v1462 = vld [vmem:[#allocation2 + $0x68] sm:$0xff]
      %v1463 = vld [vmem:[#allocation2 + $0x70] sm:$0xff]
      %v1464 = vld [vmem:[#allocation2 + $0x78] sm:$0xff]
      %v1465 = vld [vmem:[#allocation2 + $0x80] sm:$0xff]
      %v1466 = vld [vmem:[#allocation2 + $0x88] sm:$0xff]
      %v1467 = vld [vmem:[#allocation2 + $0x90] sm:$0xff]
      %v1468 = vld [vmem:[#allocation2 + $0x98] sm:$0xff]
      %v1469 = vld [vmem:[#allocation2 + $0xa0] sm:$0xff]
      %v1470 = vld [vmem:[#allocation2 + $0xa8] sm:$0xff]
      %v1471 = vld [vmem:[#allocation2 + $0xb0] sm:$0xff]
      %v1472 = vld [vmem:[#allocation2 + $0xb8] sm:$0xff]
      %v1473 = vld [vmem:[#allocation2 + $0xc0] sm:$0xff]
      %v1474 = vld [vmem:[#allocation2 + $0xc8] sm:$0xff]
      %v1475 = vld [vmem:[#allocation2 + $0xd0] sm:$0xff]
      %v1476 = vld [vmem:[#allocation2 + $0xd8] sm:$0xff]
      %v1477 = vld [vmem:[#allocation2 + $0xe0] sm:$0xff]
      %v1478 = vld [vmem:[#allocation2 + $0xe8] sm:$0xff]
      %v1479 = vld [vmem:[#allocation2 + $0xf0] sm:$0xff]
      %v1480 = vld [vmem:[#allocation2 + $0xf8] sm:$0xff]
      %v1481 = vld [vmem:[#allocation2 + $0x100] sm:$0xff]
      %v1482 = vld [vmem:[#allocation2 + $0x108] sm:$0xff]
      %v1483 = vld [vmem:[#allocation2 + $0x110] sm:$0xff]
      %v1484 = vld [vmem:[#allocation2 + $0x118] sm:$0xff]
      %v1485 = vld [vmem:[#allocation2 + $0x120] sm:$0xff]
      %v1486 = vld [vmem:[#allocation2 + $0x128] sm:$0xff]
      %v1487 = vld [vmem:[#allocation2 + $0x130] sm:$0xff]
      %v1488 = vld [vmem:[#allocation2 + $0x138] sm:$0xff]
      %v1489 = vld [vmem:[#allocation2 + $0x140] sm:$0xff]
      %v1490 = vld [vmem:[#allocation2 + $0x148] sm:$0xff]
      %v1491 = vld [vmem:[#allocation2 + $0x150] sm:$0xff]
      %v1492 = vld [vmem:[#allocation2 + $0x158] sm:$0xff]
      %v1493 = vld [vmem:[#allocation2 + $0x160] sm:$0xff]
      %v1494 = vld [vmem:[#allocation2 + $0x168] sm:$0xff]
      %v1495 = vld [vmem:[#allocation2 + $0x170] sm:$0xff]
      %v1496 = vld [vmem:[#allocation2 + $0x178] sm:$0xff]
      %v1497 = vld [vmem:[#allocation2 + $0x180] sm:$0xff]
      %v1498 = vld [vmem:[#allocation2 + $0x188] sm:$0xff]
      %v1499 = vld [vmem:[#allocation2 + $0x190] sm:$0xff]
      %v1500 = vld [vmem:[#allocation2 + $0x198] sm:$0xff]
      %v1501 = vld [vmem:[#allocation2 + $0x1a0] sm:$0xff]
      %v1502 = vld [vmem:[#allocation2 + $0x1a8] sm:$0xff]
      %v1503 = vld [vmem:[#allocation2 + $0x1b0] sm:$0xff]
      %v1504 = vld [vmem:[#allocation2 + $0x1b8] sm:$0xff]
      %v1505 = vld [vmem:[#allocation2 + $0x1c0] sm:$0xff]
      %v1506 = vld [vmem:[#allocation2 + $0x1c8] sm:$0xff]
      %v1507 = vld [vmem:[#allocation2 + $0x1d0] sm:$0xff]
      %v1508 = vld [vmem:[#allocation2 + $0x1d8] sm:$0xff]
      %v1509 = vld [vmem:[#allocation2 + $0x1e0] sm:$0xff]
      %v1510 = vld [vmem:[#allocation2 + $0x1e8] sm:$0xff]
      %v1511 = vld [vmem:[#allocation2 + $0x1f0] sm:$0xff]
      %v1512 = vld [vmem:[#allocation2 + $0x1f8] sm:$0xff]
      %v1513 = vld [vmem:[#allocation2 + $0x200] sm:$0xff]
      %v1514 = vld [vmem:[#allocation2 + $0x208] sm:$0xff]
      %v1515 = vld [vmem:[#allocation2 + $0x210] sm:$0xff]
      %v1516 = vld [vmem:[#allocation2 + $0x218] sm:$0xff]
      %v1517 = vld [vmem:[#allocation2 + $0x220] sm:$0xff]
      %v1518 = vld [vmem:[#allocation2 + $0x228] sm:$0xff]
      %v1519 = vld [vmem:[#allocation2 + $0x230] sm:$0xff]
      %v1520 = vld [vmem:[#allocation2 + $0x238] sm:$0xff]
      %v1521 = vld [vmem:[#allocation2 + $0x240] sm:$0xff]
      %v1522 = vld [vmem:[#allocation2 + $0x248] sm:$0xff]
      %v1523 = vld [vmem:[#allocation2 + $0x250] sm:$0xff]
      %v1524 = vld [vmem:[#allocation2 + $0x258] sm:$0xff]
      %v1525 = vld [vmem:[#allocation2 + $0x260] sm:$0xff]
      %v1526 = vld [vmem:[#allocation2 + $0x268] sm:$0xff]
      %v1527 = vld [vmem:[#allocation2 + $0x270] sm:$0xff]
      %v1528 = vld [vmem:[#allocation2 + $0x278] sm:$0xff]
      %v1529 = vld [vmem:[#allocation2 + $0x280] sm:$0xff]
      %v1530 = vld [vmem:[#allocation2 + $0x288] sm:$0xff]
      %v1531 = vld [vmem:[#allocation2 + $0x290] sm:$0xff]
      %v1532 = vld [vmem:[#allocation2 + $0x298] sm:$0xff]
      %v1533 = vld [vmem:[#allocation2 + $0x2a0] sm:$0xff]
      %v1534 = vld [vmem:[#allocation2 + $0x2a8] sm:$0xff]
      %v1535 = vld [vmem:[#allocation2 + $0x2b0] sm:$0xff]
      %v1536 = vld [vmem:[#allocation2 + $0x2b8] sm:$0xff]
      %v1537 = vld [vmem:[#allocation2 + $0x2c0] sm:$0xff]
      %v1538 = vld [vmem:[#allocation2 + $0x2c8] sm:$0xff]
      %v1539 = vld [vmem:[#allocation2 + $0x2d0] sm:$0xff]
      %v1540 = vld [vmem:[#allocation2 + $0x2d8] sm:$0xff]
      %v1541 = vld [vmem:[#allocation2 + $0x2e0] sm:$0xff]
      %v1542 = vld [vmem:[#allocation2 + $0x2e8] sm:$0xff]
      %v1543 = vld [vmem:[#allocation2 + $0x2f0] sm:$0xff]
      %v1544 = vld [vmem:[#allocation2 + $0x2f8] sm:$0xff]
      %v1545 = vld [vmem:[#allocation2 + $0x300] sm:$0xff]
      %v1546 = vld [vmem:[#allocation2 + $0x308] sm:$0xff]
      %v1547 = vld [vmem:[#allocation2 + $0x310] sm:$0xff]
      %v1548 = vld [vmem:[#allocation2 + $0x318] sm:$0xff]
      %v1549 = vld [vmem:[#allocation2 + $0x320] sm:$0xff]
      %v1550 = vld [vmem:[#allocation2 + $0x328] sm:$0xff]
      %v1551 = vld [vmem:[#allocation2 + $0x330] sm:$0xff]
      %v1552 = vld [vmem:[#allocation2 + $0x338] sm:$0xff]
      %v1553 = vld [vmem:[#allocation2 + $0x340] sm:$0xff]
      %v1554 = vld [vmem:[#allocation2 + $0x348] sm:$0xff]
      %v1555 = vld [vmem:[#allocation2 + $0x350] sm:$0xff]
      %v1556 = vld [vmem:[#allocation2 + $0x358] sm:$0xff]
      %v1557 = vld [vmem:[%s2] sm:$0xff]
      %v1558 = vld [vmem:[%s2 + $0x8] sm:$0xff]
      %1560 = vset.pattern.permute.xlu0 0
      %1561 = vperm.xlu0 %1560, %v1557
      %v1562 = vpop.permute.xlu0 %1561
      %1565 = vset.pattern.permute.xlu0 0
      %1566 = vperm.xlu0 %1565, %v1558
      %v1567 = vpop.permute.xlu0 %1566
      %v1573 = vunpack.c.l.b16 %v1445
      %v1574 = vunpack.c.h.b16 %v1445
      %v1575 = vunpack.c.l.b16 %v1446
      %v1576 = vunpack.c.l.b16 %v1447
      %v1577 = vunpack.c.h.b16 %v1447
      %v1578 = vunpack.c.l.b16 %v1448
      %v1579 = vpack.c.b16 %v1576, %v1573
      %v1580 = vpack.c.b16 %v1577, %v1574
      %v1581 = vpack.c.b16 %v1578, %v1575
      %v1692 = vunpack.c.l.b16 %v1449
      %v1693 = vunpack.c.h.b16 %v1449
      %v1694 = vunpack.c.l.b16 %v1450
      %v1695 = vunpack.c.h.b16 %v1450
      %v1696 = vunpack.c.l.b16 %v1451
      %v1697 = vunpack.c.h.b16 %v1451
      %v1698 = vunpack.c.l.b16 %v1452
      %v1699 = vunpack.c.h.b16 %v1452
      %v1700 = vunpack.c.l.b16 %v1453
      %v1701 = vunpack.c.h.b16 %v1453
      %v1702 = vunpack.c.l.b16 %v1454
      %v1703 = vunpack.c.h.b16 %v1454
      %v1704 = vunpack.c.l.b16 %v1455
      %v1705 = vunpack.c.h.b16 %v1455
      %v1706 = vunpack.c.l.b16 %v1456
      %v1707 = vunpack.c.h.b16 %v1456
      %v1708 = vunpack.c.l.b16 %v1457
      %v1709 = vunpack.c.h.b16 %v1457
      %v1710 = vunpack.c.l.b16 %v1458
      %v1711 = vunpack.c.h.b16 %v1458
      %v1712 = vunpack.c.l.b16 %v1459
      %v1713 = vunpack.c.h.b16 %v1459
      %v1714 = vunpack.c.l.b16 %v1460
      %v1715 = vunpack.c.h.b16 %v1460
      %v1716 = vunpack.c.l.b16 %v1461
      %v1717 = vunpack.c.h.b16 %v1461
      %v1718 = vunpack.c.l.b16 %v1462
      %v1719 = vunpack.c.h.b16 %v1462
      %v1720 = vunpack.c.l.b16 %v1463
      %v1721 = vunpack.c.h.b16 %v1463
      %v1722 = vunpack.c.l.b16 %v1464
      %v1723 = vunpack.c.h.b16 %v1464
      %v1724 = vunpack.c.l.b16 %v1465
      %v1725 = vunpack.c.h.b16 %v1465
      %v1726 = vunpack.c.l.b16 %v1466
      %v1727 = vunpack.c.h.b16 %v1466
      %v1728 = vunpack.c.l.b16 %v1467
      %v1729 = vunpack.c.h.b16 %v1467
      %v1730 = vunpack.c.l.b16 %v1468
      %v1731 = vunpack.c.h.b16 %v1468
      %v1732 = vunpack.c.l.b16 %v1469
      %v1733 = vunpack.c.h.b16 %v1469
      %v1734 = vunpack.c.l.b16 %v1470
      %v1735 = vunpack.c.h.b16 %v1470
      %v1736 = vunpack.c.l.b16 %v1471
      %v1737 = vunpack.c.h.b16 %v1471
      %v1738 = vunpack.c.l.b16 %v1472
      %v1739 = vunpack.c.h.b16 %v1472
      %v1740 = vunpack.c.l.b16 %v1473
      %v1741 = vunpack.c.h.b16 %v1473
      %v1742 = vunpack.c.l.b16 %v1474
      %v1743 = vunpack.c.h.b16 %v1474
      %v1744 = vunpack.c.l.b16 %v1475
      %v1745 = vunpack.c.h.b16 %v1475
      %v1746 = vunpack.c.l.b16 %v1476
      %v1747 = vunpack.c.h.b16 %v1476
      %v1748 = vunpack.c.l.b16 %v1477
      %v1749 = vunpack.c.h.b16 %v1477
      %v1750 = vunpack.c.l.b16 %v1478
      %v1751 = vunpack.c.h.b16 %v1478
      %v1752 = vunpack.c.l.b16 %v1479
      %v1753 = vunpack.c.h.b16 %v1479
      %v1754 = vunpack.c.l.b16 %v1480
      %v1755 = vunpack.c.h.b16 %v1480
      %v1756 = vunpack.c.l.b16 %v1481
      %v1757 = vunpack.c.h.b16 %v1481
      %v1758 = vunpack.c.l.b16 %v1482
      %v1759 = vunpack.c.h.b16 %v1482
      %v1760 = vunpack.c.l.b16 %v1483
      %v1761 = vunpack.c.h.b16 %v1483
      %v1762 = vunpack.c.l.b16 %v1484
      %v1763 = vunpack.c.h.b16 %v1484
      %v1764 = vunpack.c.l.b16 %v1485
      %v1765 = vunpack.c.h.b16 %v1485
      %v1766 = vunpack.c.l.b16 %v1486
      %v1767 = vunpack.c.h.b16 %v1486
      %v1768 = vunpack.c.l.b16 %v1487
      %v1769 = vunpack.c.h.b16 %v1487
      %v1770 = vunpack.c.l.b16 %v1488
      %v1771 = vunpack.c.h.b16 %v1488
      %v1772 = vunpack.c.l.b16 %v1489
      %v1773 = vunpack.c.h.b16 %v1489
      %v1774 = vunpack.c.l.b16 %v1490
      %v1775 = vunpack.c.h.b16 %v1490
      %v1776 = vunpack.c.l.b16 %v1491
      %v1777 = vunpack.c.h.b16 %v1491
      %v1778 = vunpack.c.l.b16 %v1492
      %v1779 = vunpack.c.h.b16 %v1492
      %v1780 = vunpack.c.l.b16 %v1493
      %v1781 = vunpack.c.h.b16 %v1493
      %v1782 = vunpack.c.l.b16 %v1494
      %v1783 = vunpack.c.h.b16 %v1494
      %v1784 = vunpack.c.l.b16 %v1495
      %v1785 = vunpack.c.h.b16 %v1495
      %v1786 = vunpack.c.l.b16 %v1496
      %v1787 = vunpack.c.h.b16 %v1496
      %v1788 = vunpack.c.l.b16 %v1497
      %v1789 = vunpack.c.h.b16 %v1497
      %v1790 = vunpack.c.l.b16 %v1498
      %v1791 = vunpack.c.h.b16 %v1498
      %v1792 = vunpack.c.l.b16 %v1499
      %v1793 = vunpack.c.h.b16 %v1499
      %v1794 = vunpack.c.l.b16 %v1500
      %v1795 = vunpack.c.h.b16 %v1500
      %v1796 = vunpack.c.l.b16 %v1501
      %v1797 = vunpack.c.h.b16 %v1501
      %v1798 = vunpack.c.l.b16 %v1502
      %v1799 = vunpack.c.h.b16 %v1502
      %v1800 = vunpack.c.l.b16 %v1503
      %v1801 = vunpack.c.h.b16 %v1503
      %v1802 = vunpack.c.l.b16 %v1504
      %v1803 = vunpack.c.h.b16 %v1504
      %v1804 = vunpack.c.l.b16 %v1505
      %v1805 = vunpack.c.h.b16 %v1505
      %v1806 = vunpack.c.l.b16 %v1506
      %v1807 = vunpack.c.h.b16 %v1506
      %v1808 = vunpack.c.l.b16 %v1507
      %v1809 = vunpack.c.h.b16 %v1507
      %v1810 = vunpack.c.l.b16 %v1508
      %v1811 = vunpack.c.h.b16 %v1508
      %v1812 = vunpack.c.l.b16 %v1509
      %v1813 = vunpack.c.h.b16 %v1509
      %v1814 = vunpack.c.l.b16 %v1510
      %v1815 = vunpack.c.h.b16 %v1510
      %v1816 = vunpack.c.l.b16 %v1511
      %v1817 = vunpack.c.h.b16 %v1511
      %v1818 = vunpack.c.l.b16 %v1512
      %v1819 = vunpack.c.h.b16 %v1512
      %v1820 = vunpack.c.l.b16 %v1513
      %v1821 = vunpack.c.h.b16 %v1513
      %v1822 = vunpack.c.l.b16 %v1514
      %v1823 = vunpack.c.h.b16 %v1514
      %v1824 = vunpack.c.l.b16 %v1515
      %v1825 = vunpack.c.h.b16 %v1515
      %v1826 = vunpack.c.l.b16 %v1516
      %v1827 = vunpack.c.h.b16 %v1516
      %v1828 = vunpack.c.l.b16 %v1517
      %v1829 = vunpack.c.h.b16 %v1517
      %v1830 = vunpack.c.l.b16 %v1518
      %v1831 = vunpack.c.h.b16 %v1518
      %v1832 = vunpack.c.l.b16 %v1519
      %v1833 = vunpack.c.h.b16 %v1519
      %v1834 = vunpack.c.l.b16 %v1520
      %v1835 = vunpack.c.h.b16 %v1520
      %v1836 = vunpack.c.l.b16 %v1521
      %v1837 = vunpack.c.h.b16 %v1521
      %v1838 = vunpack.c.l.b16 %v1522
      %v1839 = vunpack.c.h.b16 %v1522
      %v1840 = vunpack.c.l.b16 %v1523
      %v1841 = vunpack.c.h.b16 %v1523
      %v1842 = vunpack.c.l.b16 %v1524
      %v1843 = vunpack.c.h.b16 %v1524
      %v1844 = vunpack.c.l.b16 %v1525
      %v1845 = vunpack.c.h.b16 %v1525
      %v1846 = vunpack.c.l.b16 %v1526
      %v1847 = vunpack.c.h.b16 %v1526
      %v1848 = vunpack.c.l.b16 %v1527
      %v1849 = vunpack.c.h.b16 %v1527
      %v1850 = vunpack.c.l.b16 %v1528
      %v1851 = vunpack.c.h.b16 %v1528
      %v1852 = vunpack.c.l.b16 %v1529
      %v1853 = vunpack.c.h.b16 %v1529
      %v1854 = vunpack.c.l.b16 %v1530
      %v1855 = vunpack.c.h.b16 %v1530
      %v1856 = vunpack.c.l.b16 %v1531
      %v1857 = vunpack.c.h.b16 %v1531
      %v1858 = vunpack.c.l.b16 %v1532
      %v1859 = vunpack.c.h.b16 %v1532
      %v1860 = vunpack.c.l.b16 %v1533
      %v1861 = vunpack.c.h.b16 %v1533
      %v1862 = vunpack.c.l.b16 %v1534
      %v1863 = vunpack.c.h.b16 %v1534
      %v1864 = vunpack.c.l.b16 %v1535
      %v1865 = vunpack.c.h.b16 %v1535
      %v1866 = vunpack.c.l.b16 %v1536
      %v1867 = vunpack.c.h.b16 %v1536
      %v1868 = vunpack.c.l.b16 %v1537
      %v1869 = vunpack.c.h.b16 %v1537
      %v1870 = vunpack.c.l.b16 %v1538
      %v1871 = vunpack.c.h.b16 %v1538
      %v1872 = vunpack.c.l.b16 %v1539
      %v1873 = vunpack.c.h.b16 %v1539
      %v1874 = vunpack.c.l.b16 %v1540
      %v1875 = vunpack.c.h.b16 %v1540
      %v1876 = vunpack.c.l.b16 %v1541
      %v1877 = vunpack.c.h.b16 %v1541
      %v1878 = vunpack.c.l.b16 %v1542
      %v1879 = vunpack.c.h.b16 %v1542
      %v1880 = vunpack.c.l.b16 %v1543
      %v1881 = vunpack.c.h.b16 %v1543
      %v1882 = vunpack.c.l.b16 %v1544
      %v1883 = vunpack.c.h.b16 %v1544
      %v1884 = vunpack.c.l.b16 %v1545
      %v1885 = vunpack.c.h.b16 %v1545
      %v1886 = vunpack.c.l.b16 %v1546
      %v1887 = vunpack.c.h.b16 %v1546
      %v1888 = vunpack.c.l.b16 %v1547
      %v1889 = vunpack.c.h.b16 %v1547
      %v1890 = vunpack.c.l.b16 %v1548
      %v1891 = vunpack.c.h.b16 %v1548
      %v1892 = vunpack.c.l.b16 %v1549
      %v1893 = vunpack.c.h.b16 %v1549
      %v1894 = vunpack.c.l.b16 %v1550
      %v1895 = vunpack.c.h.b16 %v1550
      %v1896 = vunpack.c.l.b16 %v1551
      %v1897 = vunpack.c.h.b16 %v1551
      %v1898 = vunpack.c.l.b16 %v1552
      %v1899 = vunpack.c.h.b16 %v1552
      %v1900 = vunpack.c.l.b16 %v1553
      %v1901 = vunpack.c.h.b16 %v1553
      %v1902 = vunpack.c.l.b16 %v1554
      %v1903 = vunpack.c.h.b16 %v1554
      %v1904 = vunpack.c.l.b16 %v1555
      %v1905 = vunpack.c.h.b16 %v1555
      %v1906 = vunpack.c.l.b16 %v1556
      %v1907 = vunpack.c.h.b16 %v1556
      %v1908 = vpack.c.b16 %v1698, %v1692
      %v1909 = vpack.c.b16 %v1699, %v1693
      %v1910 = vpack.c.b16 %v1700, %v1694
      %v1911 = vpack.c.b16 %v1701, %v1695
      %v1912 = vpack.c.b16 %v1702, %v1696
      %v1913 = vpack.c.b16 %v1703, %v1697
      %v1914 = vpack.c.b16 %v1710, %v1704
      %v1915 = vpack.c.b16 %v1711, %v1705
      %v1916 = vpack.c.b16 %v1712, %v1706
      %v1917 = vpack.c.b16 %v1713, %v1707
      %v1918 = vpack.c.b16 %v1714, %v1708
      %v1919 = vpack.c.b16 %v1715, %v1709
      %v1920 = vpack.c.b16 %v1722, %v1716
      %v1921 = vpack.c.b16 %v1723, %v1717
      %v1922 = vpack.c.b16 %v1724, %v1718
      %v1923 = vpack.c.b16 %v1725, %v1719
      %v1924 = vpack.c.b16 %v1726, %v1720
      %v1925 = vpack.c.b16 %v1727, %v1721
      %v1926 = vpack.c.b16 %v1734, %v1728
      %v1927 = vpack.c.b16 %v1735, %v1729
      %v1928 = vpack.c.b16 %v1736, %v1730
      %v1929 = vpack.c.b16 %v1737, %v1731
      %v1930 = vpack.c.b16 %v1738, %v1732
      %v1931 = vpack.c.b16 %v1739, %v1733
      %v1932 = vpack.c.b16 %v1746, %v1740
      %v1933 = vpack.c.b16 %v1747, %v1741
      %v1934 = vpack.c.b16 %v1748, %v1742
      %v1935 = vpack.c.b16 %v1749, %v1743
      %v1936 = vpack.c.b16 %v1750, %v1744
      %v1937 = vpack.c.b16 %v1751, %v1745
      %v1938 = vpack.c.b16 %v1758, %v1752
      %v1939 = vpack.c.b16 %v1759, %v1753
      %v1940 = vpack.c.b16 %v1760, %v1754
      %v1941 = vpack.c.b16 %v1761, %v1755
      %v1942 = vpack.c.b16 %v1762, %v1756
      %v1943 = vpack.c.b16 %v1763, %v1757
      %v1944 = vpack.c.b16 %v1770, %v1764
      %v1945 = vpack.c.b16 %v1771, %v1765
      %v1946 = vpack.c.b16 %v1772, %v1766
      %v1947 = vpack.c.b16 %v1773, %v1767
      %v1948 = vpack.c.b16 %v1774, %v1768
      %v1949 = vpack.c.b16 %v1775, %v1769
      %v1950 = vpack.c.b16 %v1782, %v1776
      %v1951 = vpack.c.b16 %v1783, %v1777
      %v1952 = vpack.c.b16 %v1784, %v1778
      %v1953 = vpack.c.b16 %v1785, %v1779
      %v1954 = vpack.c.b16 %v1786, %v1780
      %v1955 = vpack.c.b16 %v1787, %v1781
      %v1956 = vpack.c.b16 %v1794, %v1788
      %v1957 = vpack.c.b16 %v1795, %v1789
      %v1958 = vpack.c.b16 %v1796, %v1790
      %v1959 = vpack.c.b16 %v1797, %v1791
      %v1960 = vpack.c.b16 %v1798, %v1792
      %v1961 = vpack.c.b16 %v1799, %v1793
      %v1962 = vpack.c.b16 %v1806, %v1800
      %v1963 = vpack.c.b16 %v1807, %v1801
      %v1964 = vpack.c.b16 %v1808, %v1802
      %v1965 = vpack.c.b16 %v1809, %v1803
      %v1966 = vpack.c.b16 %v1810, %v1804
      %v1967 = vpack.c.b16 %v1811, %v1805
      %v1968 = vpack.c.b16 %v1818, %v1812
      %v1969 = vpack.c.b16 %v1819, %v1813
      %v1970 = vpack.c.b16 %v1820, %v1814
      %v1971 = vpack.c.b16 %v1821, %v1815
      %v1972 = vpack.c.b16 %v1822, %v1816
      %v1973 = vpack.c.b16 %v1823, %v1817
      %v1974 = vpack.c.b16 %v1830, %v1824
      %v1975 = vpack.c.b16 %v1831, %v1825
      %v1976 = vpack.c.b16 %v1832, %v1826
      %v1977 = vpack.c.b16 %v1833, %v1827
      %v1978 = vpack.c.b16 %v1834, %v1828
      %v1979 = vpack.c.b16 %v1835, %v1829
      %v1980 = vpack.c.b16 %v1842, %v1836
      %v1981 = vpack.c.b16 %v1843, %v1837
      %v1982 = vpack.c.b16 %v1844, %v1838
      %v1983 = vpack.c.b16 %v1845, %v1839
      %v1984 = vpack.c.b16 %v1846, %v1840
      %v1985 = vpack.c.b16 %v1847, %v1841
      %v1986 = vpack.c.b16 %v1854, %v1848
      %v1987 = vpack.c.b16 %v1855, %v1849
      %v1988 = vpack.c.b16 %v1856, %v1850
      %v1989 = vpack.c.b16 %v1857, %v1851
      %v1990 = vpack.c.b16 %v1858, %v1852
      %v1991 = vpack.c.b16 %v1859, %v1853
      %v1992 = vpack.c.b16 %v1866, %v1860
      %v1993 = vpack.c.b16 %v1867, %v1861
      %v1994 = vpack.c.b16 %v1868, %v1862
      %v1995 = vpack.c.b16 %v1869, %v1863
      %v1996 = vpack.c.b16 %v1870, %v1864
      %v1997 = vpack.c.b16 %v1871, %v1865
      %v1998 = vpack.c.b16 %v1878, %v1872
      %v1999 = vpack.c.b16 %v1879, %v1873
      %v2000 = vpack.c.b16 %v1880, %v1874
      %v2001 = vpack.c.b16 %v1881, %v1875
      %v2002 = vpack.c.b16 %v1882, %v1876
      %v2003 = vpack.c.b16 %v1883, %v1877
      %v2004 = vpack.c.b16 %v1890, %v1884
      %v2005 = vpack.c.b16 %v1891, %v1885
      %v2006 = vpack.c.b16 %v1892, %v1886
      %v2007 = vpack.c.b16 %v1893, %v1887
      %v2008 = vpack.c.b16 %v1894, %v1888
      %v2009 = vpack.c.b16 %v1895, %v1889
      %v2010 = vpack.c.b16 %v1902, %v1896
      %v2011 = vpack.c.b16 %v1903, %v1897
      %v2012 = vpack.c.b16 %v1904, %v1898
      %v2013 = vpack.c.b16 %v1905, %v1899
      %v2014 = vpack.c.b16 %v1906, %v1900
      %v2015 = vpack.c.b16 %v1907, %v1901
      %vm2124 = vcmask 261120
      %v2126 = vsel %vm2124, %v1581, 0
      %2128 = vmatprep.subr.bf16.mxu0 %v1951
      %2129 = vmatpush1.bf16.msra.mxu0 %v1950
      %2130 = vmatprep.subr.bf16.mxu0 %v1945
      %2131 = vmatpush1.bf16.msra.mxu0 %v1944
      %2132 = vmatprep.subr.bf16.mxu0 %v1939
      %2133 = vmatpush1.bf16.msra.mxu0 %v1938
      %2134 = vmatprep.subr.bf16.mxu0 %v1933
      %2135 = vmatpush1.bf16.msra.mxu0 %v1932
      %2136 = vmatprep.subr.bf16.mxu0 %v1927
      %2137 = vmatpush1.bf16.msra.mxu0 %v1926
      %2138 = vmatprep.subr.bf16.mxu0 %v1921
      %2139 = vmatpush1.bf16.msra.mxu0 %v1920
      %2140 = vmatprep.subr.bf16.mxu0 %v1915
      %2141 = vmatpush1.bf16.msra.mxu0 %v1914
      %2142 = vmatprep.subr.bf16.mxu0 %v1909
      %2143 = vmatpush1.bf16.msra.mxu0 %v1908
      %2144 = vmatprep.subr.bf16.mxu0 %v1999
      %2145 = vmatpush2.bf16.msra.mxu0 %v1998
      %2146 = vmatprep.subr.bf16.mxu0 %v1993
      %2147 = vmatpush2.bf16.msra.mxu0 %v1992
      %2148 = vmatprep.subr.bf16.mxu0 %v1987
      %2149 = vmatpush2.bf16.msra.mxu0 %v1986
      %2150 = vmatprep.subr.bf16.mxu0 %v1981
      %2151 = vmatpush2.bf16.msra.mxu0 %v1980
      %2152 = vmatprep.subr.bf16.mxu0 %v1975
      %2153 = vmatpush2.bf16.msra.mxu0 %v1974
      %2154 = vmatprep.subr.bf16.mxu0 %v1969
      %2155 = vmatpush2.bf16.msra.mxu0 %v1968
      %2156 = vmatprep.subr.bf16.mxu0 %v1963
      %2157 = vmatpush2.bf16.msra.mxu0 %v1962
      %2158 = vmatprep.subr.bf16.mxu0 %v1957
      %2159 = vmatpush2.bf16.msra.mxu0 %v1956
      %2160 = vmatprep.mubr.bf16.mxu0 %v1580
      %2161 = vmatmul.mubr.bf16.gmra.mxu0 %v1579
      %v2162 = vpop.f32.mrf.mxu0
      %v2163 = vadd.f32 %v1562, %v2162
      %v2164 = vpop.f32.mrf.mxu0
      %v2165 = vadd.f32 %v1562, %v2164
      %v2166 = vpop.f32.mrf.mxu0
      %v2167 = vadd.f32 %v1567, %v2166
      %v2168 = vpop.f32.mrf.mxu0
      %v2169 = vadd.f32 %v1567, %v2168
      %2170 = vdwg.mxu0
      %2171 = vmatprep.subr.bf16.mxu0 0
      %2172 = vmatpush1.bf16.msra.mxu0 0
      %2173 = vmatprep.subr.bf16.mxu0 0
      %2174 = vmatpush1.bf16.msra.mxu0 0
      %2175 = vmatprep.subr.bf16.mxu0 0
      %2176 = vmatpush1.bf16.msra.mxu0 0
      %2177 = vmatprep.subr.bf16.mxu0 0
      %2178 = vmatpush1.bf16.msra.mxu0 0
      %2179 = vmatprep.subr.bf16.mxu0 0
      %2180 = vmatpush1.bf16.msra.mxu0 0
      %2181 = vmatprep.subr.bf16.mxu0 0
      %2182 = vmatpush1.bf16.msra.mxu0 0
      %2183 = vmatprep.subr.bf16.mxu0 %v2011
      %2184 = vmatpush1.bf16.msra.mxu0 %v2010
      %2185 = vmatprep.subr.bf16.mxu0 %v2005
      %2186 = vmatpush1.bf16.msra.mxu0 %v2004
      %2187 = vmatprep.subr.bf16.mxu0 0
      %2188 = vmatpush2.bf16.msra.mxu0 0
      %2189 = vmatprep.subr.bf16.mxu0 0
      %2190 = vmatpush2.bf16.msra.mxu0 0
      %2191 = vmatprep.subr.bf16.mxu0 0
      %2192 = vmatpush2.bf16.msra.mxu0 0
      %2193 = vmatprep.subr.bf16.mxu0 0
      %2194 = vmatpush2.bf16.msra.mxu0 0
      %2195 = vmatprep.subr.bf16.mxu0 0
      %2196 = vmatpush2.bf16.msra.mxu0 0
      %2197 = vmatprep.subr.bf16.mxu0 0
      %2198 = vmatpush2.bf16.msra.mxu0 0
      %2199 = vmatprep.subr.bf16.mxu0 0
      %2200 = vmatpush2.bf16.msra.mxu0 0
      %2201 = vmatprep.subr.bf16.mxu0 0
      %2202 = vmatpush2.bf16.msra.mxu0 0
      %2203 = vmatprep.mubr.bf16.mxu0 0
      %2204 = vmatmul.mubr.bf16.gmra.mxu0 %v2126
      %v2205 = vpop.f32.mrf.mxu0
      %v2206 = vadd.f32 %v2163, %v2205
      %v2207 = vpop.f32.mrf.mxu0
      %v2208 = vadd.f32 %v2165, %v2207
      %v2209 = vpop.f32.mrf.mxu0
      %v2210 = vadd.f32 %v2167, %v2209
      %v2211 = vpop.f32.mrf.mxu0
      %v2212 = vadd.f32 %v2169, %v2211
      %2213 = vdwg.mxu0
      %2214 = vmatprep.subr.bf16.mxu0 %v1953
      %2215 = vmatpush1.bf16.msra.mxu0 %v1952
      %2216 = vmatprep.subr.bf16.mxu0 %v1947
      %2217 = vmatpush1.bf16.msra.mxu0 %v1946
      %2218 = vmatprep.subr.bf16.mxu0 %v1941
      %2219 = vmatpush1.bf16.msra.mxu0 %v1940
      %2220 = vmatprep.subr.bf16.mxu0 %v1935
      %2221 = vmatpush1.bf16.msra.mxu0 %v1934
      %2222 = vmatprep.subr.bf16.mxu0 %v1929
      %2223 = vmatpush1.bf16.msra.mxu0 %v1928
      %2224 = vmatprep.subr.bf16.mxu0 %v1923
      %2225 = vmatpush1.bf16.msra.mxu0 %v1922
      %2226 = vmatprep.subr.bf16.mxu0 %v1917
      %2227 = vmatpush1.bf16.msra.mxu0 %v1916
      %2228 = vmatprep.subr.bf16.mxu0 %v1911
      %2229 = vmatpush1.bf16.msra.mxu0 %v1910
      %2230 = vmatprep.subr.bf16.mxu0 %v2001
      %2231 = vmatpush2.bf16.msra.mxu0 %v2000
      %2232 = vmatprep.subr.bf16.mxu0 %v1995
      %2233 = vmatpush2.bf16.msra.mxu0 %v1994
      %2234 = vmatprep.subr.bf16.mxu0 %v1989
      %2235 = vmatpush2.bf16.msra.mxu0 %v1988
      %2236 = vmatprep.subr.bf16.mxu0 %v1983
      %2237 = vmatpush2.bf16.msra.mxu0 %v1982
      %2238 = vmatprep.subr.bf16.mxu0 %v1977
      %2239 = vmatpush2.bf16.msra.mxu0 %v1976
      %2240 = vmatprep.subr.bf16.mxu0 %v1971
      %2241 = vmatpush2.bf16.msra.mxu0 %v1970
      %2242 = vmatprep.subr.bf16.mxu0 %v1965
      %2243 = vmatpush2.bf16.msra.mxu0 %v1964
      %2244 = vmatprep.subr.bf16.mxu0 %v1959
      %2245 = vmatpush2.bf16.msra.mxu0 %v1958
      %2246 = vmatprep.mubr.bf16.mxu0 %v1580
      %2247 = vmatmul.mubr.bf16.gmra.mxu0 %v1579
      %v2248 = vpop.f32.mrf.mxu0
      %v2249 = vadd.f32 %v1562, %v2248
      %v2250 = vpop.f32.mrf.mxu0
      %v2251 = vadd.f32 %v1562, %v2250
      %v2252 = vpop.f32.mrf.mxu0
      %v2253 = vadd.f32 %v1567, %v2252
      %v2254 = vpop.f32.mrf.mxu0
      %v2255 = vadd.f32 %v1567, %v2254
      %2256 = vdwg.mxu0
      %2257 = vmatprep.subr.bf16.mxu0 0
      %2258 = vmatpush1.bf16.msra.mxu0 0
      %2259 = vmatprep.subr.bf16.mxu0 0
      %2260 = vmatpush1.bf16.msra.mxu0 0
      %2261 = vmatprep.subr.bf16.mxu0 0
      %2262 = vmatpush1.bf16.msra.mxu0 0
      %2263 = vmatprep.subr.bf16.mxu0 0
      %2264 = vmatpush1.bf16.msra.mxu0 0
      %2265 = vmatprep.subr.bf16.mxu0 0
      %2266 = vmatpush1.bf16.msra.mxu0 0
      %2267 = vmatprep.subr.bf16.mxu0 0
      %2268 = vmatpush1.bf16.msra.mxu0 0
      %2269 = vmatprep.subr.bf16.mxu0 %v2013
      %2270 = vmatpush1.bf16.msra.mxu0 %v2012
      %2271 = vmatprep.subr.bf16.mxu0 %v2007
      %2272 = vmatpush1.bf16.msra.mxu0 %v2006
      %2273 = vmatprep.subr.bf16.mxu0 0
      %2274 = vmatpush2.bf16.msra.mxu0 0
      %2275 = vmatprep.subr.bf16.mxu0 0
      %2276 = vmatpush2.bf16.msra.mxu0 0
      %2277 = vmatprep.subr.bf16.mxu0 0
      %2278 = vmatpush2.bf16.msra.mxu0 0
      %2279 = vmatprep.subr.bf16.mxu0 0
      %2280 = vmatpush2.bf16.msra.mxu0 0
      %2281 = vmatprep.subr.bf16.mxu0 0
      %2282 = vmatpush2.bf16.msra.mxu0 0
      %2283 = vmatprep.subr.bf16.mxu0 0
      %2284 = vmatpush2.bf16.msra.mxu0 0
      %2285 = vmatprep.subr.bf16.mxu0 0
      %2286 = vmatpush2.bf16.msra.mxu0 0
      %2287 = vmatprep.subr.bf16.mxu0 0
      %2288 = vmatpush2.bf16.msra.mxu0 0
      %2289 = vmatprep.mubr.bf16.mxu0 0
      %2290 = vmatmul.mubr.bf16.gmra.mxu0 %v2126
      %v2291 = vpop.f32.mrf.mxu0
      %v2292 = vadd.f32 %v2249, %v2291
      %v2293 = vpop.f32.mrf.mxu0
      %v2294 = vadd.f32 %v2251, %v2293
      %v2295 = vpop.f32.mrf.mxu0
      %v2296 = vadd.f32 %v2253, %v2295
      %v2297 = vpop.f32.mrf.mxu0
      %v2298 = vadd.f32 %v2255, %v2297
      %2299 = vdwg.mxu0
      %2300 = vmatprep.subr.bf16.mxu0 %v1955
      %2301 = vmatpush1.bf16.msra.mxu0 %v1954
      %2302 = vmatprep.subr.bf16.mxu0 %v1949
      %2303 = vmatpush1.bf16.msra.mxu0 %v1948
      %2304 = vmatprep.subr.bf16.mxu0 %v1943
      %2305 = vmatpush1.bf16.msra.mxu0 %v1942
      %2306 = vmatprep.subr.bf16.mxu0 %v1937
      %2307 = vmatpush1.bf16.msra.mxu0 %v1936
      %2308 = vmatprep.subr.bf16.mxu0 %v1931
      %2309 = vmatpush1.bf16.msra.mxu0 %v1930
      %2310 = vmatprep.subr.bf16.mxu0 %v1925
      %2311 = vmatpush1.bf16.msra.mxu0 %v1924
      %2312 = vmatprep.subr.bf16.mxu0 %v1919
      %2313 = vmatpush1.bf16.msra.mxu0 %v1918
      %2314 = vmatprep.subr.bf16.mxu0 %v1913
      %2315 = vmatpush1.bf16.msra.mxu0 %v1912
      %2316 = vmatprep.subr.bf16.mxu0 %v2003
      %2317 = vmatpush2.bf16.msra.mxu0 %v2002
      %2318 = vmatprep.subr.bf16.mxu0 %v1997
      %2319 = vmatpush2.bf16.msra.mxu0 %v1996
      %2320 = vmatprep.subr.bf16.mxu0 %v1991
      %2321 = vmatpush2.bf16.msra.mxu0 %v1990
      %2322 = vmatprep.subr.bf16.mxu0 %v1985
      %2323 = vmatpush2.bf16.msra.mxu0 %v1984
      %2324 = vmatprep.subr.bf16.mxu0 %v1979
      %2325 = vmatpush2.bf16.msra.mxu0 %v1978
      %2326 = vmatprep.subr.bf16.mxu0 %v1973
      %2327 = vmatpush2.bf16.msra.mxu0 %v1972
      %2328 = vmatprep.subr.bf16.mxu0 %v1967
      %2329 = vmatpush2.bf16.msra.mxu0 %v1966
      %2330 = vmatprep.subr.bf16.mxu0 %v1961
      %2331 = vmatpush2.bf16.msra.mxu0 %v1960
      %2332 = vmatprep.mubr.bf16.mxu0 %v1580
      %2333 = vmatmul.mubr.bf16.gmra.mxu0 %v1579
      %v2334 = vpop.f32.mrf.mxu0
      %v2335 = vadd.f32 %v1562, %v2334
      %v2336 = vpop.f32.mrf.mxu0
      %v2337 = vadd.f32 %v1562, %v2336
      %v2338 = vpop.f32.mrf.mxu0
      %v2339 = vadd.f32 %v1567, %v2338
      %v2340 = vpop.f32.mrf.mxu0
      %v2341 = vadd.f32 %v1567, %v2340
      %2342 = vdwg.mxu0
      %2343 = vmatprep.subr.bf16.mxu0 0
      %2344 = vmatpush1.bf16.msra.mxu0 0
      %2345 = vmatprep.subr.bf16.mxu0 0
      %2346 = vmatpush1.bf16.msra.mxu0 0
      %2347 = vmatprep.subr.bf16.mxu0 0
      %2348 = vmatpush1.bf16.msra.mxu0 0
      %2349 = vmatprep.subr.bf16.mxu0 0
      %2350 = vmatpush1.bf16.msra.mxu0 0
      %2351 = vmatprep.subr.bf16.mxu0 0
      %2352 = vmatpush1.bf16.msra.mxu0 0
      %2353 = vmatprep.subr.bf16.mxu0 0
      %2354 = vmatpush1.bf16.msra.mxu0 0
      %2355 = vmatprep.subr.bf16.mxu0 %v2015
      %2356 = vmatpush1.bf16.msra.mxu0 %v2014
      %2357 = vmatprep.subr.bf16.mxu0 %v2009
      %2358 = vmatpush1.bf16.msra.mxu0 %v2008
      %2359 = vmatprep.subr.bf16.mxu0 0
      %2360 = vmatpush2.bf16.msra.mxu0 0
      %2361 = vmatprep.subr.bf16.mxu0 0
      %2362 = vmatpush2.bf16.msra.mxu0 0
      %2363 = vmatprep.subr.bf16.mxu0 0
      %2364 = vmatpush2.bf16.msra.mxu0 0
      %2365 = vmatprep.subr.bf16.mxu0 0
      %2366 = vmatpush2.bf16.msra.mxu0 0
      %2367 = vmatprep.subr.bf16.mxu0 0
      %2368 = vmatpush2.bf16.msra.mxu0 0
      %2369 = vmatprep.subr.bf16.mxu0 0
      %2370 = vmatpush2.bf16.msra.mxu0 0
      %2371 = vmatprep.subr.bf16.mxu0 0
      %2372 = vmatpush2.bf16.msra.mxu0 0
      %2373 = vmatprep.subr.bf16.mxu0 0
      %2374 = vmatpush2.bf16.msra.mxu0 0
      %2375 = vmatprep.mubr.bf16.mxu0 0
      %2376 = vmatmul.mubr.bf16.gmra.mxu0 %v2126
      %v2377 = vpop.f32.mrf.mxu0
      %v2378 = vadd.f32 %v2335, %v2377
      %v2379 = vpop.f32.mrf.mxu0
      %v2380 = vadd.f32 %v2337, %v2379
      %v2381 = vpop.f32.mrf.mxu0
      %v2382 = vadd.f32 %v2339, %v2381
      %v2383 = vpop.f32.mrf.mxu0
      %v2384 = vadd.f32 %v2341, %v2383
      %2385 = vdwg.mxu0
      %v2386 = vpack.c.bf16 %v2210, %v2206
      %v2387 = vpack.c.bf16 %v2212, %v2208
      %v2388 = vpack.c.bf16 %v2296, %v2292
      %v2389 = vpack.c.bf16 %v2298, %v2294
      %v2390 = vpack.c.bf16 %v2382, %v2378
      %v2391 = vpack.c.bf16 %v2384, %v2380
      %v2398 = vunpack.c.l.b16 %v2386
      %v2399 = vunpack.c.l.b16 %v2387
      %v2400 = vunpack.c.l.b16 %v2388
      %v2401 = vunpack.c.l.b16 %v2389
      %v2402 = vunpack.c.l.b16 %v2390
      %v2403 = vunpack.c.l.b16 %v2391
      %v2404 = vunpack.c.h.b16 %v2386
      %v2405 = vunpack.c.h.b16 %v2387
      %v2406 = vunpack.c.h.b16 %v2388
      %v2407 = vunpack.c.h.b16 %v2389
      %v2408 = vunpack.c.h.b16 %v2390
      %v2409 = vunpack.c.h.b16 %v2391
      %v2410 = vpack.c.b16 %v2399, %v2398
      %v2411 = vpack.c.b16 %v2401, %v2400
      %v2412 = vpack.c.b16 %v2403, %v2402
      %v2413 = vpack.c.b16 %v2405, %v2404
      %v2414 = vpack.c.b16 %v2407, %v2406
      %v2415 = vpack.c.b16 %v2409, %v2408
      %2422 = vst [vmem:[#allocation3] sm:$0xff] %v2410
      %2423 = vst [vmem:[#allocation3 + $0x8] sm:$0xff] %v2411
      %2424 = vst [vmem:[#allocation3 + $0x10] sm:$0xff] %v2412
      %2425 = vst [vmem:[#allocation3 + $0x18] sm:$0xff] %v2413
      %2426 = vst [vmem:[#allocation3 + $0x20] sm:$0xff] %v2414
      %2427 = vst [vmem:[#allocation3 + $0x28] sm:$0xff] %v2415
      %v2428 = vld [vmem:[#allocation3] sm:$0xff]
      %v2429 = vld [vmem:[#allocation3 + $0x18] sm:$0xff]
      %2430 = vst [vmem:[#allocation4] sm:$0xff] %v2428
      %2431 = vst [vmem:[#allocation4 + $0x10] sm:$0xff] %v2429
      %v2432 = vld [vmem:[#allocation3 + $0xc] sm:$0xff]
      %v2433 = vld [vmem:[#allocation3 + $0x24] sm:$0xff]
      %2434 = vst [vmem:[#allocation4 + $0x8] sm:$0xff] %v2432
      %2435 = vst [vmem:[#allocation4 + $0x18] sm:$0xff] %v2433
      %v2436 = vld [vmem:[#allocation3] sm:$0xff]
      %v2437 = vld [vmem:[#allocation3 + $0x8] sm:$0xf]
      %v2438 = vld [vmem:[#allocation3 + $0x18] sm:$0xff]
      %v2439 = vld [vmem:[#allocation3 + $0x20] sm:$0xf]
      %2444 = vrot.lane.b32.xlu0 %v2436, 127
      %v2445 = vpop.permute.xlu0 %2444
      %2446 = vrot.lane.b32.xlu0 %v2437, 127
      %v2447 = vpop.permute.xlu0 %2446
      %2448 = vrot.lane.b32.xlu0 %v2438, 127
      %v2449 = vpop.permute.xlu0 %2448
      %2450 = vrot.lane.b32.xlu0 %v2439, 127
      %v2451 = vpop.permute.xlu0 %2450
      %v2452 = vrot.slane %v2445, 4
      %v2453 = vrot.slane %v2447, 4
      %v2454 = vrot.slane %v2449, 4
      %v2455 = vrot.slane %v2451, 4
      %v2456 = vsel %vm388, %v2452, %v2453
      %v2457 = vsel %vm390, %v2445, %v2456
      %v2458 = vsel %vm388, %v2454, %v2455
      %v2459 = vsel %vm390, %v2449, %v2458
      %2462 = vst [vmem:[#allocation4 + $0x20] sm:$0xff] %v2457
      %2463 = vst [vmem:[#allocation4 + $0x30] sm:$0xff] %v2459
      %v2464 = vld [vmem:[#allocation3 + $0xc] sm:$0xff]
      %v2465 = vld [vmem:[#allocation3 + $0x14] sm:$0xf]
      %v2466 = vld [vmem:[#allocation3 + $0x24] sm:$0xff]
      %v2467 = vld [vmem:[#allocation3 + $0x2c] sm:$0xf]
      %2472 = vrot.lane.b32.xlu0 %v2464, 127
      %v2473 = vpop.permute.xlu0 %2472
      %2474 = vrot.lane.b32.xlu0 %v2465, 127
      %v2475 = vpop.permute.xlu0 %2474
      %2476 = vrot.lane.b32.xlu0 %v2466, 127
      %v2477 = vpop.permute.xlu0 %2476
      %2478 = vrot.lane.b32.xlu0 %v2467, 127
      %v2479 = vpop.permute.xlu0 %2478
      %v2480 = vrot.slane %v2473, 4
      %v2481 = vrot.slane %v2475, 4
      %v2482 = vrot.slane %v2477, 4
      %v2483 = vrot.slane %v2479, 4
      %v2484 = vsel %vm388, %v2480, %v2481
      %v2485 = vsel %vm390, %v2473, %v2484
      %v2486 = vsel %vm388, %v2482, %v2483
      %v2487 = vsel %vm390, %v2477, %v2486
      %2490 = vst [vmem:[#allocation4 + $0x28] sm:$0xff] %v2485
      %2491 = vst [vmem:[#allocation4 + $0x38] sm:$0xff] %v2487
      %v2492 = vld [vmem:[#allocation3] sm:$0xff]
      %v2493 = vld [vmem:[#allocation3 + $0x8] sm:$0xf]
      %v2494 = vld [vmem:[#allocation3 + $0x18] sm:$0xff]
      %v2495 = vld [vmem:[#allocation3 + $0x20] sm:$0xf]
      %2500 = vrot.lane.b32.xlu0 %v2492, 126
      %v2501 = vpop.permute.xlu0 %2500
      %2502 = vrot.lane.b32.xlu0 %v2493, 126
      %v2503 = vpop.permute.xlu0 %2502
      %2504 = vrot.lane.b32.xlu0 %v2494, 126
      %v2505 = vpop.permute.xlu0 %2504
      %2506 = vrot.lane.b32.xlu0 %v2495, 126
      %v2507 = vpop.permute.xlu0 %2506
      %v2508 = vrot.slane %v2501, 4
      %v2509 = vrot.slane %v2503, 4
      %v2510 = vrot.slane %v2505, 4
      %v2511 = vrot.slane %v2507, 4
      %v2512 = vsel %vm388, %v2508, %v2509
      %v2513 = vsel %vm527, %v2501, %v2512
      %v2514 = vsel %vm388, %v2510, %v2511
      %v2515 = vsel %vm527, %v2505, %v2514
      %2518 = vst [vmem:[#allocation4 + $0x40] sm:$0xff] %v2513
      %2519 = vst [vmem:[#allocation4 + $0x50] sm:$0xff] %v2515
      %v2520 = vld [vmem:[#allocation3 + $0xc] sm:$0xff]
      %v2521 = vld [vmem:[#allocation3 + $0x14] sm:$0xf]
      %v2522 = vld [vmem:[#allocation3 + $0x24] sm:$0xff]
      %v2523 = vld [vmem:[#allocation3 + $0x2c] sm:$0xf]
      %2528 = vrot.lane.b32.xlu0 %v2520, 126
      %v2529 = vpop.permute.xlu0 %2528
      %2530 = vrot.lane.b32.xlu0 %v2521, 126
      %v2531 = vpop.permute.xlu0 %2530
      %2532 = vrot.lane.b32.xlu0 %v2522, 126
      %v2533 = vpop.permute.xlu0 %2532
      %2534 = vrot.lane.b32.xlu0 %v2523, 126
      %v2535 = vpop.permute.xlu0 %2534
      %v2536 = vrot.slane %v2529, 4
      %v2537 = vrot.slane %v2531, 4
      %v2538 = vrot.slane %v2533, 4
      %v2539 = vrot.slane %v2535, 4
      %v2540 = vsel %vm388, %v2536, %v2537
      %v2541 = vsel %vm527, %v2529, %v2540
      %v2542 = vsel %vm388, %v2538, %v2539
      %v2543 = vsel %vm527, %v2533, %v2542
      %2546 = vst [vmem:[#allocation4 + $0x48] sm:$0xff] %v2541
      %2547 = vst [vmem:[#allocation4 + $0x58] sm:$0xff] %v2543
      %v2548 = vld [vmem:[#allocation3] sm:$0xff]
      %v2549 = vld [vmem:[#allocation3 + $0x8] sm:$0xf]
      %v2550 = vld [vmem:[#allocation3 + $0x18] sm:$0xff]
      %v2551 = vld [vmem:[#allocation3 + $0x20] sm:$0xf]
      %2556 = vrot.lane.b32.xlu0 %v2548, 112
      %v2557 = vpop.permute.xlu0 %2556
      %2558 = vrot.lane.b32.xlu0 %v2549, 112
      %v2559 = vpop.permute.xlu0 %2558
      %2560 = vrot.lane.b32.xlu0 %v2550, 112
      %v2561 = vpop.permute.xlu0 %2560
      %2562 = vrot.lane.b32.xlu0 %v2551, 112
      %v2563 = vpop.permute.xlu0 %2562
      %v2564 = vrot.slane %v2557, 4
      %v2565 = vrot.slane %v2559, 4
      %v2566 = vrot.slane %v2561, 4
      %v2567 = vrot.slane %v2563, 4
      %v2568 = vsel %vm388, %v2564, %v2565
      %v2569 = vsel %vm664, %v2557, %v2568
      %v2570 = vsel %vm388, %v2566, %v2567
      %v2571 = vsel %vm664, %v2561, %v2570
      %2574 = vst [vmem:[#allocation4 + $0x60] sm:$0xff] %v2569
      %2575 = vst [vmem:[#allocation4 + $0x70] sm:$0xff] %v2571
      %v2576 = vld [vmem:[#allocation3 + $0xc] sm:$0xff]
      %v2577 = vld [vmem:[#allocation3 + $0x14] sm:$0xf]
      %v2578 = vld [vmem:[#allocation3 + $0x24] sm:$0xff]
      %v2579 = vld [vmem:[#allocation3 + $0x2c] sm:$0xf]
      %2584 = vrot.lane.b32.xlu0 %v2576, 112
      %v2585 = vpop.permute.xlu0 %2584
      %2586 = vrot.lane.b32.xlu0 %v2577, 112
      %v2587 = vpop.permute.xlu0 %2586
      %2588 = vrot.lane.b32.xlu0 %v2578, 112
      %v2589 = vpop.permute.xlu0 %2588
      %2590 = vrot.lane.b32.xlu0 %v2579, 112
      %v2591 = vpop.permute.xlu0 %2590
      %v2592 = vrot.slane %v2585, 4
      %v2593 = vrot.slane %v2587, 4
      %v2594 = vrot.slane %v2589, 4
      %v2595 = vrot.slane %v2591, 4
      %v2596 = vsel %vm388, %v2592, %v2593
      %v2597 = vsel %vm664, %v2585, %v2596
      %v2598 = vsel %vm388, %v2594, %v2595
      %v2599 = vsel %vm664, %v2589, %v2598
      %2602 = vst [vmem:[#allocation4 + $0x68] sm:$0xff] %v2597
      %2603 = vst [vmem:[#allocation4 + $0x78] sm:$0xff] %v2599
      %v2604 = vld [vmem:[#allocation3] sm:$0xff]
      %v2605 = vld [vmem:[#allocation3 + $0x8] sm:$0xf]
      %v2606 = vld [vmem:[#allocation3 + $0x18] sm:$0xff]
      %v2607 = vld [vmem:[#allocation3 + $0x20] sm:$0xf]
      %2612 = vrot.lane.b32.xlu0 %v2604, 111
      %v2613 = vpop.permute.xlu0 %2612
      %2614 = vrot.lane.b32.xlu0 %v2605, 111
      %v2615 = vpop.permute.xlu0 %2614
      %2616 = vrot.lane.b32.xlu0 %v2606, 111
      %v2617 = vpop.permute.xlu0 %2616
      %2618 = vrot.lane.b32.xlu0 %v2607, 111
      %v2619 = vpop.permute.xlu0 %2618
      %v2620 = vrot.slane %v2613, 4
      %v2621 = vrot.slane %v2615, 4
      %v2622 = vrot.slane %v2617, 4
      %v2623 = vrot.slane %v2619, 4
      %v2624 = vsel %vm388, %v2620, %v2621
      %v2625 = vsel %vm801, %v2613, %v2624
      %v2626 = vsel %vm388, %v2622, %v2623
      %v2627 = vsel %vm801, %v2617, %v2626
      %2630 = vst [vmem:[#allocation4 + $0x80] sm:$0xff] %v2625
      %2631 = vst [vmem:[#allocation4 + $0x90] sm:$0xff] %v2627
      %v2632 = vld [vmem:[#allocation3 + $0xc] sm:$0xff]
      %v2633 = vld [vmem:[#allocation3 + $0x14] sm:$0xf]
      %v2634 = vld [vmem:[#allocation3 + $0x24] sm:$0xff]
      %v2635 = vld [vmem:[#allocation3 + $0x2c] sm:$0xf]
      %2640 = vrot.lane.b32.xlu0 %v2632, 111
      %v2641 = vpop.permute.xlu0 %2640
      %2642 = vrot.lane.b32.xlu0 %v2633, 111
      %v2643 = vpop.permute.xlu0 %2642
      %2644 = vrot.lane.b32.xlu0 %v2634, 111
      %v2645 = vpop.permute.xlu0 %2644
      %2646 = vrot.lane.b32.xlu0 %v2635, 111
      %v2647 = vpop.permute.xlu0 %2646
      %v2648 = vrot.slane %v2641, 4
      %v2649 = vrot.slane %v2643, 4
      %v2650 = vrot.slane %v2645, 4
      %v2651 = vrot.slane %v2647, 4
      %v2652 = vsel %vm388, %v2648, %v2649
      %v2653 = vsel %vm801, %v2641, %v2652
      %v2654 = vsel %vm388, %v2650, %v2651
      %v2655 = vsel %vm801, %v2645, %v2654
      %2658 = vst [vmem:[#allocation4 + $0x88] sm:$0xff] %v2653
      %2659 = vst [vmem:[#allocation4 + $0x98] sm:$0xff] %v2655
      %v2660 = vld [vmem:[#allocation3] sm:$0xff]
      %v2661 = vld [vmem:[#allocation3 + $0x8] sm:$0xf]
      %v2662 = vld [vmem:[#allocation3 + $0x18] sm:$0xff]
      %v2663 = vld [vmem:[#allocation3 + $0x20] sm:$0xf]
      %2668 = vrot.lane.b32.xlu0 %v2660, 110
      %v2669 = vpop.permute.xlu0 %2668
      %2670 = vrot.lane.b32.xlu0 %v2661, 110
      %v2671 = vpop.permute.xlu0 %2670
      %2672 = vrot.lane.b32.xlu0 %v2662, 110
      %v2673 = vpop.permute.xlu0 %2672
      %2674 = vrot.lane.b32.xlu0 %v2663, 110
      %v2675 = vpop.permute.xlu0 %2674
      %v2676 = vrot.slane %v2669, 4
      %v2677 = vrot.slane %v2671, 4
      %v2678 = vrot.slane %v2673, 4
      %v2679 = vrot.slane %v2675, 4
      %v2680 = vsel %vm388, %v2676, %v2677
      %v2681 = vsel %vm938, %v2669, %v2680
      %v2682 = vsel %vm388, %v2678, %v2679
      %v2683 = vsel %vm938, %v2673, %v2682
      %2686 = vst [vmem:[#allocation4 + $0xa0] sm:$0xff] %v2681
      %2687 = vst [vmem:[#allocation4 + $0xb0] sm:$0xff] %v2683
      %v2688 = vld [vmem:[#allocation3 + $0xc] sm:$0xff]
      %v2689 = vld [vmem:[#allocation3 + $0x14] sm:$0xf]
      %v2690 = vld [vmem:[#allocation3 + $0x24] sm:$0xff]
      %v2691 = vld [vmem:[#allocation3 + $0x2c] sm:$0xf]
      %2696 = vrot.lane.b32.xlu0 %v2688, 110
      %v2697 = vpop.permute.xlu0 %2696
      %2698 = vrot.lane.b32.xlu0 %v2689, 110
      %v2699 = vpop.permute.xlu0 %2698
      %2700 = vrot.lane.b32.xlu0 %v2690, 110
      %v2701 = vpop.permute.xlu0 %2700
      %2702 = vrot.lane.b32.xlu0 %v2691, 110
      %v2703 = vpop.permute.xlu0 %2702
      %v2704 = vrot.slane %v2697, 4
      %v2705 = vrot.slane %v2699, 4
      %v2706 = vrot.slane %v2701, 4
      %v2707 = vrot.slane %v2703, 4
      %v2708 = vsel %vm388, %v2704, %v2705
      %v2709 = vsel %vm938, %v2697, %v2708
      %v2710 = vsel %vm388, %v2706, %v2707
      %v2711 = vsel %vm938, %v2701, %v2710
      %2714 = vst [vmem:[#allocation4 + $0xa8] sm:$0xff] %v2709
      %2715 = vst [vmem:[#allocation4 + $0xb8] sm:$0xff] %v2711
      %v2716 = vld [vmem:[#allocation3] sm:$0xff]
      %v2717 = vld [vmem:[#allocation3 + $0x8] sm:$0xf]
      %v2718 = vld [vmem:[#allocation3 + $0x18] sm:$0xff]
      %v2719 = vld [vmem:[#allocation3 + $0x20] sm:$0xf]
      %2724 = vrot.lane.b32.xlu0 %v2716, 96
      %v2725 = vpop.permute.xlu0 %2724
      %2726 = vrot.lane.b32.xlu0 %v2717, 96
      %v2727 = vpop.permute.xlu0 %2726
      %2728 = vrot.lane.b32.xlu0 %v2718, 96
      %v2729 = vpop.permute.xlu0 %2728
      %2730 = vrot.lane.b32.xlu0 %v2719, 96
      %v2731 = vpop.permute.xlu0 %2730
      %v2732 = vrot.slane %v2725, 4
      %v2733 = vrot.slane %v2727, 4
      %v2734 = vrot.slane %v2729, 4
      %v2735 = vrot.slane %v2731, 4
      %v2736 = vsel %vm388, %v2732, %v2733
      %v2737 = vsel %vm1075, %v2725, %v2736
      %v2738 = vsel %vm388, %v2734, %v2735
      %v2739 = vsel %vm1075, %v2729, %v2738
      %2742 = vst [vmem:[#allocation4 + $0xc0] sm:$0xff] %v2737
      %2743 = vst [vmem:[#allocation4 + $0xd0] sm:$0xff] %v2739
      %v2744 = vld [vmem:[#allocation3 + $0xc] sm:$0xff]
      %v2745 = vld [vmem:[#allocation3 + $0x14] sm:$0xf]
      %v2746 = vld [vmem:[#allocation3 + $0x24] sm:$0xff]
      %v2747 = vld [vmem:[#allocation3 + $0x2c] sm:$0xf]
      %2752 = vrot.lane.b32.xlu0 %v2744, 96
      %v2753 = vpop.permute.xlu0 %2752
      %2754 = vrot.lane.b32.xlu0 %v2745, 96
      %v2755 = vpop.permute.xlu0 %2754
      %2756 = vrot.lane.b32.xlu0 %v2746, 96
      %v2757 = vpop.permute.xlu0 %2756
      %2758 = vrot.lane.b32.xlu0 %v2747, 96
      %v2759 = vpop.permute.xlu0 %2758
      %v2760 = vrot.slane %v2753, 4
      %v2761 = vrot.slane %v2755, 4
      %v2762 = vrot.slane %v2757, 4
      %v2763 = vrot.slane %v2759, 4
      %v2764 = vsel %vm388, %v2760, %v2761
      %v2765 = vsel %vm1075, %v2753, %v2764
      %v2766 = vsel %vm388, %v2762, %v2763
      %v2767 = vsel %vm1075, %v2757, %v2766
      %2770 = vst [vmem:[#allocation4 + $0xc8] sm:$0xff] %v2765
      %2771 = vst [vmem:[#allocation4 + $0xd8] sm:$0xff] %v2767
      %v2772 = vld [vmem:[#allocation3] sm:$0xff]
      %v2773 = vld [vmem:[#allocation3 + $0x8] sm:$0xf]
      %v2774 = vld [vmem:[#allocation3 + $0x18] sm:$0xff]
      %v2775 = vld [vmem:[#allocation3 + $0x20] sm:$0xf]
      %2780 = vrot.lane.b32.xlu0 %v2772, 95
      %v2781 = vpop.permute.xlu0 %2780
      %2782 = vrot.lane.b32.xlu0 %v2773, 95
      %v2783 = vpop.permute.xlu0 %2782
      %2784 = vrot.lane.b32.xlu0 %v2774, 95
      %v2785 = vpop.permute.xlu0 %2784
      %2786 = vrot.lane.b32.xlu0 %v2775, 95
      %v2787 = vpop.permute.xlu0 %2786
      %v2788 = vrot.slane %v2781, 4
      %v2789 = vrot.slane %v2783, 4
      %v2790 = vrot.slane %v2785, 4
      %v2791 = vrot.slane %v2787, 4
      %v2792 = vsel %vm388, %v2788, %v2789
      %v2793 = vsel %vm1212, %v2781, %v2792
      %v2794 = vsel %vm388, %v2790, %v2791
      %v2795 = vsel %vm1212, %v2785, %v2794
      %2798 = vst [vmem:[#allocation4 + $0xe0] sm:$0xff] %v2793
      %2799 = vst [vmem:[#allocation4 + $0xf0] sm:$0xff] %v2795
      %v2800 = vld [vmem:[#allocation3 + $0xc] sm:$0xff]
      %v2801 = vld [vmem:[#allocation3 + $0x14] sm:$0xf]
      %v2802 = vld [vmem:[#allocation3 + $0x24] sm:$0xff]
      %v2803 = vld [vmem:[#allocation3 + $0x2c] sm:$0xf]
      %2808 = vrot.lane.b32.xlu0 %v2800, 95
      %v2809 = vpop.permute.xlu0 %2808
      %2810 = vrot.lane.b32.xlu0 %v2801, 95
      %v2811 = vpop.permute.xlu0 %2810
      %2812 = vrot.lane.b32.xlu0 %v2802, 95
      %v2813 = vpop.permute.xlu0 %2812
      %2814 = vrot.lane.b32.xlu0 %v2803, 95
      %v2815 = vpop.permute.xlu0 %2814
      %v2816 = vrot.slane %v2809, 4
      %v2817 = vrot.slane %v2811, 4
      %v2818 = vrot.slane %v2813, 4
      %v2819 = vrot.slane %v2815, 4
      %v2820 = vsel %vm388, %v2816, %v2817
      %v2821 = vsel %vm1212, %v2809, %v2820
      %v2822 = vsel %vm388, %v2818, %v2819
      %v2823 = vsel %vm1212, %v2813, %v2822
      %2826 = vst [vmem:[#allocation4 + $0xe8] sm:$0xff] %v2821
      %2827 = vst [vmem:[#allocation4 + $0xf8] sm:$0xff] %v2823
      %v2828 = vld [vmem:[#allocation3] sm:$0xff]
      %v2829 = vld [vmem:[#allocation3 + $0x8] sm:$0xf]
      %v2830 = vld [vmem:[#allocation3 + $0x18] sm:$0xff]
      %v2831 = vld [vmem:[#allocation3 + $0x20] sm:$0xf]
      %2836 = vrot.lane.b32.xlu0 %v2828, 94
      %v2837 = vpop.permute.xlu0 %2836
      %2838 = vrot.lane.b32.xlu0 %v2829, 94
      %v2839 = vpop.permute.xlu0 %2838
      %2840 = vrot.lane.b32.xlu0 %v2830, 94
      %v2841 = vpop.permute.xlu0 %2840
      %2842 = vrot.lane.b32.xlu0 %v2831, 94
      %v2843 = vpop.permute.xlu0 %2842
      %v2844 = vrot.slane %v2837, 4
      %v2845 = vrot.slane %v2839, 4
      %v2846 = vrot.slane %v2841, 4
      %v2847 = vrot.slane %v2843, 4
      %v2848 = vsel %vm388, %v2844, %v2845
      %v2849 = vsel %vm1349, %v2837, %v2848
      %v2850 = vsel %vm388, %v2846, %v2847
      %v2851 = vsel %vm1349, %v2841, %v2850
      %2854 = vst [vmem:[#allocation4 + $0x100] sm:$0xff] %v2849
      %2855 = vst [vmem:[#allocation4 + $0x110] sm:$0xff] %v2851
      %v2856 = vld [vmem:[#allocation3 + $0xc] sm:$0xff]
      %v2857 = vld [vmem:[#allocation3 + $0x14] sm:$0xf]
      %v2858 = vld [vmem:[#allocation3 + $0x24] sm:$0xff]
      %v2859 = vld [vmem:[#allocation3 + $0x2c] sm:$0xf]
      %2864 = vrot.lane.b32.xlu0 %v2856, 94
      %v2865 = vpop.permute.xlu0 %2864
      %2866 = vrot.lane.b32.xlu0 %v2857, 94
      %v2867 = vpop.permute.xlu0 %2866
      %2868 = vrot.lane.b32.xlu0 %v2858, 94
      %v2869 = vpop.permute.xlu0 %2868
      %2870 = vrot.lane.b32.xlu0 %v2859, 94
      %v2871 = vpop.permute.xlu0 %2870
      %v2872 = vrot.slane %v2865, 4
      %v2873 = vrot.slane %v2867, 4
      %v2874 = vrot.slane %v2869, 4
      %v2875 = vrot.slane %v2871, 4
      %v2876 = vsel %vm388, %v2872, %v2873
      %v2877 = vsel %vm1349, %v2865, %v2876
      %v2878 = vsel %vm388, %v2874, %v2875
      %v2879 = vsel %vm1349, %v2869, %v2878
      %2882 = vst [vmem:[#allocation4 + $0x108] sm:$0xff] %v2877
      %2883 = vst [vmem:[#allocation4 + $0x118] sm:$0xff] %v2879
      %v2884 = vld [vmem:[%s3] sm:$0xff]
      %v2885 = vld [vmem:[%s3 + $0x8] sm:$0xff]
      %v2886 = vld [vmem:[%s3 + $0x10] sm:$0xff]
      %v2887 = vld [vmem:[%s3 + $0x18] sm:$0xff]
      %v2888 = vld [vmem:[#allocation4] sm:$0xff]
      %v2889 = vld [vmem:[#allocation4 + $0x8] sm:$0xff]
      %v2890 = vld [vmem:[#allocation4 + $0x10] sm:$0xff]
      %v2891 = vld [vmem:[#allocation4 + $0x18] sm:$0xff]
      %v2892 = vld [vmem:[#allocation4 + $0x20] sm:$0xff]
      %v2893 = vld [vmem:[#allocation4 + $0x28] sm:$0xff]
      %v2894 = vld [vmem:[#allocation4 + $0x30] sm:$0xff]
      %v2895 = vld [vmem:[#allocation4 + $0x38] sm:$0xff]
      %v2896 = vld [vmem:[#allocation4 + $0x40] sm:$0xff]
      %v2897 = vld [vmem:[#allocation4 + $0x48] sm:$0xff]
      %v2898 = vld [vmem:[#allocation4 + $0x50] sm:$0xff]
      %v2899 = vld [vmem:[#allocation4 + $0x58] sm:$0xff]
      %v2900 = vld [vmem:[#allocation4 + $0x60] sm:$0xff]
      %v2901 = vld [vmem:[#allocation4 + $0x68] sm:$0xff]
      %v2902 = vld [vmem:[#allocation4 + $0x70] sm:$0xff]
      %v2903 = vld [vmem:[#allocation4 + $0x78] sm:$0xff]
      %v2904 = vld [vmem:[#allocation4 + $0x80] sm:$0xff]
      %v2905 = vld [vmem:[#allocation4 + $0x88] sm:$0xff]
      %v2906 = vld [vmem:[#allocation4 + $0x90] sm:$0xff]
      %v2907 = vld [vmem:[#allocation4 + $0x98] sm:$0xff]
      %v2908 = vld [vmem:[#allocation4 + $0xa0] sm:$0xff]
      %v2909 = vld [vmem:[#allocation4 + $0xa8] sm:$0xff]
      %v2910 = vld [vmem:[#allocation4 + $0xb0] sm:$0xff]
      %v2911 = vld [vmem:[#allocation4 + $0xb8] sm:$0xff]
      %v2912 = vld [vmem:[#allocation4 + $0xc0] sm:$0xff]
      %v2913 = vld [vmem:[#allocation4 + $0xc8] sm:$0xff]
      %v2914 = vld [vmem:[#allocation4 + $0xd0] sm:$0xff]
      %v2915 = vld [vmem:[#allocation4 + $0xd8] sm:$0xff]
      %v2916 = vld [vmem:[#allocation4 + $0xe0] sm:$0xff]
      %v2917 = vld [vmem:[#allocation4 + $0xe8] sm:$0xff]
      %v2918 = vld [vmem:[#allocation4 + $0xf0] sm:$0xff]
      %v2919 = vld [vmem:[#allocation4 + $0xf8] sm:$0xff]
      %v2920 = vld [vmem:[#allocation4 + $0x100] sm:$0xff]
      %v2921 = vld [vmem:[#allocation4 + $0x108] sm:$0xff]
      %v2922 = vld [vmem:[#allocation4 + $0x110] sm:$0xff]
      %v2923 = vld [vmem:[#allocation4 + $0x118] sm:$0xff]
      %v2924 = vld [vmem:[%s4] sm:$0xff]
      %v2925 = vld [vmem:[%s4 + $0x8] sm:$0xff]
      %v2926 = vld [vmem:[%s4 + $0x10] sm:$0xff]
      %v2927 = vld [vmem:[%s4 + $0x18] sm:$0xff]
      %2929 = vset.pattern.permute.xlu0 0
      %2930 = vperm.xlu0 %2929, %v2924
      %v2931 = vpop.permute.xlu0 %2930
      %2934 = vset.pattern.permute.xlu0 0
      %2935 = vperm.xlu0 %2934, %v2925
      %v2936 = vpop.permute.xlu0 %2935
      %2939 = vset.pattern.permute.xlu0 0
      %2940 = vperm.xlu0 %2939, %v2926
      %v2941 = vpop.permute.xlu0 %2940
      %2944 = vset.pattern.permute.xlu0 0
      %2945 = vperm.xlu0 %2944, %v2927
      %v2946 = vpop.permute.xlu0 %2945
      %v2952 = vunpack.c.l.b16 %v2884
      %v2953 = vunpack.c.h.b16 %v2884
      %v2954 = vunpack.c.l.b16 %v2885
      %v2955 = vunpack.c.h.b16 %v2885
      %v2956 = vunpack.c.l.b16 %v2886
      %v2957 = vunpack.c.h.b16 %v2886
      %v2958 = vunpack.c.l.b16 %v2887
      %v2959 = vunpack.c.h.b16 %v2887
      %v2960 = vpack.c.b16 %v2954, %v2952
      %v2961 = vpack.c.b16 %v2955, %v2953
      %v2962 = vpack.c.b16 %v2958, %v2956
      %v2963 = vpack.c.b16 %v2959, %v2957
      %v3002 = vunpack.c.l.b16 %v2888
      %v3003 = vunpack.c.h.b16 %v2888
      %v3004 = vunpack.c.l.b16 %v2889
      %v3005 = vunpack.c.h.b16 %v2889
      %v3006 = vunpack.c.l.b16 %v2890
      %v3007 = vunpack.c.h.b16 %v2890
      %v3008 = vunpack.c.l.b16 %v2891
      %v3009 = vunpack.c.h.b16 %v2891
      %v3010 = vunpack.c.l.b16 %v2892
      %v3011 = vunpack.c.h.b16 %v2892
      %v3012 = vunpack.c.l.b16 %v2893
      %v3013 = vunpack.c.h.b16 %v2893
      %v3014 = vunpack.c.l.b16 %v2894
      %v3015 = vunpack.c.h.b16 %v2894
      %v3016 = vunpack.c.l.b16 %v2895
      %v3017 = vunpack.c.h.b16 %v2895
      %v3018 = vunpack.c.l.b16 %v2896
      %v3019 = vunpack.c.h.b16 %v2896
      %v3020 = vunpack.c.l.b16 %v2897
      %v3021 = vunpack.c.h.b16 %v2897
      %v3022 = vunpack.c.l.b16 %v2898
      %v3023 = vunpack.c.h.b16 %v2898
      %v3024 = vunpack.c.l.b16 %v2899
      %v3025 = vunpack.c.h.b16 %v2899
      %v3026 = vunpack.c.l.b16 %v2900
      %v3027 = vunpack.c.h.b16 %v2900
      %v3028 = vunpack.c.l.b16 %v2901
      %v3029 = vunpack.c.h.b16 %v2901
      %v3030 = vunpack.c.l.b16 %v2902
      %v3031 = vunpack.c.h.b16 %v2902
      %v3032 = vunpack.c.l.b16 %v2903
      %v3033 = vunpack.c.h.b16 %v2903
      %v3034 = vunpack.c.l.b16 %v2904
      %v3035 = vunpack.c.h.b16 %v2904
      %v3036 = vunpack.c.l.b16 %v2905
      %v3037 = vunpack.c.h.b16 %v2905
      %v3038 = vunpack.c.l.b16 %v2906
      %v3039 = vunpack.c.h.b16 %v2906
      %v3040 = vunpack.c.l.b16 %v2907
      %v3041 = vunpack.c.h.b16 %v2907
      %v3042 = vunpack.c.l.b16 %v2908
      %v3043 = vunpack.c.h.b16 %v2908
      %v3044 = vunpack.c.l.b16 %v2909
      %v3045 = vunpack.c.h.b16 %v2909
      %v3046 = vunpack.c.l.b16 %v2910
      %v3047 = vunpack.c.h.b16 %v2910
      %v3048 = vunpack.c.l.b16 %v2911
      %v3049 = vunpack.c.h.b16 %v2911
      %v3050 = vunpack.c.l.b16 %v2912
      %v3051 = vunpack.c.h.b16 %v2912
      %v3052 = vunpack.c.l.b16 %v2913
      %v3053 = vunpack.c.h.b16 %v2913
      %v3054 = vunpack.c.l.b16 %v2914
      %v3055 = vunpack.c.h.b16 %v2914
      %v3056 = vunpack.c.l.b16 %v2915
      %v3057 = vunpack.c.h.b16 %v2915
      %v3058 = vunpack.c.l.b16 %v2916
      %v3059 = vunpack.c.h.b16 %v2916
      %v3060 = vunpack.c.l.b16 %v2917
      %v3061 = vunpack.c.h.b16 %v2917
      %v3062 = vunpack.c.l.b16 %v2918
      %v3063 = vunpack.c.h.b16 %v2918
      %v3064 = vunpack.c.l.b16 %v2919
      %v3065 = vunpack.c.h.b16 %v2919
      %v3066 = vunpack.c.l.b16 %v2920
      %v3067 = vunpack.c.h.b16 %v2920
      %v3068 = vunpack.c.l.b16 %v2921
      %v3069 = vunpack.c.h.b16 %v2921
      %v3070 = vunpack.c.l.b16 %v2922
      %v3071 = vunpack.c.h.b16 %v2922
      %v3072 = vunpack.c.l.b16 %v2923
      %v3073 = vunpack.c.h.b16 %v2923
      %v3074 = vpack.c.b16 %v3006, %v3002
      %v3075 = vpack.c.b16 %v3007, %v3003
      %v3076 = vpack.c.b16 %v3008, %v3004
      %v3077 = vpack.c.b16 %v3009, %v3005
      %v3078 = vpack.c.b16 %v3014, %v3010
      %v3079 = vpack.c.b16 %v3015, %v3011
      %v3080 = vpack.c.b16 %v3016, %v3012
      %v3081 = vpack.c.b16 %v3017, %v3013
      %v3082 = vpack.c.b16 %v3022, %v3018
      %v3083 = vpack.c.b16 %v3023, %v3019
      %v3084 = vpack.c.b16 %v3024, %v3020
      %v3085 = vpack.c.b16 %v3025, %v3021
      %v3086 = vpack.c.b16 %v3030, %v3026
      %v3087 = vpack.c.b16 %v3031, %v3027
      %v3088 = vpack.c.b16 %v3032, %v3028
      %v3089 = vpack.c.b16 %v3033, %v3029
      %v3090 = vpack.c.b16 %v3038, %v3034
      %v3091 = vpack.c.b16 %v3039, %v3035
      %v3092 = vpack.c.b16 %v3040, %v3036
      %v3093 = vpack.c.b16 %v3041, %v3037
      %v3094 = vpack.c.b16 %v3046, %v3042
      %v3095 = vpack.c.b16 %v3047, %v3043
      %v3096 = vpack.c.b16 %v3048, %v3044
      %v3097 = vpack.c.b16 %v3049, %v3045
      %v3098 = vpack.c.b16 %v3054, %v3050
      %v3099 = vpack.c.b16 %v3055, %v3051
      %v3100 = vpack.c.b16 %v3056, %v3052
      %v3101 = vpack.c.b16 %v3057, %v3053
      %v3102 = vpack.c.b16 %v3062, %v3058
      %v3103 = vpack.c.b16 %v3063, %v3059
      %v3104 = vpack.c.b16 %v3064, %v3060
      %v3105 = vpack.c.b16 %v3065, %v3061
      %v3106 = vpack.c.b16 %v3070, %v3066
      %v3107 = vpack.c.b16 %v3071, %v3067
      %v3108 = vpack.c.b16 %v3072, %v3068
      %v3109 = vpack.c.b16 %v3073, %v3069
      %vm3146 = vcmask 130048
      %v3148 = vsel %vm3146, %v2961, 0
      %v3151 = vsel %vm3146, %v2963, 0
      %3153 = vmatprep.subr.bf16.mxu0 %v3103
      %3154 = vmatpush1.bf16.msra.mxu0 %v3102
      %3155 = vmatprep.subr.bf16.mxu0 %v3099
      %3156 = vmatpush1.bf16.msra.mxu0 %v3098
      %3157 = vmatprep.subr.bf16.mxu0 %v3095
      %3158 = vmatpush1.bf16.msra.mxu0 %v3094
      %3159 = vmatprep.subr.bf16.mxu0 %v3091
      %3160 = vmatpush1.bf16.msra.mxu0 %v3090
      %3161 = vmatprep.subr.bf16.mxu0 %v3087
      %3162 = vmatpush1.bf16.msra.mxu0 %v3086
      %3163 = vmatprep.subr.bf16.mxu0 %v3083
      %3164 = vmatpush1.bf16.msra.mxu0 %v3082
      %3165 = vmatprep.subr.bf16.mxu0 %v3079
      %3166 = vmatpush1.bf16.msra.mxu0 %v3078
      %3167 = vmatprep.subr.bf16.mxu0 %v3075
      %3168 = vmatpush1.bf16.msra.mxu0 %v3074
      %3169 = vmatprep.subr.bf16.mxu0 0
      %3170 = vmatpush2.bf16.msra.mxu0 0
      %3171 = vmatprep.subr.bf16.mxu0 0
      %3172 = vmatpush2.bf16.msra.mxu0 0
      %3173 = vmatprep.subr.bf16.mxu0 0
      %3174 = vmatpush2.bf16.msra.mxu0 0
      %3175 = vmatprep.subr.bf16.mxu0 0
      %3176 = vmatpush2.bf16.msra.mxu0 0
      %3177 = vmatprep.subr.bf16.mxu0 0
      %3178 = vmatpush2.bf16.msra.mxu0 0
      %3179 = vmatprep.subr.bf16.mxu0 0
      %3180 = vmatpush2.bf16.msra.mxu0 0
      %3181 = vmatprep.subr.bf16.mxu0 0
      %3182 = vmatpush2.bf16.msra.mxu0 0
      %3183 = vmatprep.subr.bf16.mxu0 %v3107
      %3184 = vmatpush2.bf16.msra.mxu0 %v3106
      %3185 = vmatprep.mubr.bf16.mxu0 %v3148
      %3186 = vmatmul.mubr.bf16.gmra.mxu0 %v2960
      %v3187 = vpop.f32.mrf.mxu0
      %v3188 = vadd.f32 %v2931, %v3187
      %v3189 = vpop.f32.mrf.mxu0
      %v3190 = vadd.f32 %v2931, %v3189
      %v3191 = vpop.f32.mrf.mxu0
      %v3192 = vadd.f32 %v2936, %v3191
      %v3193 = vpop.f32.mrf.mxu0
      %v3194 = vadd.f32 %v2936, %v3193
      %3195 = vmatprep.mubr.bf16.mxu0 %v3151
      %3196 = vmatmul.mubr.bf16.gmra.mxu0 %v2962
      %v3197 = vpop.f32.mrf.mxu0
      %v3198 = vadd.f32 %v2941, %v3197
      %v3199 = vpop.f32.mrf.mxu0
      %v3200 = vadd.f32 %v2941, %v3199
      %v3201 = vpop.f32.mrf.mxu0
      %v3202 = vadd.f32 %v2946, %v3201
      %v3203 = vpop.f32.mrf.mxu0
      %v3204 = vadd.f32 %v2946, %v3203
      %3205 = vdwg.mxu0
      %3206 = vmatprep.subr.bf16.mxu0 %v3105
      %3207 = vmatpush1.bf16.msra.mxu0 %v3104
      %3208 = vmatprep.subr.bf16.mxu0 %v3101
      %3209 = vmatpush1.bf16.msra.mxu0 %v3100
      %3210 = vmatprep.subr.bf16.mxu0 %v3097
      %3211 = vmatpush1.bf16.msra.mxu0 %v3096
      %3212 = vmatprep.subr.bf16.mxu0 %v3093
      %3213 = vmatpush1.bf16.msra.mxu0 %v3092
      %3214 = vmatprep.subr.bf16.mxu0 %v3089
      %3215 = vmatpush1.bf16.msra.mxu0 %v3088
      %3216 = vmatprep.subr.bf16.mxu0 %v3085
      %3217 = vmatpush1.bf16.msra.mxu0 %v3084
      %3218 = vmatprep.subr.bf16.mxu0 %v3081
      %3219 = vmatpush1.bf16.msra.mxu0 %v3080
      %3220 = vmatprep.subr.bf16.mxu0 %v3077
      %3221 = vmatpush1.bf16.msra.mxu0 %v3076
      %3222 = vmatprep.subr.bf16.mxu0 0
      %3223 = vmatpush2.bf16.msra.mxu0 0
      %3224 = vmatprep.subr.bf16.mxu0 0
      %3225 = vmatpush2.bf16.msra.mxu0 0
      %3226 = vmatprep.subr.bf16.mxu0 0
      %3227 = vmatpush2.bf16.msra.mxu0 0
      %3228 = vmatprep.subr.bf16.mxu0 0
      %3229 = vmatpush2.bf16.msra.mxu0 0
      %3230 = vmatprep.subr.bf16.mxu0 0
      %3231 = vmatpush2.bf16.msra.mxu0 0
      %3232 = vmatprep.subr.bf16.mxu0 0
      %3233 = vmatpush2.bf16.msra.mxu0 0
      %3234 = vmatprep.subr.bf16.mxu0 0
      %3235 = vmatpush2.bf16.msra.mxu0 0
      %3236 = vmatprep.subr.bf16.mxu0 %v3109
      %3237 = vmatpush2.bf16.msra.mxu0 %v3108
      %3238 = vmatprep.mubr.bf16.mxu0 %v3148
      %3239 = vmatmul.mubr.bf16.gmra.mxu0 %v2960
      %v3240 = vpop.f32.mrf.mxu0
      %v3241 = vadd.f32 %v2931, %v3240
      %v3242 = vpop.f32.mrf.mxu0
      %v3243 = vadd.f32 %v2931, %v3242
      %v3244 = vpop.f32.mrf.mxu0
      %v3245 = vadd.f32 %v2936, %v3244
      %v3246 = vpop.f32.mrf.mxu0
      %v3247 = vadd.f32 %v2936, %v3246
      %3248 = vmatprep.mubr.bf16.mxu0 %v3151
      %3249 = vmatmul.mubr.bf16.gmra.mxu0 %v2962
      %v3250 = vpop.f32.mrf.mxu0
      %v3251 = vadd.f32 %v2941, %v3250
      %v3252 = vpop.f32.mrf.mxu0
      %v3253 = vadd.f32 %v2941, %v3252
      %v3254 = vpop.f32.mrf.mxu0
      %v3255 = vadd.f32 %v2946, %v3254
      %v3256 = vpop.f32.mrf.mxu0
      %v3257 = vadd.f32 %v2946, %v3256
      %3258 = vdwg.mxu0
      %v3259 = vld [vmem:[%s7] sm:$0x3]
      %v3261 = vlaneseq
      %v3262 = vshrl.u32 %v3261, 7
      %v3263 = vsub.s32 0, %v3262
      %v3264 = vrot.slane %v3259, %v3263
      %v3265 = vlaneseq
      %v3266 = vshrl.u32 %v3265, 7
      %v3267 = vsub.s32 1, %v3266
      %v3268 = vrot.slane %v3259, %v3267
      %v3271 = vmul.f32 %v3188, %v3264
      %v3272 = vmul.f32 %v3190, %v3268
      %v3273 = vmul.f32 %v3192, %v3264
      %v3274 = vmul.f32 %v3194, %v3268
      %v3275 = vmul.f32 %v3198, %v3264
      %v3276 = vmul.f32 %v3200, %v3268
      %v3277 = vmul.f32 %v3202, %v3264
      %v3278 = vmul.f32 %v3204, %v3268
      %v3279 = vadd.f32 %v3271, %v3272
      %3280 = vadd.xlane.f32.xlu0 %v3279
      %v3281 = vpop.xlane.xlu0 %3280
      %v3282 = vadd.f32 %v3273, %v3274
      %3283 = vadd.xlane.f32.xlu0 %v3282
      %v3284 = vpop.xlane.xlu0 %3283
      %v3285 = vadd.f32 %v3275, %v3276
      %3286 = vadd.xlane.f32.xlu0 %v3285
      %v3287 = vpop.xlane.xlu0 %3286
      %v3288 = vadd.f32 %v3277, %v3278
      %3289 = vadd.xlane.f32.xlu0 %v3288
      %v3290 = vpop.xlane.xlu0 %3289
      %v3291 = vmul.f32 %v3281, 0.0069444445
      %v3292 = vmul.f32 %v3284, 0.0069444445
      %v3293 = vmul.f32 %v3287, 0.0069444445
      %v3294 = vmul.f32 %v3290, 0.0069444445
      %v3295 = vld [vmem:[%s5] sm:$0xff]
      %v3296 = vld [vmem:[%s5 + $0x8] sm:$0xff]
      %v3297 = vld [vmem:[%s5 + $0x10] sm:$0xff]
      %v3298 = vld [vmem:[%s5 + $0x18] sm:$0xff]
      %v3299 = vmul.f32 %v3295, %v3291
      %v3300 = vmul.f32 %v3296, %v3292
      %v3301 = vmul.f32 %v3297, %v3293
      %v3302 = vmul.f32 %v3298, %v3294
      %vm3303 = vcmask 31744
      %v3304 = vsel %vm3303, %v3299, 0.0
      %v3305 = vsel %vm3303, %v3300, 0.0
      %v3306 = vadd.f32 %v3304, %v3305
      %v3307 = vsel %vm3303, %v3301, 0.0
      %v3308 = vadd.f32 %v3306, %v3307
      %v3309 = vsel %vm3303, %v3302, 0.0
      %v3310 = vadd.f32 %v3308, %v3309
      %v3311 = vrot.slane %v3310, 4
      %v3312 = vadd.f32 %v3310, %v3311
      %v3313 = vrot.slane %v3312, 2
      %v3314 = vadd.f32 %v3312, %v3313
      %v3315 = vrot.slane %v3314, 1
      %v3316 = vadd.f32 %v3314, %v3315
      %v3317 = vmax.f32 %v3316, 0.0
      %v3318 = vld [vmem:[%s6] sm:$0xff]
      %v3319 = vld [vmem:[%s6 + $0x8] sm:$0xff]
      %v3320 = vld [vmem:[%s6 + $0x10] sm:$0xff]
      %v3321 = vld [vmem:[%s6 + $0x18] sm:$0xff]
      %v3322 = vmul.f32 %v3318, %v3317
      %v3323 = vmul.f32 %v3319, %v3317
      %v3324 = vmul.f32 %v3320, %v3317
      %v3325 = vmul.f32 %v3321, %v3317
      %v3326 = vsel %vm3303, %v3322, 0.0
      %3327 = vadd.xlane.f32.xlu0 %v3326
      %v3328 = vpop.xlane.xlu0 %3327
      %v3329 = vsel %vm3303, %v3323, 0.0
      %3330 = vadd.xlane.f32.xlu0 %v3329
      %v3331 = vpop.xlane.xlu0 %3330
      %v3332 = vsel %vm3303, %v3324, 0.0
      %3333 = vadd.xlane.f32.xlu0 %v3332
      %v3334 = vpop.xlane.xlu0 %3333
      %v3335 = vsel %vm3303, %v3325, 0.0
      %3336 = vadd.xlane.f32.xlu0 %v3335
      %v3337 = vpop.xlane.xlu0 %3336
      %v3338 = vxor.u32 %v3328, 2147483648
      %v3339 = vxor.u32 %v3331, 2147483648
      %v3340 = vxor.u32 %v3334, 2147483648
      %v3341 = vxor.u32 %v3337, 2147483648
      %v3342 = vmul.f32 %v3338, 1.442695
      %v3343 = vpow.pop %v3342
      %v3344 = vmul.f32 %v3339, 1.442695
      %v3345 = vpow.pop %v3344
      %v3346 = vmul.f32 %v3340, 1.442695
      %v3347 = vpow.pop %v3346
      %v3348 = vmul.f32 %v3341, 1.442695
      %v3349 = vpow.pop %v3348
      %v3350 = vadd.f32 %v3343, 1.0
      %v3351 = vadd.f32 %v3345, 1.0
      %v3352 = vadd.f32 %v3347, 1.0
      %v3353 = vadd.f32 %v3349, 1.0
      %v3354 = vrcp.pop %v3350
      %v3355 = vmul.f32 1.0, %v3354
      %v3356 = vrcp.pop %v3351
      %v3357 = vmul.f32 1.0, %v3356
      %v3358 = vrcp.pop %v3352
      %v3359 = vmul.f32 1.0, %v3358
      %v3360 = vrcp.pop %v3353
      %v3361 = vmul.f32 1.0, %v3360
      %v3362 = vmul.f32 %v3188, %v3355
      %v3363 = vmul.f32 %v3190, %v3355
      %v3364 = vmul.f32 %v3192, %v3357
      %v3365 = vmul.f32 %v3194, %v3357
      %v3366 = vmul.f32 %v3198, %v3359
      %v3367 = vmul.f32 %v3200, %v3359
      %v3368 = vmul.f32 %v3202, %v3361
      %v3369 = vmul.f32 %v3204, %v3361
      %3370 = vst [vmem:[%s312] sm:$0xff] %v3362
      %3371 = vst [vmem:[%s312 + $0x8] sm:$0xff] %v3363
      %3372 = vst [vmem:[%s312 + $0x10] sm:$0xff] %v3364
      %3373 = vst [vmem:[%s312 + $0x18] sm:$0xff] %v3365
      %3374 = vst [vmem:[%s312 + $0x20] sm:$0xff] %v3366
      %3375 = vst [vmem:[%s312 + $0x28] sm:$0xff] %v3367
      %3376 = vst [vmem:[%s312 + $0x30] sm:$0xff] %v3368
      %3377 = vst [vmem:[%s312 + $0x38] sm:$0xff] %v3369
      %v3378 = vmul.f32 %v3241, %v3264
      %v3379 = vmul.f32 %v3243, %v3268
      %v3380 = vmul.f32 %v3245, %v3264
      %v3381 = vmul.f32 %v3247, %v3268
      %v3382 = vmul.f32 %v3251, %v3264
      %v3383 = vmul.f32 %v3253, %v3268
      %v3384 = vmul.f32 %v3255, %v3264
      %v3385 = vmul.f32 %v3257, %v3268
      %v3386 = vadd.f32 %v3378, %v3379
      %3387 = vadd.xlane.f32.xlu0 %v3386
      %v3388 = vpop.xlane.xlu0 %3387
      %v3389 = vadd.f32 %v3380, %v3381
      %3390 = vadd.xlane.f32.xlu0 %v3389
      %v3391 = vpop.xlane.xlu0 %3390
      %v3392 = vadd.f32 %v3382, %v3383
      %3393 = vadd.xlane.f32.xlu0 %v3392
      %v3394 = vpop.xlane.xlu0 %3393
      %v3395 = vadd.f32 %v3384, %v3385
      %3396 = vadd.xlane.f32.xlu0 %v3395
      %v3397 = vpop.xlane.xlu0 %3396
      %v3398 = vmul.f32 %v3388, 0.0069444445
      %v3399 = vmul.f32 %v3391, 0.0069444445
      %v3400 = vmul.f32 %v3394, 0.0069444445
      %v3401 = vmul.f32 %v3397, 0.0069444445
      %v3402 = vld [vmem:[%s5] sm:$0xff]
      %v3403 = vld [vmem:[%s5 + $0x8] sm:$0xff]
      %v3404 = vld [vmem:[%s5 + $0x10] sm:$0xff]
      %v3405 = vld [vmem:[%s5 + $0x18] sm:$0xff]
      %v3406 = vmul.f32 %v3402, %v3398
      %v3407 = vmul.f32 %v3403, %v3399
      %v3408 = vmul.f32 %v3404, %v3400
      %v3409 = vmul.f32 %v3405, %v3401
      %v3410 = vsel %vm3303, %v3406, 0.0
      %v3411 = vsel %vm3303, %v3407, 0.0
      %v3412 = vadd.f32 %v3410, %v3411
      %v3413 = vsel %vm3303, %v3408, 0.0
      %v3414 = vadd.f32 %v3412, %v3413
      %v3415 = vsel %vm3303, %v3409, 0.0
      %v3416 = vadd.f32 %v3414, %v3415
      %v3417 = vrot.slane %v3416, 4
      %v3418 = vadd.f32 %v3416, %v3417
      %v3419 = vrot.slane %v3418, 2
      %v3420 = vadd.f32 %v3418, %v3419
      %v3421 = vrot.slane %v3420, 1
      %v3422 = vadd.f32 %v3420, %v3421
      %v3423 = vmax.f32 %v3422, 0.0
      %v3424 = vld [vmem:[%s6] sm:$0xff]
      %v3425 = vld [vmem:[%s6 + $0x8] sm:$0xff]
      %v3426 = vld [vmem:[%s6 + $0x10] sm:$0xff]
      %v3427 = vld [vmem:[%s6 + $0x18] sm:$0xff]
      %v3428 = vmul.f32 %v3424, %v3423
      %v3429 = vmul.f32 %v3425, %v3423
      %v3430 = vmul.f32 %v3426, %v3423
      %v3431 = vmul.f32 %v3427, %v3423
      %v3432 = vsel %vm3303, %v3428, 0.0
      %3433 = vadd.xlane.f32.xlu0 %v3432
      %v3434 = vpop.xlane.xlu0 %3433
      %v3435 = vsel %vm3303, %v3429, 0.0
      %3436 = vadd.xlane.f32.xlu0 %v3435
      %v3437 = vpop.xlane.xlu0 %3436
      %v3438 = vsel %vm3303, %v3430, 0.0
      %3439 = vadd.xlane.f32.xlu0 %v3438
      %v3440 = vpop.xlane.xlu0 %3439
      %v3441 = vsel %vm3303, %v3431, 0.0
      %3442 = vadd.xlane.f32.xlu0 %v3441
      %v3443 = vpop.xlane.xlu0 %3442
      %v3444 = vxor.u32 %v3434, 2147483648
      %v3445 = vxor.u32 %v3437, 2147483648
      %v3446 = vxor.u32 %v3440, 2147483648
      %v3447 = vxor.u32 %v3443, 2147483648
      %v3448 = vmul.f32 %v3444, 1.442695
      %v3449 = vpow.pop %v3448
      %v3450 = vmul.f32 %v3445, 1.442695
      %v3451 = vpow.pop %v3450
      %v3452 = vmul.f32 %v3446, 1.442695
      %v3453 = vpow.pop %v3452
      %v3454 = vmul.f32 %v3447, 1.442695
      %v3455 = vpow.pop %v3454
      %v3456 = vadd.f32 %v3449, 1.0
      %v3457 = vadd.f32 %v3451, 1.0
      %v3458 = vadd.f32 %v3453, 1.0
      %v3459 = vadd.f32 %v3455, 1.0
      %v3460 = vrcp.pop %v3456
      %v3461 = vmul.f32 1.0, %v3460
      %v3462 = vrcp.pop %v3457
      %v3463 = vmul.f32 1.0, %v3462
      %v3464 = vrcp.pop %v3458
      %v3465 = vmul.f32 1.0, %v3464
      %v3466 = vrcp.pop %v3459
      %v3467 = vmul.f32 1.0, %v3466
      %v3468 = vmul.f32 %v3241, %v3461
      %v3469 = vmul.f32 %v3243, %v3461
      %v3470 = vmul.f32 %v3245, %v3463
      %v3471 = vmul.f32 %v3247, %v3463
      %v3472 = vmul.f32 %v3251, %v3465
      %v3473 = vmul.f32 %v3253, %v3465
      %v3474 = vmul.f32 %v3255, %v3467
      %v3475 = vmul.f32 %v3257, %v3467
      %s3476 = scalar_lea.vmem %s312, 64
      %3477 = vst [vmem:[%s3476] sm:$0xff] %v3468
      %3478 = vst [vmem:[%s3476 + $0x8] sm:$0xff] %v3469
      %3479 = vst [vmem:[%s3476 + $0x10] sm:$0xff] %v3470
      %3480 = vst [vmem:[%s3476 + $0x18] sm:$0xff] %v3471
      %3481 = vst [vmem:[%s3476 + $0x20] sm:$0xff] %v3472
      %3482 = vst [vmem:[%s3476 + $0x28] sm:$0xff] %v3473
      %3483 = vst [vmem:[%s3476 + $0x30] sm:$0xff] %v3474
      %3484 = vst [vmem:[%s3476 + $0x38] sm:$0xff] %v3475
      %s3485 = smul.u32 2, %s19
      %p3486 = scmp.lt.s32.totalorder %s3485, 3
      %s3487 = scalar_select %p3486, %s3485, 3
      %s3488 = smul.addr %s3487, 8
      %s3489 = smul.addr %s3488, 8
      %s3490 = scalar_lea.vmem %s8, %s3489
      // Predicated region
      $region53: #{bottleneck_forward.1} parent=51 // pred_check
        %p3491 = pneg %p210
      $region54: #{bottleneck_forward.1} parent=51 // pred_check_branch
        %3493 = sbr.rel (%p3491) target = $region56
      $region55: #{bottleneck_forward.1} parent=51 // pred_region
        %s3494 = smul.u32 2, %s19
      $region56: #{bottleneck_forward.1} parent=51 // pred_fallthru
        _
    $region52: #{bottleneck_forward.1} parent=5 // pred_fallthru
      _
    %p3495 = scmp.le.s32.totalorder 2, %s14
    // Predicated region
    $region57: #{bottleneck_forward.1} parent=5 // pred_check
      %p3496 = pneg %p3495
    $region58: #{bottleneck_forward.1} parent=5 // pred_check_branch
      %3498 = sbr.rel (%p3496) target = $region60
    $region59: #{bottleneck_forward.1} parent=5 // pred_region
      %s3499 = ssub.s32 %s14, 2
      // Predicated region
      $region61: #{bottleneck_forward.1} parent=59 // pred_check
        %p3500 = pneg %p216
      $region62: #{bottleneck_forward.1} parent=59 // pred_check_branch
        %3502 = sbr.rel (%p3500) target = $region64
      $region63: #{bottleneck_forward.1} parent=59 // pred_region
        %s3503 = smul.u32 2, %s20
        %p3504 = scmp.lt.s32.totalorder %s3503, 3
        %s3505 = scalar_select %p3504, %s3503, 3
        %s3506 = smul.addr %s3505, 8
        %s3507 = smul.addr %s3506, 8
        %s3508 = scalar_lea.vmem %s8, %s3507
      $region64: #{bottleneck_forward.1} parent=59 // pred_fallthru
        _
    $region60: #{bottleneck_forward.1} parent=5 // pred_fallthru
      _
  $region6: #{bottleneck_forward.1} parent=0 // loop_footer
    %s18 = sadd.s32 1, %s14
  $region7: #{bottleneck_forward.1} parent=0 // loop_footer_branch
    %13 = sbr.rel target = $region3
  $region8: #{bottleneck_forward.1} parent=0 // loop_exit
    _

</llo_original>
